<compile_context>
chip_gen: v7x
topology: tpu7x:2x2x1
jax: 0.10.0
libtpu: 0.0.40
codegen_flags: <defaults>
</compile_context>

<pallas_src>
import numpy as np
import jax
import jax.numpy as jnp
from jax import lax
from jax.experimental import pallas as pl
from jax.experimental.pallas import tpu as pltpu

EMBED_DIM = 32
NUM_HEADS = 4
HEAD_DIM = EMBED_DIM // NUM_HEADS
MOVE_LIMIT = 25.0


# ---------------------------------------------------------------------------
# Fused grouped 1x1 conv (q/k/v projections) — one pallas_call, row-tiled grid
# ---------------------------------------------------------------------------
def _qkv_proj_kernel(xq_ref, xk_ref, xv_ref, wq_ref, wk_ref, wv_ref,
                     bq_ref, bk_ref, bv_ref, q_ref, k_ref, v_ref):
    q_ref[...] = jnp.dot(xq_ref[...], wq_ref[...],
                         preferred_element_type=jnp.float32) + bq_ref[...]
    k_ref[...] = jnp.dot(xk_ref[...], wk_ref[...],
                         preferred_element_type=jnp.float32) + bk_ref[...]
    v_ref[...] = jnp.dot(xv_ref[...], wv_ref[...],
                         preferred_element_type=jnp.float32) + bv_ref[...]


def fused_qkv_proj(xq, xk, xv, Wq, Wk, Wv, bq, bk, bv, row_tile=1024):
    # x*: [N, E] channels-last rows; W*: [Eout, Ein] (PyTorch conv layout).
    N, E = xq.shape
    TN = min(row_tile, max(8, ((N + 7) // 8) * 8))
    Npad = ((N + TN - 1) // TN) * TN
    if Npad != N:
        pad = ((0, Npad - N), (0, 0))
        xq = jnp.pad(xq, pad)
        xk = jnp.pad(xk, pad)
        xv = jnp.pad(xv, pad)

    row_spec = pl.BlockSpec((TN, E), lambda i: (i, 0))
    w_spec = pl.BlockSpec((E, E), lambda i: (0, 0))     # resident across the grid
    b_spec = pl.BlockSpec((1, E), lambda i: (0, 0))

    q, k, v = pl.pallas_call(
        _qkv_proj_kernel,
        grid=(Npad // TN,),
        in_specs=[row_spec, row_spec, row_spec,
                  w_spec, w_spec, w_spec,
                  b_spec, b_spec, b_spec],
        out_specs=(row_spec, row_spec, row_spec),
        out_shape=(jax.ShapeDtypeStruct((Npad, E), jnp.float32),
                   jax.ShapeDtypeStruct((Npad, E), jnp.float32),
                   jax.ShapeDtypeStruct((Npad, E), jnp.float32)),
        compiler_params=pltpu.CompilerParams(
            dimension_semantics=("parallel",)),
    )(xq, xk, xv, Wq.T, Wk.T, Wv.T,
      bq.reshape(1, E), bk.reshape(1, E), bv.reshape(1, E))
    return q[:N], k[:N], v[:N]


# ---------------------------------------------------------------------------
# Time-shifted, distance-gated attention + fused output projection.
# One (batch, time) slice per grid step, all heads and both P/N branches inside.
# ---------------------------------------------------------------------------
def _attn_out_kernel(q_ref, kP_ref, kN_ref, vP_ref, vN_ref,
                     c_ref, cPt_ref, cNt_ref, wo_ref, bo_ref,
                     out_ref, attn_ref):
    S, E = q_ref.shape
    H = attn_ref.shape[0]
    D = E // H
    C = c_ref.shape[1]
    scale = float(1.0 / np.sqrt(D))
    limit_sq = float(MOVE_LIMIT * MOVE_LIMIT)

    def pair_gate(ct_ref):
        # gate[i, j] = 1.0 iff ||coord_i - shifted_coord_j||^2 < move_limit^2
        d2 = jnp.zeros((S, S), jnp.float32)
        for ci in range(C):                                   # C static & tiny
            diff = c_ref[:, ci:ci + 1] - ct_ref[ci:ci + 1, :]  # (S,1)-(1,S)->(S,S)
            d2 = d2 + diff * diff
        return (d2 < limit_sq).astype(jnp.float32)            # no sqrt needed

    # Computed once per (batch, time) step and shared across all heads.
    gate_p = pair_gate(cPt_ref)
    gate_n = pair_gate(cNt_ref)

    q = q_ref[...]
    kp = kP_ref[...]
    kn = kN_ref[...]
    vp = vP_ref[...]
    vn = vN_ref[...]
    wo = wo_ref[...]

    def head_branch(qh, kh, vh, gate):
        logits = lax.dot_general(qh, kh, (((1,), (1,)), ((), ())),
                                 preferred_element_type=jnp.float32) * scale
        logits = logits * gate                 # module multiplies by the 0/1 gate
        e = jnp.exp(logits - jnp.max(logits, axis=-1, keepdims=True))
        denom = jnp.sum(e, axis=-1, keepdims=True)
        p = e * pl.reciprocal(denom, approx=False)   # exact recip keeps 1e-4 check
        # NOTE: attention dropout (p=0.1) is identity in eval mode.
        vals = jnp.dot(p, vh, preferred_element_type=jnp.float32)
        return vals, p

    acc = jnp.zeros((S, E), jnp.float32)
    for h in range(H):                                        # H static -> unrolled
        sl = slice(h * D, (h + 1) * D)
        qh = q[:, sl]
        vals_p, _ = head_branch(qh, kp[:, sl], vp[:, sl], gate_p)   # prev-time keys
        vals_n, p_n = head_branch(qh, kn[:, sl], vn[:, sl], gate_n)  # next-time keys
        attn_ref[h] = p_n                      # module returns the N-branch attention
        vh = 0.5 * (vals_p + vals_n)
        # fused output 1x1 projection: accumulate vh @ Wo^T[h*D:(h+1)*D, :]
        acc = acc + jnp.dot(vh, wo[sl, :], preferred_element_type=jnp.float32)
    out_ref[...] = acc + bo_ref[...]
    # TODO(synk): key_padding_mask branch not implemented (forward default is None).


def attention_pallas(q, k, v, coord, coord_p_t, coord_n_t, wo_t, bo_row):
    # q/k/v: [B, T, S, E] channels-last rows; coord: [B,T,S,C];
    # coord_p_t/coord_n_t: sequence-shifted coords transposed to [B,T,C,S].
    B, T, S, E = q.shape
    C = coord.shape[-1]
    H = NUM_HEADS
    t_last = T - 1

    cur_spec = pl.BlockSpec((None, None, S, E), lambda b, t: (b, t, 0, 0))
    prev_spec = pl.BlockSpec((None, None, S, E),
                             lambda b, t: (b, jnp.maximum(t - 1, 0), 0, 0))
    next_spec = pl.BlockSpec((None, None, S, E),
                             lambda b, t: (b, jnp.minimum(t + 1, t_last), 0, 0))
    c_spec = pl.BlockSpec((None, None, S, C), lambda b, t: (b, t, 0, 0))
    ct_spec = pl.BlockSpec((None, None, C, S), lambda b, t: (b, t, 0, 0))
    wo_spec = pl.BlockSpec((E, E), lambda b, t: (0, 0))       # resident weight
    bo_spec = pl.BlockSpec((1, E), lambda b, t: (0, 0))

    out_rows, attn_bt = pl.pallas_call(
        _attn_out_kernel,
        grid=(B, T),
        in_specs=[cur_spec, prev_spec, next_spec, prev_spec, next_spec,
                  c_spec, ct_spec, ct_spec, wo_spec, bo_spec],
        out_specs=(
            pl.BlockSpec((None, None, S, E), lambda b, t: (b, t, 0, 0)),
            pl.BlockSpec((None, None, H, S, S), lambda b, t: (b, t, 0, 0, 0)),
        ),
        out_shape=(
            jax.ShapeDtypeStruct((B, T, S, E), jnp.float32),
            jax.ShapeDtypeStruct((B, T, H, S, S), jnp.float32),
        ),
        compiler_params=pltpu.CompilerParams(
            dimension_semantics=("parallel", "parallel")),
    )(q, k, k, v, v, coord, coord_p_t, coord_n_t, wo_t, bo_row)
    return out_rows, attn_bt


# ---------------------------------------------------------------------------
# Full forward (glue in plain JAX; matmuls / attention / output proj in Pallas)
# ---------------------------------------------------------------------------
def time_mha_forward(params, key, query, value, coord):
    B, E, T, S = value.shape

    def to_rows(x):  # [B,E,T,S] -> [B*T*S, E]
        return jnp.transpose(x, (0, 2, 3, 1)).reshape(B * T * S, E)

    # grouped 1x1 conv (groups=3, group order: query, key, value)
    q_rows, k_rows, v_rows = fused_qkv_proj(
        to_rows(query), to_rows(key), to_rows(value),
        params["Wq"], params["Wk"], params["Wv"],
        params["bq"], params["bk"], params["bv"])

    q4 = q_rows.reshape(B, T, S, E)
    k4 = k_rows.reshape(B, T, S, E)
    v4 = v_rows.reshape(B, T, S, E)

    # coord shifts along the sequence axis (mirrors torch.cat([...], dim=2) in the
    # module), transposed to (C, S) rows so the kernel builds the (S,1)-(1,S)
    # distance broadcast without in-kernel transposes.
    coord_p = jnp.concatenate([coord[:, :, :1], coord[:, :, :-1]], axis=2)
    coord_n = jnp.concatenate([coord[:, :, 1:], coord[:, :, -1:]], axis=2)
    coord_p_t = jnp.swapaxes(coord_p, 2, 3)
    coord_n_t = jnp.swapaxes(coord_n, 2, 3)

    out_rows, attn_bt = attention_pallas(
        q4, k4, v4, coord, coord_p_t, coord_n_t,
        params["Wo"].T, params["bo"].reshape(1, E))

    output = jnp.transpose(out_rows, (0, 3, 1, 2))       # [B,T,S,E] -> [B,E,T,S]
    attention = jnp.transpose(attn_bt, (0, 2, 1, 3, 4))  # [B,T,H,S,S] -> [B,H,T,S,S]
    return output, attention


# ---------------------------------------------------------------------------
# Deterministic parameter init (mirrors xavier_uniform_ / zero bias shapes)
# ---------------------------------------------------------------------------
def init_params(rng):
    E = EMBED_DIM

    def xavier(k, shape, fan_in, fan_out):
        bound = float(np.sqrt(6.0 / (fan_in + fan_out)))
        return jax.random.uniform(k, shape, jnp.float32, -bound, bound)

    k0, k1, k2, k3 = jax.random.split(rng, 4)
    # qkv_proj: Conv2d(3E, 3E, 1, groups=3) -> weight [3E, E, 1, 1]; fan_in=E, fan_out=3E
    Wq = xavier(k0, (E, E), E, 3 * E)
    Wk = xavier(k1, (E, E), E, 3 * E)
    Wv = xavier(k2, (E, E), E, 3 * E)
    # output_proj: Conv2d(E, E, 1)
    Wo = xavier(k3, (E, E), E, E)
    z = jnp.zeros((E,), jnp.float32)
    return dict(Wq=Wq, Wk=Wk, Wv=Wv, Wo=Wo, bq=z, bk=z, bv=z, bo=z)


# ---------------------------------------------------------------------------
# Pure-JAX reference (mirrors the PyTorch forward exactly) for correctness check
# ---------------------------------------------------------------------------
def reference_forward(params, key, query, value, coord):
    B, E, T, S = value.shape
    H, D = NUM_HEADS, HEAD_DIM

    def conv1x1(x, w, b):  # x [B,E,T,S], w [Eout, Ein]
        return jnp.einsum("oi,bits->bots", w, x) + b[None, :, None, None]

    q = conv1x1(query, params["Wq"], params["bq"])
    k = conv1x1(key, params["Wk"], params["bk"])
    v = conv1x1(value, params["Wv"], params["bv"])

    def heads(x):  # [B,E,T,S] -> [B,H,T,S,D]
        return jnp.transpose(x.reshape(B, H, D, T, S), (0, 1, 3, 4, 2))

    q, k, v = heads(q), heads(k), heads(v)

    # time shifts for keys/values (dim 2 of [B,H,T,S,D])
    P_k = jnp.concatenate([k[:, :, :1], k[:, :, :-1]], axis=2)
    N_k = jnp.concatenate([k[:, :, 1:], k[:, :, -1:]], axis=2)
    P_v = jnp.concatenate([v[:, :, :1], v[:, :, :-1]], axis=2)
    N_v = jnp.concatenate([v[:, :, 1:], v[:, :, -1:]], axis=2)
    # coord shifts as written in the module (dim 2 of [B,T,S,C])
    P_c = jnp.concatenate([coord[:, :, :1], coord[:, :, :-1]], axis=2)
    N_c = jnp.concatenate([coord[:, :, 1:], coord[:, :, -1:]], axis=2)

    def branch(kk, vv, cc):
        logits = jnp.einsum("bhtqd,bhtkd->bhtqk", q, kk) / np.sqrt(D)
        dist = jnp.sqrt(jnp.sum(
            (coord[:, :, :, None, :] - cc[:, :, None, :, :]) ** 2, axis=-1))
        gate = (dist < MOVE_LIMIT).astype(jnp.float32)
        logits = logits * gate[:, None]
        attn = jax.nn.softmax(logits, axis=-1)
        vals = jnp.einsum("bhtqk,bhtkd->bhtqd", attn, vv)
        return vals, attn

    fwd_vals, _ = branch(P_k, P_v, P_c)
    bwd_vals, attn_n = branch(N_k, N_v, N_c)
    vals = 0.5 * (fwd_vals + bwd_vals)
    vals = jnp.transpose(vals, (0, 1, 4, 2, 3)).reshape(B, E, T, S)
    out = conv1x1(vals, params["Wo"], params["bo"])
    return out, attn_n


if __name__ == "__main__":
    rng = jax.random.PRNGKey(0)
    pk, kk, kq, kv, kc = jax.random.split(rng, 5)

    B, E, T, S, C = 2, EMBED_DIM, 4, 8, 2
    params = init_params(pk)
    key_in = jax.random.normal(kk, (B, E, T, S), jnp.float32)
    query_in = jax.random.normal(kq, (B, E, T, S), jnp.float32)
    value_in = jax.random.normal(kv, (B, E, T, S), jnp.float32)
    coord = jax.random.uniform(kc, (B, T, S, C), jnp.float32, 0.0, 40.0)

    out, attn = jax.jit(time_mha_forward)(params, key_in, query_in, value_in, coord)
    jax.block_until_ready((out, attn))

    ref_out, ref_attn = reference_forward(params, key_in, query_in, value_in, coord)
    np.testing.assert_allclose(np.asarray(out), np.asarray(ref_out),
                               rtol=1e-4, atol=1e-4)
    np.testing.assert_allclose(np.asarray(attn), np.asarray(ref_attn),
                               rtol=1e-4, atol=1e-4)

    print("KERNEL_OK")
</pallas_src>

<mosaic_0001>
module attributes {stable_mosaic.version = 11 : i64} {
  func.func @_qkv_proj_kernel(%arg0: i32, %arg1: memref<64x32xf32, #tpu.memory_space<vmem>>, %arg2: memref<64x32xf32, #tpu.memory_space<vmem>>, %arg3: memref<64x32xf32, #tpu.memory_space<vmem>>, %arg4: memref<32x32xf32, #tpu.memory_space<vmem>>, %arg5: memref<32x32xf32, #tpu.memory_space<vmem>>, %arg6: memref<32x32xf32, #tpu.memory_space<vmem>>, %arg7: memref<1x32xf32, #tpu.memory_space<vmem>>, %arg8: memref<1x32xf32, #tpu.memory_space<vmem>>, %arg9: memref<1x32xf32, #tpu.memory_space<vmem>>, %arg10: memref<64x32xf32, #tpu.memory_space<vmem>>, %arg11: memref<64x32xf32, #tpu.memory_space<vmem>>, %arg12: memref<64x32xf32, #tpu.memory_space<vmem>>) attributes {dimension_semantics = [#tpu.dimension_semantics<parallel>], iteration_bounds = array<i64: 1>, scalar_prefetch = 0 : i64, scratch_operands = 0 : i64, tpu.core_type = #tpu.core_type<tc>, window_params = [{transform_indices = @transform_0, window_bounds = array<i64: 64, 32>}, {transform_indices = @transform_1, window_bounds = array<i64: 64, 32>}, {transform_indices = @transform_2, window_bounds = array<i64: 64, 32>}, {pipeline_mode = #tpu.pipeline_mode<synchronous>, transform_indices = @transform_3, window_bounds = array<i64: 32, 32>}, {pipeline_mode = #tpu.pipeline_mode<synchronous>, transform_indices = @transform_4, window_bounds = array<i64: 32, 32>}, {pipeline_mode = #tpu.pipeline_mode<synchronous>, transform_indices = @transform_5, window_bounds = array<i64: 32, 32>}, {pipeline_mode = #tpu.pipeline_mode<synchronous>, transform_indices = @transform_6, window_bounds = array<i64: 1, 32>}, {pipeline_mode = #tpu.pipeline_mode<synchronous>, transform_indices = @transform_7, window_bounds = array<i64: 1, 32>}, {pipeline_mode = #tpu.pipeline_mode<synchronous>, transform_indices = @transform_8, window_bounds = array<i64: 1, 32>}, {transform_indices = @transform_9, window_bounds = array<i64: 64, 32>}, {transform_indices = @transform_10, window_bounds = array<i64: 64, 32>}, {transform_indices = @transform_11, window_bounds = array<i64: 64, 32>}]} {
    %c0 = arith.constant 0 : index
    %c0_0 = arith.constant 0 : index
    %0 = vector.load %arg1[%c0, %c0_0] : memref<64x32xf32, #tpu.memory_space<vmem>>, vector<64x32xf32>
    %c0_1 = arith.constant 0 : index
    %c0_2 = arith.constant 0 : index
    %1 = vector.load %arg4[%c0_1, %c0_2] : memref<32x32xf32, #tpu.memory_space<vmem>>, vector<32x32xf32>
    %cst = arith.constant dense<0.000000e+00> : vector<64x32xf32>
    %2 = tpu.matmul %0, %1, %cst {dimension_numbers = #tpu.dot_dimension_numbers<[1], [0], [0], [1], [0, 0, 1, 1], [], []>} : vector<64x32xf32>, vector<32x32xf32>, vector<64x32xf32> -> vector<64x32xf32>
    %c0_3 = arith.constant 0 : index
    %c0_4 = arith.constant 0 : index
    %3 = vector.load %arg7[%c0_3, %c0_4] : memref<1x32xf32, #tpu.memory_space<vmem>>, vector<1x32xf32>
    %4 = vector.broadcast %3 : vector<1x32xf32> to vector<64x32xf32>
    %5 = arith.addf %2, %4 : vector<64x32xf32>
    %c0_5 = arith.constant 0 : index
    %c0_6 = arith.constant 0 : index
    %6 = vector.load %arg10[%c0_5, %c0_6] : memref<64x32xf32, #tpu.memory_space<vmem>>, vector<64x32xf32>
    tpu.vector_store %arg10[%c0_5, %c0_6], %5 {strides = array<i32>} : memref<64x32xf32, #tpu.memory_space<vmem>>, vector<64x32xf32>,
    %c0_7 = arith.constant 0 : index
    %c0_8 = arith.constant 0 : index
    %7 = vector.load %arg2[%c0_7, %c0_8] : memref<64x32xf32, #tpu.memory_space<vmem>>, vector<64x32xf32>
    %c0_9 = arith.constant 0 : index
    %c0_10 = arith.constant 0 : index
    %8 = vector.load %arg5[%c0_9, %c0_10] : memref<32x32xf32, #tpu.memory_space<vmem>>, vector<32x32xf32>
    %cst_11 = arith.constant dense<0.000000e+00> : vector<64x32xf32>
    %9 = tpu.matmul %7, %8, %cst_11 {dimension_numbers = #tpu.dot_dimension_numbers<[1], [0], [0], [1], [0, 0, 1, 1], [], []>} : vector<64x32xf32>, vector<32x32xf32>, vector<64x32xf32> -> vector<64x32xf32>
    %c0_12 = arith.constant 0 : index
    %c0_13 = arith.constant 0 : index
    %10 = vector.load %arg8[%c0_12, %c0_13] : memref<1x32xf32, #tpu.memory_space<vmem>>, vector<1x32xf32>
    %11 = vector.broadcast %10 : vector<1x32xf32> to vector<64x32xf32>
    %12 = arith.addf %9, %11 : vector<64x32xf32>
    %c0_14 = arith.constant 0 : index
    %c0_15 = arith.constant 0 : index
    %13 = vector.load %arg11[%c0_14, %c0_15] : memref<64x32xf32, #tpu.memory_space<vmem>>, vector<64x32xf32>
    tpu.vector_store %arg11[%c0_14, %c0_15], %12 {strides = array<i32>} : memref<64x32xf32, #tpu.memory_space<vmem>>, vector<64x32xf32>,
    %c0_16 = arith.constant 0 : index
    %c0_17 = arith.constant 0 : index
    %14 = vector.load %arg3[%c0_16, %c0_17] : memref<64x32xf32, #tpu.memory_space<vmem>>, vector<64x32xf32>
    %c0_18 = arith.constant 0 : index
    %c0_19 = arith.constant 0 : index
    %15 = vector.load %arg6[%c0_18, %c0_19] : memref<32x32xf32, #tpu.memory_space<vmem>>, vector<32x32xf32>
    %cst_20 = arith.constant dense<0.000000e+00> : vector<64x32xf32>
    %16 = tpu.matmul %14, %15, %cst_20 {dimension_numbers = #tpu.dot_dimension_numbers<[1], [0], [0], [1], [0, 0, 1, 1], [], []>} : vector<64x32xf32>, vector<32x32xf32>, vector<64x32xf32> -> vector<64x32xf32>
    %c0_21 = arith.constant 0 : index
    %c0_22 = arith.constant 0 : index
    %17 = vector.load %arg9[%c0_21, %c0_22] : memref<1x32xf32, #tpu.memory_space<vmem>>, vector<1x32xf32>
    %18 = vector.broadcast %17 : vector<1x32xf32> to vector<64x32xf32>
    %19 = arith.addf %16, %18 : vector<64x32xf32>
    %c0_23 = arith.constant 0 : index
    %c0_24 = arith.constant 0 : index
    %20 = vector.load %arg12[%c0_23, %c0_24] : memref<64x32xf32, #tpu.memory_space<vmem>>, vector<64x32xf32>
    tpu.vector_store %arg12[%c0_23, %c0_24], %19 {strides = array<i32>} : memref<64x32xf32, #tpu.memory_space<vmem>>, vector<64x32xf32>,
    return
  }
  func.func @transform_0(%arg0: i32) -> (i32, i32) {
    %c0_i32 = arith.constant 0 : i32
    %c0_i32_0 = arith.constant 0 : i32
    return %arg0, %c0_i32 : i32, i32
  }
  func.func @transform_1(%arg0: i32) -> (i32, i32) {
    %c0_i32 = arith.constant 0 : i32
    %c0_i32_0 = arith.constant 0 : i32
    return %arg0, %c0_i32 : i32, i32
  }
  func.func @transform_2(%arg0: i32) -> (i32, i32) {
    %c0_i32 = arith.constant 0 : i32
    %c0_i32_0 = arith.constant 0 : i32
    return %arg0, %c0_i32 : i32, i32
  }
  func.func @transform_3(%arg0: i32) -> (i32, i32) {
    %c0_i32 = arith.constant 0 : i32
    %c0_i32_0 = arith.constant 0 : i32
    %c0_i32_1 = arith.constant 0 : i32
    return %c0_i32, %c0_i32_0 : i32, i32
  }
  func.func @transform_4(%arg0: i32) -> (i32, i32) {
    %c0_i32 = arith.constant 0 : i32
    %c0_i32_0 = arith.constant 0 : i32
    %c0_i32_1 = arith.constant 0 : i32
    return %c0_i32, %c0_i32_0 : i32, i32
  }
  func.func @transform_5(%arg0: i32) -> (i32, i32) {
    %c0_i32 = arith.constant 0 : i32
    %c0_i32_0 = arith.constant 0 : i32
    %c0_i32_1 = arith.constant 0 : i32
    return %c0_i32, %c0_i32_0 : i32, i32
  }
  func.func @transform_6(%arg0: i32) -> (i32, i32) {
    %c0_i32 = arith.constant 0 : i32
    %c0_i32_0 = arith.constant 0 : i32
    %c0_i32_1 = arith.constant 0 : i32
    return %c0_i32, %c0_i32_0 : i32, i32
  }
  func.func @transform_7(%arg0: i32) -> (i32, i32) {
    %c0_i32 = arith.constant 0 : i32
    %c0_i32_0 = arith.constant 0 : i32
    %c0_i32_1 = arith.constant 0 : i32
    return %c0_i32, %c0_i32_0 : i32, i32
  }
  func.func @transform_8(%arg0: i32) -> (i32, i32) {
    %c0_i32 = arith.constant 0 : i32
    %c0_i32_0 = arith.constant 0 : i32
    %c0_i32_1 = arith.constant 0 : i32
    return %c0_i32, %c0_i32_0 : i32, i32
  }
  func.func @transform_9(%arg0: i32) -> (i32, i32) {
    %c0_i32 = arith.constant 0 : i32
    %c0_i32_0 = arith.constant 0 : i32
    return %arg0, %c0_i32 : i32, i32
  }
  func.func @transform_10(%arg0: i32) -> (i32, i32) {
    %c0_i32 = arith.constant 0 : i32
    %c0_i32_0 = arith.constant 0 : i32
    return %arg0, %c0_i32 : i32, i32
  }
  func.func @transform_11(%arg0: i32) -> (i32, i32) {
    %c0_i32 = arith.constant 0 : i32
    %c0_i32_0 = arith.constant 0 : i32
    return %arg0, %c0_i32 : i32, i32
  }
}

module attributes {stable_mosaic.version = 11 : i64} {
  func.func @_attn_out_kernel(%arg0: i32, %arg1: i32, %arg2: memref<1x1x8x32xf32, #tpu.memory_space<vmem>>, %arg3: memref<1x1x8x32xf32, #tpu.memory_space<vmem>>, %arg4: memref<1x1x8x32xf32, #tpu.memory_space<vmem>>, %arg5: memref<1x1x8x32xf32, #tpu.memory_space<vmem>>, %arg6: memref<1x1x8x32xf32, #tpu.memory_space<vmem>>, %arg7: memref<1x1x8x2xf32, #tpu.memory_space<vmem>>, %arg8: memref<1x1x2x8xf32, #tpu.memory_space<vmem>>, %arg9: memref<1x1x2x8xf32, #tpu.memory_space<vmem>>, %arg10: memref<32x32xf32, #tpu.memory_space<vmem>>, %arg11: memref<1x32xf32, #tpu.memory_space<vmem>>, %arg12: memref<1x1x8x32xf32, #tpu.memory_space<vmem>>, %arg13: memref<1x1x4x8x8xf32, #tpu.memory_space<vmem>>) attributes {dimension_semantics = [#tpu.dimension_semantics<parallel>, #tpu.dimension_semantics<parallel>], iteration_bounds = array<i64: 2, 4>, scalar_prefetch = 0 : i64, scratch_operands = 0 : i64, tpu.core_type = #tpu.core_type<tc>, window_params = [{transform_indices = @transform_0, window_bounds = array<i64: 1, 1, 8, 32>}, {transform_indices = @transform_1, window_bounds = array<i64: 1, 1, 8, 32>}, {transform_indices = @transform_2, window_bounds = array<i64: 1, 1, 8, 32>}, {transform_indices = @transform_3, window_bounds = array<i64: 1, 1, 8, 32>}, {transform_indices = @transform_4, window_bounds = array<i64: 1, 1, 8, 32>}, {transform_indices = @transform_5, window_bounds = array<i64: 1, 1, 8, 2>}, {transform_indices = @transform_6, window_bounds = array<i64: 1, 1, 2, 8>}, {transform_indices = @transform_7, window_bounds = array<i64: 1, 1, 2, 8>}, {pipeline_mode = #tpu.pipeline_mode<synchronous>, transform_indices = @transform_8, window_bounds = array<i64: 32, 32>}, {pipeline_mode = #tpu.pipeline_mode<synchronous>, transform_indices = @transform_9, window_bounds = array<i64: 1, 32>}, {transform_indices = @transform_10, window_bounds = array<i64: 1, 1, 8, 32>}, {transform_indices = @transform_11, window_bounds = array<i64: 1, 1, 4, 8, 8>}]} {
    %cst = arith.constant 0.000000e+00 : f32
    %0 = vector.broadcast %cst : f32 to vector<8x8xf32>
    %c0 = arith.constant 0 : index
    %c0_0 = arith.constant 0 : index
    %c0_1 = arith.constant 0 : index
    %c0_2 = arith.constant 0 : index
    %1 = vector.load %arg7[%c0, %c0_0, %c0_1, %c0_2] : memref<1x1x8x2xf32, #tpu.memory_space<vmem>>, vector<1x1x8x1xf32>
    %2 = vector.shape_cast %1 : vector<1x1x8x1xf32> to vector<8x1xf32>
    %c0_3 = arith.constant 0 : index
    %c0_4 = arith.constant 0 : index
    %c0_5 = arith.constant 0 : index
    %c0_6 = arith.constant 0 : index
    %3 = vector.load %arg8[%c0_3, %c0_4, %c0_5, %c0_6] : memref<1x1x2x8xf32, #tpu.memory_space<vmem>>, vector<1x1x1x8xf32>
    %4 = vector.shape_cast %3 : vector<1x1x1x8xf32> to vector<1x8xf32>
    %5 = vector.broadcast %2 : vector<8x1xf32> to vector<8x8xf32>
    %6 = vector.broadcast %4 : vector<1x8xf32> to vector<8x8xf32>
    %7 = arith.subf %5, %6 : vector<8x8xf32>
    %8 = arith.mulf %7, %7 : vector<8x8xf32>
    %9 = arith.addf %0, %8 : vector<8x8xf32>
    %c0_7 = arith.constant 0 : index
    %c0_8 = arith.constant 0 : index
    %c0_9 = arith.constant 0 : index
    %c1 = arith.constant 1 : index
    %10 = vector.load %arg7[%c0_7, %c0_8, %c0_9, %c1] : memref<1x1x8x2xf32, #tpu.memory_space<vmem>>, vector<1x1x8x1xf32>
    %11 = vector.shape_cast %10 : vector<1x1x8x1xf32> to vector<8x1xf32>
    %c0_10 = arith.constant 0 : index
    %c0_11 = arith.constant 0 : index
    %c1_12 = arith.constant 1 : index
    %c0_13 = arith.constant 0 : index
    %12 = vector.load %arg8[%c0_10, %c0_11, %c1_12, %c0_13] : memref<1x1x2x8xf32, #tpu.memory_space<vmem>>, vector<1x1x1x8xf32>
    %13 = vector.shape_cast %12 : vector<1x1x1x8xf32> to vector<1x8xf32>
    %14 = vector.broadcast %11 : vector<8x1xf32> to vector<8x8xf32>
    %15 = vector.broadcast %13 : vector<1x8xf32> to vector<8x8xf32>
    %16 = arith.subf %14, %15 : vector<8x8xf32>
    %17 = arith.mulf %16, %16 : vector<8x8xf32>
    %18 = arith.addf %9, %17 : vector<8x8xf32>
    %cst_14 = arith.constant 6.250000e+02 : f32
    %19 = vector.broadcast %cst_14 : f32 to vector<8x8xf32>
    %20 = arith.cmpf olt, %18, %19 : vector<8x8xf32>
    %21 = arith.extui %20 : vector<8x8xi1> to vector<8x8xi32>
    %22 = arith.sitofp %21 : vector<8x8xi32> to vector<8x8xf32>
    %cst_15 = arith.constant 0.000000e+00 : f32
    %23 = vector.broadcast %cst_15 : f32 to vector<8x8xf32>
    %c0_16 = arith.constant 0 : index
    %c0_17 = arith.constant 0 : index
    %c0_18 = arith.constant 0 : index
    %c0_19 = arith.constant 0 : index
    %24 = vector.load %arg7[%c0_16, %c0_17, %c0_18, %c0_19] : memref<1x1x8x2xf32, #tpu.memory_space<vmem>>, vector<1x1x8x1xf32>
    %25 = vector.shape_cast %24 : vector<1x1x8x1xf32> to vector<8x1xf32>
    %c0_20 = arith.constant 0 : index
    %c0_21 = arith.constant 0 : index
    %c0_22 = arith.constant 0 : index
    %c0_23 = arith.constant 0 : index
    %26 = vector.load %arg9[%c0_20, %c0_21, %c0_22, %c0_23] : memref<1x1x2x8xf32, #tpu.memory_space<vmem>>, vector<1x1x1x8xf32>
    %27 = vector.shape_cast %26 : vector<1x1x1x8xf32> to vector<1x8xf32>
    %28 = vector.broadcast %25 : vector<8x1xf32> to vector<8x8xf32>
    %29 = vector.broadcast %27 : vector<1x8xf32> to vector<8x8xf32>
    %30 = arith.subf %28, %29 : vector<8x8xf32>
    %31 = arith.mulf %30, %30 : vector<8x8xf32>
    %32 = arith.addf %23, %31 : vector<8x8xf32>
    %c0_24 = arith.constant 0 : index
    %c0_25 = arith.constant 0 : index
    %c0_26 = arith.constant 0 : index
    %c1_27 = arith.constant 1 : index
    %33 = vector.load %arg7[%c0_24, %c0_25, %c0_26, %c1_27] : memref<1x1x8x2xf32, #tpu.memory_space<vmem>>, vector<1x1x8x1xf32>
    %34 = vector.shape_cast %33 : vector<1x1x8x1xf32> to vector<8x1xf32>
    %c0_28 = arith.constant 0 : index
    %c0_29 = arith.constant 0 : index
    %c1_30 = arith.constant 1 : index
    %c0_31 = arith.constant 0 : index
    %35 = vector.load %arg9[%c0_28, %c0_29, %c1_30, %c0_31] : memref<1x1x2x8xf32, #tpu.memory_space<vmem>>, vector<1x1x1x8xf32>
    %36 = vector.shape_cast %35 : vector<1x1x1x8xf32> to vector<1x8xf32>
    %37 = vector.broadcast %34 : vector<8x1xf32> to vector<8x8xf32>
    %38 = vector.broadcast %36 : vector<1x8xf32> to vector<8x8xf32>
    %39 = arith.subf %37, %38 : vector<8x8xf32>
    %40 = arith.mulf %39, %39 : vector<8x8xf32>
    %41 = arith.addf %32, %40 : vector<8x8xf32>
    %cst_32 = arith.constant 6.250000e+02 : f32
    %42 = vector.broadcast %cst_32 : f32 to vector<8x8xf32>
    %43 = arith.cmpf olt, %41, %42 : vector<8x8xf32>
    %44 = arith.extui %43 : vector<8x8xi1> to vector<8x8xi32>
    %45 = arith.sitofp %44 : vector<8x8xi32> to vector<8x8xf32>
    %c0_33 = arith.constant 0 : index
    %c0_34 = arith.constant 0 : index
    %c0_35 = arith.constant 0 : index
    %c0_36 = arith.constant 0 : index
    %46 = vector.load %arg2[%c0_33, %c0_34, %c0_35, %c0_36] : memref<1x1x8x32xf32, #tpu.memory_space<vmem>>, vector<1x1x8x32xf32>
    %47 = vector.shape_cast %46 : vector<1x1x8x32xf32> to vector<8x32xf32>
    %c0_37 = arith.constant 0 : index
    %c0_38 = arith.constant 0 : index
    %c0_39 = arith.constant 0 : index
    %c0_40 = arith.constant 0 : index
    %48 = vector.load %arg3[%c0_37, %c0_38, %c0_39, %c0_40] : memref<1x1x8x32xf32, #tpu.memory_space<vmem>>, vector<1x1x8x32xf32>
    %49 = vector.shape_cast %48 : vector<1x1x8x32xf32> to vector<8x32xf32>
    %c0_41 = arith.constant 0 : index
    %c0_42 = arith.constant 0 : index
    %c0_43 = arith.constant 0 : index
    %c0_44 = arith.constant 0 : index
    %50 = vector.load %arg4[%c0_41, %c0_42, %c0_43, %c0_44] : memref<1x1x8x32xf32, #tpu.memory_space<vmem>>, vector<1x1x8x32xf32>
    %51 = vector.shape_cast %50 : vector<1x1x8x32xf32> to vector<8x32xf32>
    %c0_45 = arith.constant 0 : index
    %c0_46 = arith.constant 0 : index
    %c0_47 = arith.constant 0 : index
    %c0_48 = arith.constant 0 : index
    %52 = vector.load %arg5[%c0_45, %c0_46, %c0_47, %c0_48] : memref<1x1x8x32xf32, #tpu.memory_space<vmem>>, vector<1x1x8x32xf32>
    %53 = vector.shape_cast %52 : vector<1x1x8x32xf32> to vector<8x32xf32>
    %c0_49 = arith.constant 0 : index
    %c0_50 = arith.constant 0 : index
    %c0_51 = arith.constant 0 : index
    %c0_52 = arith.constant 0 : index
    %54 = vector.load %arg6[%c0_49, %c0_50, %c0_51, %c0_52] : memref<1x1x8x32xf32, #tpu.memory_space<vmem>>, vector<1x1x8x32xf32>
    %55 = vector.shape_cast %54 : vector<1x1x8x32xf32> to vector<8x32xf32>
    %c0_53 = arith.constant 0 : index
    %c0_54 = arith.constant 0 : index
    %56 = vector.load %arg10[%c0_53, %c0_54] : memref<32x32xf32, #tpu.memory_space<vmem>>, vector<32x32xf32>
    %cst_55 = arith.constant 0.000000e+00 : f32
    %57 = vector.broadcast %cst_55 : f32 to vector<8x32xf32>
    %58 = vector.extract_strided_slice %47 {offsets = [0, 0], sizes = [8, 8], strides = [1, 1]} : vector<8x32xf32> to vector<8x8xf32>
    %59 = vector.extract_strided_slice %49 {offsets = [0, 0], sizes = [8, 8], strides = [1, 1]} : vector<8x32xf32> to vector<8x8xf32>
    %60 = vector.extract_strided_slice %53 {offsets = [0, 0], sizes = [8, 8], strides = [1, 1]} : vector<8x32xf32> to vector<8x8xf32>
    %cst_56 = arith.constant dense<0.000000e+00> : vector<8x8xf32>
    %61 = tpu.matmul %58, %59, %cst_56 {dimension_numbers = #tpu.dot_dimension_numbers<[1], [1], [0], [0], [0, 0, 1, 0], [], []>} : vector<8x8xf32>, vector<8x8xf32>, vector<8x8xf32> -> vector<8x8xf32>
    %cst_57 = arith.constant 0.353553385 : f32
    %62 = vector.broadcast %cst_57 : f32 to vector<8x8xf32>
    %63 = arith.mulf %61, %62 : vector<8x8xf32>
    %64 = arith.mulf %63, %22 : vector<8x8xf32>
    %cst_58 = arith.constant dense<0xFF800000> : vector<8xf32>
    %65 = vector.multi_reduction <maximumf>, %64, %cst_58 [1] : vector<8x8xf32> to vector<8xf32>
    %66 = vector.shape_cast %65 : vector<8xf32> to vector<8x1xf32>
    %67 = vector.broadcast %66 : vector<8x1xf32> to vector<8x8xf32>
    %68 = arith.subf %64, %67 : vector<8x8xf32>
    %69 = math.exp %68 : vector<8x8xf32>
    %cst_59 = arith.constant dense<0.000000e+00> : vector<8xf32>
    %70 = vector.multi_reduction <add>, %69, %cst_59 [1] : vector<8x8xf32> to vector<8xf32>
    %71 = vector.shape_cast %70 : vector<8xf32> to vector<8x1xf32>
    %72 = tpu.reciprocal %71 : vector<8x1xf32> -> vector<8x1xf32>
    %73 = vector.broadcast %72 : vector<8x1xf32> to vector<8x8xf32>
    %74 = arith.mulf %69, %73 : vector<8x8xf32>
    %cst_60 = arith.constant dense<0.000000e+00> : vector<8x8xf32>
    %75 = tpu.matmul %74, %60, %cst_60 {dimension_numbers = #tpu.dot_dimension_numbers<[1], [0], [0], [1], [0, 0, 1, 1], [], []>} : vector<8x8xf32>, vector<8x8xf32>, vector<8x8xf32> -> vector<8x8xf32>
    %76 = vector.extract_strided_slice %51 {offsets = [0, 0], sizes = [8, 8], strides = [1, 1]} : vector<8x32xf32> to vector<8x8xf32>
    %77 = vector.extract_strided_slice %55 {offsets = [0, 0], sizes = [8, 8], strides = [1, 1]} : vector<8x32xf32> to vector<8x8xf32>
    %cst_61 = arith.constant dense<0.000000e+00> : vector<8x8xf32>
    %78 = tpu.matmul %58, %76, %cst_61 {dimension_numbers = #tpu.dot_dimension_numbers<[1], [1], [0], [0], [0, 0, 1, 0], [], []>} : vector<8x8xf32>, vector<8x8xf32>, vector<8x8xf32> -> vector<8x8xf32>
    %cst_62 = arith.constant 0.353553385 : f32
    %79 = vector.broadcast %cst_62 : f32 to vector<8x8xf32>
    %80 = arith.mulf %78, %79 : vector<8x8xf32>
    %81 = arith.mulf %80, %45 : vector<8x8xf32>
    %cst_63 = arith.constant dense<0xFF800000> : vector<8xf32>
    %82 = vector.multi_reduction <maximumf>, %81, %cst_63 [1] : vector<8x8xf32> to vector<8xf32>
    %83 = vector.shape_cast %82 : vector<8xf32> to vector<8x1xf32>
    %84 = vector.broadcast %83 : vector<8x1xf32> to vector<8x8xf32>
    %85 = arith.subf %81, %84 : vector<8x8xf32>
    %86 = math.exp %85 : vector<8x8xf32>
    %cst_64 = arith.constant dense<0.000000e+00> : vector<8xf32>
    %87 = vector.multi_reduction <add>, %86, %cst_64 [1] : vector<8x8xf32> to vector<8xf32>
    %88 = vector.shape_cast %87 : vector<8xf32> to vector<8x1xf32>
    %89 = tpu.reciprocal %88 : vector<8x1xf32> -> vector<8x1xf32>
    %90 = vector.broadcast %89 : vector<8x1xf32> to vector<8x8xf32>
    %91 = arith.mulf %86, %90 : vector<8x8xf32>
    %cst_65 = arith.constant dense<0.000000e+00> : vector<8x8xf32>
    %92 = tpu.matmul %91, %77, %cst_65 {dimension_numbers = #tpu.dot_dimension_numbers<[1], [0], [0], [1], [0, 0, 1, 1], [], []>} : vector<8x8xf32>, vector<8x8xf32>, vector<8x8xf32> -> vector<8x8xf32>
    %c0_66 = arith.constant 0 : index
    %c0_67 = arith.constant 0 : index
    %c0_68 = arith.constant 0 : index
    %c0_69 = arith.constant 0 : index
    %c0_70 = arith.constant 0 : index
    %93 = vector.load %arg13[%c0_66, %c0_67, %c0_68, %c0_69, %c0_70] : memref<1x1x4x8x8xf32, #tpu.memory_space<vmem>>, vector<1x1x1x8x8xf32>
    %94 = vector.shape_cast %93 : vector<1x1x1x8x8xf32> to vector<8x8xf32>
    %95 = vector.shape_cast %91 : vector<8x8xf32> to vector<1x1x1x8x8xf32>
    tpu.vector_store %arg13[%c0_66, %c0_67, %c0_68, %c0_69, %c0_70], %95 {strides = array<i32>} : memref<1x1x4x8x8xf32, #tpu.memory_space<vmem>>, vector<1x1x1x8x8xf32>,
    %96 = arith.addf %75, %92 : vector<8x8xf32>
    %cst_71 = arith.constant 5.000000e-01 : f32
    %97 = vector.broadcast %cst_71 : f32 to vector<8x8xf32>
    %98 = arith.mulf %97, %96 : vector<8x8xf32>
    %99 = vector.extract_strided_slice %56 {offsets = [0, 0], sizes = [8, 32], strides = [1, 1]} : vector<32x32xf32> to vector<8x32xf32>
    %cst_72 = arith.constant dense<0.000000e+00> : vector<8x32xf32>
    %100 = tpu.matmul %98, %99, %cst_72 {dimension_numbers = #tpu.dot_dimension_numbers<[1], [0], [0], [1], [0, 0, 1, 1], [], []>} : vector<8x8xf32>, vector<8x32xf32>, vector<8x32xf32> -> vector<8x32xf32>
    %101 = arith.addf %57, %100 : vector<8x32xf32>
    %102 = vector.extract_strided_slice %47 {offsets = [0, 8], sizes = [8, 8], strides = [1, 1]} : vector<8x32xf32> to vector<8x8xf32>
    %103 = vector.extract_strided_slice %49 {offsets = [0, 8], sizes = [8, 8], strides = [1, 1]} : vector<8x32xf32> to vector<8x8xf32>
    %104 = vector.extract_strided_slice %53 {offsets = [0, 8], sizes = [8, 8], strides = [1, 1]} : vector<8x32xf32> to vector<8x8xf32>
    %cst_73 = arith.constant dense<0.000000e+00> : vector<8x8xf32>
    %105 = tpu.matmul %102, %103, %cst_73 {dimension_numbers = #tpu.dot_dimension_numbers<[1], [1], [0], [0], [0, 0, 1, 0], [], []>} : vector<8x8xf32>, vector<8x8xf32>, vector<8x8xf32> -> vector<8x8xf32>
    %cst_74 = arith.constant 0.353553385 : f32
    %106 = vector.broadcast %cst_74 : f32 to vector<8x8xf32>
    %107 = arith.mulf %105, %106 : vector<8x8xf32>
    %108 = arith.mulf %107, %22 : vector<8x8xf32>
    %cst_75 = arith.constant dense<0xFF800000> : vector<8xf32>
    %109 = vector.multi_reduction <maximumf>, %108, %cst_75 [1] : vector<8x8xf32> to vector<8xf32>
    %110 = vector.shape_cast %109 : vector<8xf32> to vector<8x1xf32>
    %111 = vector.broadcast %110 : vector<8x1xf32> to vector<8x8xf32>
    %112 = arith.subf %108, %111 : vector<8x8xf32>
    %113 = math.exp %112 : vector<8x8xf32>
    %cst_76 = arith.constant dense<0.000000e+00> : vector<8xf32>
    %114 = vector.multi_reduction <add>, %113, %cst_76 [1] : vector<8x8xf32> to vector<8xf32>
    %115 = vector.shape_cast %114 : vector<8xf32> to vector<8x1xf32>
    %116 = tpu.reciprocal %115 : vector<8x1xf32> -> vector<8x1xf32>
    %117 = vector.broadcast %116 : vector<8x1xf32> to vector<8x8xf32>
    %118 = arith.mulf %113, %117 : vector<8x8xf32>
    %cst_77 = arith.constant dense<0.000000e+00> : vector<8x8xf32>
    %119 = tpu.matmul %118, %104, %cst_77 {dimension_numbers = #tpu.dot_dimension_numbers<[1], [0], [0], [1], [0, 0, 1, 1], [], []>} : vector<8x8xf32>, vector<8x8xf32>, vector<8x8xf32> -> vector<8x8xf32>
    %120 = vector.extract_strided_slice %51 {offsets = [0, 8], sizes = [8, 8], strides = [1, 1]} : vector<8x32xf32> to vector<8x8xf32>
    %121 = vector.extract_strided_slice %55 {offsets = [0, 8], sizes = [8, 8], strides = [1, 1]} : vector<8x32xf32> to vector<8x8xf32>
    %cst_78 = arith.constant dense<0.000000e+00> : vector<8x8xf32>
    %122 = tpu.matmul %102, %120, %cst_78 {dimension_numbers = #tpu.dot_dimension_numbers<[1], [1], [0], [0], [0, 0, 1, 0], [], []>} : vector<8x8xf32>, vector<8x8xf32>, vector<8x8xf32> -> vector<8x8xf32>
    %cst_79 = arith.constant 0.353553385 : f32
    %123 = vector.broadcast %cst_79 : f32 to vector<8x8xf32>
    %124 = arith.mulf %122, %123 : vector<8x8xf32>
    %125 = arith.mulf %124, %45 : vector<8x8xf32>
    %cst_80 = arith.constant dense<0xFF800000> : vector<8xf32>
    %126 = vector.multi_reduction <maximumf>, %125, %cst_80 [1] : vector<8x8xf32> to vector<8xf32>
    %127 = vector.shape_cast %126 : vector<8xf32> to vector<8x1xf32>
    %128 = vector.broadcast %127 : vector<8x1xf32> to vector<8x8xf32>
    %129 = arith.subf %125, %128 : vector<8x8xf32>
    %130 = math.exp %129 : vector<8x8xf32>
    %cst_81 = arith.constant dense<0.000000e+00> : vector<8xf32>
    %131 = vector.multi_reduction <add>, %130, %cst_81 [1] : vector<8x8xf32> to vector<8xf32>
    %132 = vector.shape_cast %131 : vector<8xf32> to vector<8x1xf32>
    %133 = tpu.reciprocal %132 : vector<8x1xf32> -> vector<8x1xf32>
    %134 = vector.broadcast %133 : vector<8x1xf32> to vector<8x8xf32>
    %135 = arith.mulf %130, %134 : vector<8x8xf32>
    %cst_82 = arith.constant dense<0.000000e+00> : vector<8x8xf32>
    %136 = tpu.matmul %135, %121, %cst_82 {dimension_numbers = #tpu.dot_dimension_numbers<[1], [0], [0], [1], [0, 0, 1, 1], [], []>} : vector<8x8xf32>, vector<8x8xf32>, vector<8x8xf32> -> vector<8x8xf32>
    %c0_83 = arith.constant 0 : index
    %c0_84 = arith.constant 0 : index
    %c1_85 = arith.constant 1 : index
    %c0_86 = arith.constant 0 : index
    %c0_87 = arith.constant 0 : index
    %137 = vector.load %arg13[%c0_83, %c0_84, %c1_85, %c0_86, %c0_87] : memref<1x1x4x8x8xf32, #tpu.memory_space<vmem>>, vector<1x1x1x8x8xf32>
    %138 = vector.shape_cast %137 : vector<1x1x1x8x8xf32> to vector<8x8xf32>
    %139 = vector.shape_cast %135 : vector<8x8xf32> to vector<1x1x1x8x8xf32>
    tpu.vector_store %arg13[%c0_83, %c0_84, %c1_85, %c0_86, %c0_87], %139 {strides = array<i32>} : memref<1x1x4x8x8xf32, #tpu.memory_space<vmem>>, vector<1x1x1x8x8xf32>,
    %140 = arith.addf %119, %136 : vector<8x8xf32>
    %cst_88 = arith.constant 5.000000e-01 : f32
    %141 = vector.broadcast %cst_88 : f32 to vector<8x8xf32>
    %142 = arith.mulf %141, %140 : vector<8x8xf32>
    %143 = vector.extract_strided_slice %56 {offsets = [8, 0], sizes = [8, 32], strides = [1, 1]} : vector<32x32xf32> to vector<8x32xf32>
    %cst_89 = arith.constant dense<0.000000e+00> : vector<8x32xf32>
    %144 = tpu.matmul %142, %143, %cst_89 {dimension_numbers = #tpu.dot_dimension_numbers<[1], [0], [0], [1], [0, 0, 1, 1], [], []>} : vector<8x8xf32>, vector<8x32xf32>, vector<8x32xf32> -> vector<8x32xf32>
    %145 = arith.addf %101, %144 : vector<8x32xf32>
    %146 = vector.extract_strided_slice %47 {offsets = [0, 16], sizes = [8, 8], strides = [1, 1]} : vector<8x32xf32> to vector<8x8xf32>
    %147 = vector.extract_strided_slice %49 {offsets = [0, 16], sizes = [8, 8], strides = [1, 1]} : vector<8x32xf32> to vector<8x8xf32>
    %148 = vector.extract_strided_slice %53 {offsets = [0, 16], sizes = [8, 8], strides = [1, 1]} : vector<8x32xf32> to vector<8x8xf32>
    %cst_90 = arith.constant dense<0.000000e+00> : vector<8x8xf32>
    %149 = tpu.matmul %146, %147, %cst_90 {dimension_numbers = #tpu.dot_dimension_numbers<[1], [1], [0], [0], [0, 0, 1, 0], [], []>} : vector<8x8xf32>, vector<8x8xf32>, vector<8x8xf32> -> vector<8x8xf32>
    %cst_91 = arith.constant 0.353553385 : f32
    %150 = vector.broadcast %cst_91 : f32 to vector<8x8xf32>
    %151 = arith.mulf %149, %150 : vector<8x8xf32>
    %152 = arith.mulf %151, %22 : vector<8x8xf32>
    %cst_92 = arith.constant dense<0xFF800000> : vector<8xf32>
    %153 = vector.multi_reduction <maximumf>, %152, %cst_92 [1] : vector<8x8xf32> to vector<8xf32>
    %154 = vector.shape_cast %153 : vector<8xf32> to vector<8x1xf32>
    %155 = vector.broadcast %154 : vector<8x1xf32> to vector<8x8xf32>
    %156 = arith.subf %152, %155 : vector<8x8xf32>
    %157 = math.exp %156 : vector<8x8xf32>
    %cst_93 = arith.constant dense<0.000000e+00> : vector<8xf32>
    %158 = vector.multi_reduction <add>, %157, %cst_93 [1] : vector<8x8xf32> to vector<8xf32>
    %159 = vector.shape_cast %158 : vector<8xf32> to vector<8x1xf32>
    %160 = tpu.reciprocal %159 : vector<8x1xf32> -> vector<8x1xf32>
    %161 = vector.broadcast %160 : vector<8x1xf32> to vector<8x8xf32>
    %162 = arith.mulf %157, %161 : vector<8x8xf32>
    %cst_94 = arith.constant dense<0.000000e+00> : vector<8x8xf32>
    %163 = tpu.matmul %162, %148, %cst_94 {dimension_numbers = #tpu.dot_dimension_numbers<[1], [0], [0], [1], [0, 0, 1, 1], [], []>} : vector<8x8xf32>, vector<8x8xf32>, vector<8x8xf32> -> vector<8x8xf32>
    %164 = vector.extract_strided_slice %51 {offsets = [0, 16], sizes = [8, 8], strides = [1, 1]} : vector<8x32xf32> to vector<8x8xf32>
    %165 = vector.extract_strided_slice %55 {offsets = [0, 16], sizes = [8, 8], strides = [1, 1]} : vector<8x32xf32> to vector<8x8xf32>
    %cst_95 = arith.constant dense<0.000000e+00> : vector<8x8xf32>
    %166 = tpu.matmul %146, %164, %cst_95 {dimension_numbers = #tpu.dot_dimension_numbers<[1], [1], [0], [0], [0, 0, 1, 0], [], []>} : vector<8x8xf32>, vector<8x8xf32>, vector<8x8xf32> -> vector<8x8xf32>
    %cst_96 = arith.constant 0.353553385 : f32
    %167 = vector.broadcast %cst_96 : f32 to vector<8x8xf32>
    %168 = arith.mulf %166, %167 : vector<8x8xf32>
    %169 = arith.mulf %168, %45 : vector<8x8xf32>
    %cst_97 = arith.constant dense<0xFF800000> : vector<8xf32>
    %170 = vector.multi_reduction <maximumf>, %169, %cst_97 [1] : vector<8x8xf32> to vector<8xf32>
    %171 = vector.shape_cast %170 : vector<8xf32> to vector<8x1xf32>
    %172 = vector.broadcast %171 : vector<8x1xf32> to vector<8x8xf32>
    %173 = arith.subf %169, %172 : vector<8x8xf32>
    %174 = math.exp %173 : vector<8x8xf32>
    %cst_98 = arith.constant dense<0.000000e+00> : vector<8xf32>
    %175 = vector.multi_reduction <add>, %174, %cst_98 [1] : vector<8x8xf32> to vector<8xf32>
    %176 = vector.shape_cast %175 : vector<8xf32> to vector<8x1xf32>
    %177 = tpu.reciprocal %176 : vector<8x1xf32> -> vector<8x1xf32>
    %178 = vector.broadcast %177 : vector<8x1xf32> to vector<8x8xf32>
    %179 = arith.mulf %174, %178 : vector<8x8xf32>
    %cst_99 = arith.constant dense<0.000000e+00> : vector<8x8xf32>
    %180 = tpu.matmul %179, %165, %cst_99 {dimension_numbers = #tpu.dot_dimension_numbers<[1], [0], [0], [1], [0, 0, 1, 1], [], []>} : vector<8x8xf32>, vector<8x8xf32>, vector<8x8xf32> -> vector<8x8xf32>
    %c0_100 = arith.constant 0 : index
    %c0_101 = arith.constant 0 : index
    %c2 = arith.constant 2 : index
    %c0_102 = arith.constant 0 : index
    %c0_103 = arith.constant 0 : index
    %181 = vector.load %arg13[%c0_100, %c0_101, %c2, %c0_102, %c0_103] : memref<1x1x4x8x8xf32, #tpu.memory_space<vmem>>, vector<1x1x1x8x8xf32>
    %182 = vector.shape_cast %181 : vector<1x1x1x8x8xf32> to vector<8x8xf32>
    %183 = vector.shape_cast %179 : vector<8x8xf32> to vector<1x1x1x8x8xf32>
    tpu.vector_store %arg13[%c0_100, %c0_101, %c2, %c0_102, %c0_103], %183 {strides = array<i32>} : memref<1x1x4x8x8xf32, #tpu.memory_space<vmem>>, vector<1x1x1x8x8xf32>,
    %184 = arith.addf %163, %180 : vector<8x8xf32>
    %cst_104 = arith.constant 5.000000e-01 : f32
    %185 = vector.broadcast %cst_104 : f32 to vector<8x8xf32>
    %186 = arith.mulf %185, %184 : vector<8x8xf32>
    %187 = vector.extract_strided_slice %56 {offsets = [16, 0], sizes = [8, 32], strides = [1, 1]} : vector<32x32xf32> to vector<8x32xf32>
    %cst_105 = arith.constant dense<0.000000e+00> : vector<8x32xf32>
    %188 = tpu.matmul %186, %187, %cst_105 {dimension_numbers = #tpu.dot_dimension_numbers<[1], [0], [0], [1], [0, 0, 1, 1], [], []>} : vector<8x8xf32>, vector<8x32xf32>, vector<8x32xf32> -> vector<8x32xf32>
    %189 = arith.addf %145, %188 : vector<8x32xf32>
    %190 = vector.extract_strided_slice %47 {offsets = [0, 24], sizes = [8, 8], strides = [1, 1]} : vector<8x32xf32> to vector<8x8xf32>
    %191 = vector.extract_strided_slice %49 {offsets = [0, 24], sizes = [8, 8], strides = [1, 1]} : vector<8x32xf32> to vector<8x8xf32>
    %192 = vector.extract_strided_slice %53 {offsets = [0, 24], sizes = [8, 8], strides = [1, 1]} : vector<8x32xf32> to vector<8x8xf32>
    %cst_106 = arith.constant dense<0.000000e+00> : vector<8x8xf32>
    %193 = tpu.matmul %190, %191, %cst_106 {dimension_numbers = #tpu.dot_dimension_numbers<[1], [1], [0], [0], [0, 0, 1, 0], [], []>} : vector<8x8xf32>, vector<8x8xf32>, vector<8x8xf32> -> vector<8x8xf32>
    %cst_107 = arith.constant 0.353553385 : f32
    %194 = vector.broadcast %cst_107 : f32 to vector<8x8xf32>
    %195 = arith.mulf %193, %194 : vector<8x8xf32>
    %196 = arith.mulf %195, %22 : vector<8x8xf32>
    %cst_108 = arith.constant dense<0xFF800000> : vector<8xf32>
    %197 = vector.multi_reduction <maximumf>, %196, %cst_108 [1] : vector<8x8xf32> to vector<8xf32>
    %198 = vector.shape_cast %197 : vector<8xf32> to vector<8x1xf32>
    %199 = vector.broadcast %198 : vector<8x1xf32> to vector<8x8xf32>
    %200 = arith.subf %196, %199 : vector<8x8xf32>
    %201 = math.exp %200 : vector<8x8xf32>
    %cst_109 = arith.constant dense<0.000000e+00> : vector<8xf32>
    %202 = vector.multi_reduction <add>, %201, %cst_109 [1] : vector<8x8xf32> to vector<8xf32>
    %203 = vector.shape_cast %202 : vector<8xf32> to vector<8x1xf32>
    %204 = tpu.reciprocal %203 : vector<8x1xf32> -> vector<8x1xf32>
    %205 = vector.broadcast %204 : vector<8x1xf32> to vector<8x8xf32>
    %206 = arith.mulf %201, %205 : vector<8x8xf32>
    %cst_110 = arith.constant dense<0.000000e+00> : vector<8x8xf32>
    %207 = tpu.matmul %206, %192, %cst_110 {dimension_numbers = #tpu.dot_dimension_numbers<[1], [0], [0], [1], [0, 0, 1, 1], [], []>} : vector<8x8xf32>, vector<8x8xf32>, vector<8x8xf32> -> vector<8x8xf32>
    %208 = vector.extract_strided_slice %51 {offsets = [0, 24], sizes = [8, 8], strides = [1, 1]} : vector<8x32xf32> to vector<8x8xf32>
    %209 = vector.extract_strided_slice %55 {offsets = [0, 24], sizes = [8, 8], strides = [1, 1]} : vector<8x32xf32> to vector<8x8xf32>
    %cst_111 = arith.constant dense<0.000000e+00> : vector<8x8xf32>
    %210 = tpu.matmul %190, %208, %cst_111 {dimension_numbers = #tpu.dot_dimension_numbers<[1], [1], [0], [0], [0, 0, 1, 0], [], []>} : vector<8x8xf32>, vector<8x8xf32>, vector<8x8xf32> -> vector<8x8xf32>
    %cst_112 = arith.constant 0.353553385 : f32
    %211 = vector.broadcast %cst_112 : f32 to vector<8x8xf32>
    %212 = arith.mulf %210, %211 : vector<8x8xf32>
    %213 = arith.mulf %212, %45 : vector<8x8xf32>
    %cst_113 = arith.constant dense<0xFF800000> : vector<8xf32>
    %214 = vector.multi_reduction <maximumf>, %213, %cst_113 [1] : vector<8x8xf32> to vector<8xf32>
    %215 = vector.shape_cast %214 : vector<8xf32> to vector<8x1xf32>
    %216 = vector.broadcast %215 : vector<8x1xf32> to vector<8x8xf32>
    %217 = arith.subf %213, %216 : vector<8x8xf32>
    %218 = math.exp %217 : vector<8x8xf32>
    %cst_114 = arith.constant dense<0.000000e+00> : vector<8xf32>
    %219 = vector.multi_reduction <add>, %218, %cst_114 [1] : vector<8x8xf32> to vector<8xf32>
    %220 = vector.shape_cast %219 : vector<8xf32> to vector<8x1xf32>
    %221 = tpu.reciprocal %220 : vector<8x1xf32> -> vector<8x1xf32>
    %222 = vector.broadcast %221 : vector<8x1xf32> to vector<8x8xf32>
    %223 = arith.mulf %218, %222 : vector<8x8xf32>
    %cst_115 = arith.constant dense<0.000000e+00> : vector<8x8xf32>
    %224 = tpu.matmul %223, %209, %cst_115 {dimension_numbers = #tpu.dot_dimension_numbers<[1], [0], [0], [1], [0, 0, 1, 1], [], []>} : vector<8x8xf32>, vector<8x8xf32>, vector<8x8xf32> -> vector<8x8xf32>
    %c0_116 = arith.constant 0 : index
    %c0_117 = arith.constant 0 : index
    %c3 = arith.constant 3 : index
    %c0_118 = arith.constant 0 : index
    %c0_119 = arith.constant 0 : index
    %225 = vector.load %arg13[%c0_116, %c0_117, %c3, %c0_118, %c0_119] : memref<1x1x4x8x8xf32, #tpu.memory_space<vmem>>, vector<1x1x1x8x8xf32>
    %226 = vector.shape_cast %225 : vector<1x1x1x8x8xf32> to vector<8x8xf32>
    %227 = vector.shape_cast %223 : vector<8x8xf32> to vector<1x1x1x8x8xf32>
    tpu.vector_store %arg13[%c0_116, %c0_117, %c3, %c0_118, %c0_119], %227 {strides = array<i32>} : memref<1x1x4x8x8xf32, #tpu.memory_space<vmem>>, vector<1x1x1x8x8xf32>,
    %228 = arith.addf %207, %224 : vector<8x8xf32>
    %cst_120 = arith.constant 5.000000e-01 : f32
    %229 = vector.broadcast %cst_120 : f32 to vector<8x8xf32>
    %230 = arith.mulf %229, %228 : vector<8x8xf32>
    %231 = vector.extract_strided_slice %56 {offsets = [24, 0], sizes = [8, 32], strides = [1, 1]} : vector<32x32xf32> to vector<8x32xf32>
    %cst_121 = arith.constant dense<0.000000e+00> : vector<8x32xf32>
    %232 = tpu.matmul %230, %231, %cst_121 {dimension_numbers = #tpu.dot_dimension_numbers<[1], [0], [0], [1], [0, 0, 1, 1], [], []>} : vector<8x8xf32>, vector<8x32xf32>, vector<8x32xf32> -> vector<8x32xf32>
    %233 = arith.addf %189, %232 : vector<8x32xf32>
    %c0_122 = arith.constant 0 : index
    %c0_123 = arith.constant 0 : index
    %234 = vector.load %arg11[%c0_122, %c0_123] : memref<1x32xf32, #tpu.memory_space<vmem>>, vector<1x32xf32>
    %235 = vector.broadcast %234 : vector<1x32xf32> to vector<8x32xf32>
    %236 = arith.addf %233, %235 : vector<8x32xf32>
    %c0_124 = arith.constant 0 : index
    %c0_125 = arith.constant 0 : index
    %c0_126 = arith.constant 0 : index
    %c0_127 = arith.constant 0 : index
    %237 = vector.load %arg12[%c0_124, %c0_125, %c0_126, %c0_127] : memref<1x1x8x32xf32, #tpu.memory_space<vmem>>, vector<1x1x8x32xf32>
    %238 = vector.shape_cast %237 : vector<1x1x8x32xf32> to vector<8x32xf32>
    %239 = vector.shape_cast %236 : vector<8x32xf32> to vector<1x1x8x32xf32>
    tpu.vector_store %arg12[%c0_124, %c0_125, %c0_126, %c0_127], %239 {strides = array<i32>} : memref<1x1x8x32xf32, #tpu.memory_space<vmem>>, vector<1x1x8x32xf32>,
    return
  }
  func.func @transform_0(%arg0: i32, %arg1: i32) -> (i32, i32, i32, i32) {
    %c0_i32 = arith.constant 0 : i32
    %c0_i32_0 = arith.constant 0 : i32
    %c0_i32_1 = arith.constant 0 : i32
    return %arg0, %arg1, %c0_i32, %c0_i32_0 : i32, i32, i32, i32
  }
  func.func @transform_1(%arg0: i32, %arg1: i32) -> (i32, i32, i32, i32) {
    %c1_i32 = arith.constant 1 : i32
    %0 = arith.subi %arg1, %c1_i32 : i32
    %c0_i32 = arith.constant 0 : i32
    %1 = arith.maxsi %0, %c0_i32 : i32
    %c0_i32_0 = arith.constant 0 : i32
    %c0_i32_1 = arith.constant 0 : i32
    %c0_i32_2 = arith.constant 0 : i32
    return %arg0, %1, %c0_i32_0, %c0_i32_1 : i32, i32, i32, i32
  }
  func.func @transform_2(%arg0: i32, %arg1: i32) -> (i32, i32, i32, i32) {
    %c1_i32 = arith.constant 1 : i32
    %0 = arith.addi %arg1, %c1_i32 : i32
    %c3_i32 = arith.constant 3 : i32
    %1 = arith.minsi %0, %c3_i32 : i32
    %c0_i32 = arith.constant 0 : i32
    %c0_i32_0 = arith.constant 0 : i32
    %c0_i32_1 = arith.constant 0 : i32
    return %arg0, %1, %c0_i32, %c0_i32_0 : i32, i32, i32, i32
  }
  func.func @transform_3(%arg0: i32, %arg1: i32) -> (i32, i32, i32, i32) {
    %c1_i32 = arith.constant 1 : i32
    %0 = arith.subi %arg1, %c1_i32 : i32
    %c0_i32 = arith.constant 0 : i32
    %1 = arith.maxsi %0, %c0_i32 : i32
    %c0_i32_0 = arith.constant 0 : i32
    %c0_i32_1 = arith.constant 0 : i32
    %c0_i32_2 = arith.constant 0 : i32
    return %arg0, %1, %c0_i32_0, %c0_i32_1 : i32, i32, i32, i32
  }
  func.func @transform_4(%arg0: i32, %arg1: i32) -> (i32, i32, i32, i32) {
    %c1_i32 = arith.constant 1 : i32
    %0 = arith.addi %arg1, %c1_i32 : i32
    %c3_i32 = arith.constant 3 : i32
    %1 = arith.minsi %0, %c3_i32 : i32
    %c0_i32 = arith.constant 0 : i32
    %c0_i32_0 = arith.constant 0 : i32
    %c0_i32_1 = arith.constant 0 : i32
    return %arg0, %1, %c0_i32, %c0_i32_0 : i32, i32, i32, i32
  }
  func.func @transform_5(%arg0: i32, %arg1: i32) -> (i32, i32, i32, i32) {
    %c0_i32 = arith.constant 0 : i32
    %c0_i32_0 = arith.constant 0 : i32
    %c0_i32_1 = arith.constant 0 : i32
    return %arg0, %arg1, %c0_i32, %c0_i32_0 : i32, i32, i32, i32
  }
  func.func @transform_6(%arg0: i32, %arg1: i32) -> (i32, i32, i32, i32) {
    %c0_i32 = arith.constant 0 : i32
    %c0_i32_0 = arith.constant 0 : i32
    %c0_i32_1 = arith.constant 0 : i32
    return %arg0, %arg1, %c0_i32, %c0_i32_0 : i32, i32, i32, i32
  }
  func.func @transform_7(%arg0: i32, %arg1: i32) -> (i32, i32, i32, i32) {
    %c0_i32 = arith.constant 0 : i32
    %c0_i32_0 = arith.constant 0 : i32
    %c0_i32_1 = arith.constant 0 : i32
    return %arg0, %arg1, %c0_i32, %c0_i32_0 : i32, i32, i32, i32
  }
  func.func @transform_8(%arg0: i32, %arg1: i32) -> (i32, i32) {
    %c0_i32 = arith.constant 0 : i32
    %c0_i32_0 = arith.constant 0 : i32
    %c0_i32_1 = arith.constant 0 : i32
    return %c0_i32, %c0_i32_0 : i32, i32
  }
  func.func @transform_9(%arg0: i32, %arg1: i32) -> (i32, i32) {
    %c0_i32 = arith.constant 0 : i32
    %c0_i32_0 = arith.constant 0 : i32
    %c0_i32_1 = arith.constant 0 : i32
    return %c0_i32, %c0_i32_0 : i32, i32
  }
  func.func @transform_10(%arg0: i32, %arg1: i32) -> (i32, i32, i32, i32) {
    %c0_i32 = arith.constant 0 : i32
    %c0_i32_0 = arith.constant 0 : i32
    %c0_i32_1 = arith.constant 0 : i32
    return %arg0, %arg1, %c0_i32, %c0_i32_0 : i32, i32, i32, i32
  }
  func.func @transform_11(%arg0: i32, %arg1: i32) -> (i32, i32, i32, i32, i32) {
    %c0_i32 = arith.constant 0 : i32
    %c0_i32_0 = arith.constant 0 : i32
    %c0_i32_1 = arith.constant 0 : i32
    %c0_i32_2 = arith.constant 0 : i32
    return %arg0, %arg1, %c0_i32, %c0_i32_0, %c0_i32_1 : i32, i32, i32, i32, i32
  }
}

</mosaic_0001>

<llo_original>
// kernel: time_mha_forward.2
$region0: #{time_mha_forward.2}
  #allocation0 [shape = 'u32[]', space=smem, size = 0x4, offset = 0x4, fixed_abs, tag = 'smem constant byte address 0x4 - core index']
  #allocation1 [shape = 'u32[144,128]{1,0:T(1,128)}', space=vmem, size = 0x12000, scoped, tag = 'internal scratch']
  %s0 = inlined_call_operand.vmem [shape: f32[64,32], index: 0, kind: input, shape index: {}]
  %s1 = inlined_call_operand.vmem [shape: f32[64,32], index: 1, kind: input, shape index: {}]
  %s2 = inlined_call_operand.vmem [shape: f32[64,32], index: 2, kind: input, shape index: {}]
  %s3 = inlined_call_operand.vmem [shape: f32[32,32], index: 3, kind: input, shape index: {}]
  %s4 = inlined_call_operand.vmem [shape: f32[32,32], index: 4, kind: input, shape index: {}]
  %s5 = inlined_call_operand.vmem [shape: f32[32,32], index: 5, kind: input, shape index: {}]
  %s6 = inlined_call_operand.vmem [shape: f32[1,32], index: 6, kind: input, shape index: {}]
  %s7 = inlined_call_operand.vmem [shape: f32[1,32], index: 7, kind: input, shape index: {}]
  %s8 = inlined_call_operand.vmem [shape: f32[1,32], index: 8, kind: input, shape index: {}]
  %s9 = inlined_call_operand.vmem [shape: f32[64,32], index: 9, kind: output, shape index: {0}]
  %s10 = inlined_call_operand.vmem [shape: f32[64,32], index: 10, kind: output, shape index: {1}]
  %s11 = inlined_call_operand.vmem [shape: f32[64,32], index: 11, kind: output, shape index: {2}]
  %12 = xla_tuple %s9, %s10, %s11
  %s13 = sld [smem:[#allocation0]]
  $region62: #{time_mha_forward.2} parent=0
    _
  %s15 = ssub.s32 1, %s13
  %s16 = scalar_select 0, %s15, %s13
  // Predicated region
  $region2: #{time_mha_forward.2} parent=0 // pred_check
    _
  $region3: #{time_mha_forward.2} parent=0 // pred_check_branch
    %18 = sbr.rel (0) target = $region5
  $region4: #{time_mha_forward.2} parent=0 // pred_region
    _
  $region5: #{time_mha_forward.2} parent=0 // pred_fallthru
    _
  // Predicated region
  $region6: #{time_mha_forward.2} parent=0 // pred_check
    _
  $region7: #{time_mha_forward.2} parent=0 // pred_check_branch
    %20 = sbr.rel (0) target = $region9
  $region8: #{time_mha_forward.2} parent=0 // pred_region
    _
  $region9: #{time_mha_forward.2} parent=0 // pred_fallthru
    _
  // Predicated region
  $region10: #{time_mha_forward.2} parent=0 // pred_check
    _
  $region11: #{time_mha_forward.2} parent=0 // pred_check_branch
    %22 = sbr.rel (0) target = $region13
  $region12: #{time_mha_forward.2} parent=0 // pred_region
    _
  $region13: #{time_mha_forward.2} parent=0 // pred_fallthru
    _
  // Predicated region
  $region14: #{time_mha_forward.2} parent=0 // pred_check
    _
  $region15: #{time_mha_forward.2} parent=0 // pred_check_branch
    %24 = sbr.rel (0) target = $region17
  $region16: #{time_mha_forward.2} parent=0 // pred_region
    _
  $region17: #{time_mha_forward.2} parent=0 // pred_fallthru
    _
  // Predicated region
  $region18: #{time_mha_forward.2} parent=0 // pred_check
    _
  $region19: #{time_mha_forward.2} parent=0 // pred_check_branch
    %26 = sbr.rel (0) target = $region21
  $region20: #{time_mha_forward.2} parent=0 // pred_region
    _
  $region21: #{time_mha_forward.2} parent=0 // pred_fallthru
    _
  // Predicated region
  $region22: #{time_mha_forward.2} parent=0 // pred_check
    _
  $region23: #{time_mha_forward.2} parent=0 // pred_check_branch
    %28 = sbr.rel (0) target = $region25
  $region24: #{time_mha_forward.2} parent=0 // pred_region
    _
  $region25: #{time_mha_forward.2} parent=0 // pred_fallthru
    _
  // Predicated region
  $region26: #{time_mha_forward.2} parent=0 // pred_check
    _
  $region27: #{time_mha_forward.2} parent=0 // pred_check_branch
    %30 = sbr.rel (0) target = $region29
  $region28: #{time_mha_forward.2} parent=0 // pred_region
    _
  $region29: #{time_mha_forward.2} parent=0 // pred_fallthru
    _
  // Predicated region
  $region30: #{time_mha_forward.2} parent=0 // pred_check
    _
  $region31: #{time_mha_forward.2} parent=0 // pred_check_branch
    %32 = sbr.rel (0) target = $region33
  $region32: #{time_mha_forward.2} parent=0 // pred_region
    _
  $region33: #{time_mha_forward.2} parent=0 // pred_fallthru
    _
  // Predicated region
  $region34: #{time_mha_forward.2} parent=0 // pred_check
    _
  $region35: #{time_mha_forward.2} parent=0 // pred_check_branch
    %34 = sbr.rel (0) target = $region37
  $region36: #{time_mha_forward.2} parent=0 // pred_region
    _
  $region37: #{time_mha_forward.2} parent=0 // pred_fallthru
    _
  %v35 = vld [vmem:[%s0] sm:$0xff]
  %v36 = vld [vmem:[%s0 + $0x8] sm:$0xff]
  %v37 = vld [vmem:[%s0 + $0x10] sm:$0xff]
  %v38 = vld [vmem:[%s0 + $0x18] sm:$0xff]
  %v39 = vld [vmem:[%s0 + $0x20] sm:$0xff]
  %v40 = vld [vmem:[%s0 + $0x28] sm:$0xff]
  %v41 = vld [vmem:[%s0 + $0x30] sm:$0xff]
  %v42 = vld [vmem:[%s0 + $0x38] sm:$0xff]
  %v43 = vld [vmem:[%s3] sm:$0xff]
  %v44 = vld [vmem:[%s3 + $0x8] sm:$0xff]
  %v45 = vld [vmem:[%s3 + $0x10] sm:$0xff]
  %v46 = vld [vmem:[%s3 + $0x18] sm:$0xff]
  %v47 = vld [vmem:[%s6] sm:$0x1]
  %v49 = vlaneseq
  %v50 = vshrl.u32 %v49, 7
  %v51 = vsub.s32 0, %v50
  %v52 = vrot.slane %v47, %v51
  %vm54 = vcmask 261120
  %v56 = vsel %vm54, %v35, 0
  %v59 = vsel %vm54, %v36, 0
  %v62 = vsel %vm54, %v37, 0
  %v65 = vsel %vm54, %v38, 0
  %v68 = vsel %vm54, %v39, 0
  %v71 = vsel %vm54, %v40, 0
  %v74 = vsel %vm54, %v41, 0
  %v77 = vsel %vm54, %v42, 0
  %79 = vmatprep.subr.mxu0 0.0
  %80 = vmatpush1.msra.mxu0 %v43
  %81 = vmatprep.subr.mxu0 0.0
  %82 = vmatpush1.msra.mxu0 %v44
  %83 = vmatprep.subr.mxu0 0.0
  %84 = vmatpush1.msra.mxu0 %v45
  %85 = vmatprep.subr.mxu0 0.0
  %86 = vmatpush1.msra.mxu0 %v46
  %87 = vmatprep.subr.mxu0 0.0
  %88 = vmatpush1.msra.mxu0 0.0
  %89 = vmatprep.subr.mxu0 0.0
  %90 = vmatpush1.msra.mxu0 0.0
  %91 = vmatprep.subr.mxu0 0.0
  %92 = vmatpush1.msra.mxu0 0.0
  %93 = vmatprep.subr.mxu0 0.0
  %94 = vmatpush1.msra.mxu0 0.0
  %95 = vmatprep.subr.mxu0 0.0
  %96 = vmatpush1.msra.mxu0 0.0
  %97 = vmatprep.subr.mxu0 0.0
  %98 = vmatpush1.msra.mxu0 0.0
  %99 = vmatprep.subr.mxu0 0.0
  %100 = vmatpush1.msra.mxu0 0.0
  %101 = vmatprep.subr.mxu0 0.0
  %102 = vmatpush1.msra.mxu0 0.0
  %103 = vmatprep.subr.mxu0 0.0
  %104 = vmatpush1.msra.mxu0 0.0
  %105 = vmatprep.subr.mxu0 0.0
  %106 = vmatpush1.msra.mxu0 0.0
  %107 = vmatprep.subr.mxu0 0.0
  %108 = vmatpush1.msra.mxu0 0.0
  %109 = vmatprep.subr.mxu0 0.0
  %110 = vmatpush1.msra.mxu0 0.0
  %111 = vmatprep.subr.mxu0 0.0
  %112 = vmatpush1.msra.mxu0 0.0
  %113 = vmatprep.subr.mxu0 0.0
  %114 = vmatpush1.msra.mxu0 0.0
  %115 = vmatprep.subr.mxu0 0.0
  %116 = vmatpush1.msra.mxu0 0.0
  %117 = vmatprep.subr.mxu0 0.0
  %118 = vmatpush1.msra.mxu0 0.0
  %119 = vmatprep.subr.mxu0 0.0
  %120 = vmatpush1.msra.mxu0 0.0
  %121 = vmatprep.subr.mxu0 0.0
  %122 = vmatpush1.msra.mxu0 0.0
  %123 = vmatprep.subr.mxu0 0.0
  %124 = vmatpush1.msra.mxu0 0.0
  %125 = vmatprep.subr.mxu0 0.0
  %126 = vmatpush1.msra.mxu0 0.0
  %127 = vmatprep.subr.mxu0 0.0
  %128 = vmatpush1.msra.mxu0 0.0
  %129 = vmatprep.subr.mxu0 0.0
  %130 = vmatpush1.msra.mxu0 0.0
  %131 = vmatprep.subr.mxu0 0.0
  %132 = vmatpush1.msra.mxu0 0.0
  %133 = vmatprep.subr.mxu0 0.0
  %134 = vmatpush1.msra.mxu0 0.0
  %135 = vmatprep.subr.mxu0 0.0
  %136 = vmatpush1.msra.mxu0 0.0
  %137 = vmatprep.subr.mxu0 0.0
  %138 = vmatpush1.msra.mxu0 0.0
  %139 = vmatprep.subr.mxu0 0.0
  %140 = vmatpush1.msra.mxu0 0.0
  %141 = vmatprep.subr.mxu0 0.0
  %142 = vmatpush1.msra.mxu0 0.0
  %143 = vmatprep.mubr.f32.mxu0 0.0
  %144 = vmatmul.mubr.f32.gmra.mrb[0].mxu0 %v56
  %v145 = vpop.f32.mrb[0].mxu0
  %v146 = vadd.f32 %v52, %v145
  %v147 = vpop.f32.mrb[0].mxu0
  %148 = vmatprep.mubr.f32.mxu0 0.0
  %149 = vmatmul.mubr.f32.gmra.mrb[0].mxu0 %v59
  %v150 = vpop.f32.mrb[0].mxu0
  %v151 = vadd.f32 %v52, %v150
  %v152 = vpop.f32.mrb[0].mxu0
  %153 = vmatprep.mubr.f32.mxu0 0.0
  %154 = vmatmul.mubr.f32.gmra.mrb[0].mxu0 %v62
  %v155 = vpop.f32.mrb[0].mxu0
  %v156 = vadd.f32 %v52, %v155
  %v157 = vpop.f32.mrb[0].mxu0
  %158 = vmatprep.mubr.f32.mxu0 0.0
  %159 = vmatmul.mubr.f32.gmra.mrb[0].mxu0 %v65
  %v160 = vpop.f32.mrb[0].mxu0
  %v161 = vadd.f32 %v52, %v160
  %v162 = vpop.f32.mrb[0].mxu0
  %163 = vmatprep.mubr.f32.mxu0 0.0
  %164 = vmatmul.mubr.f32.gmra.mrb[0].mxu0 %v68
  %v165 = vpop.f32.mrb[0].mxu0
  %v166 = vadd.f32 %v52, %v165
  %v167 = vpop.f32.mrb[0].mxu0
  %168 = vmatprep.mubr.f32.mxu0 0.0
  %169 = vmatmul.mubr.f32.gmra.mrb[0].mxu0 %v71
  %v170 = vpop.f32.mrb[0].mxu0
  %v171 = vadd.f32 %v52, %v170
  %v172 = vpop.f32.mrb[0].mxu0
  %173 = vmatprep.mubr.f32.mxu0 0.0
  %174 = vmatmul.mubr.f32.gmra.mrb[0].mxu0 %v74
  %v175 = vpop.f32.mrb[0].mxu0
  %v176 = vadd.f32 %v52, %v175
  %v177 = vpop.f32.mrb[0].mxu0
  %178 = vmatprep.mubr.f32.mxu0 0.0
  %179 = vmatmul.mubr.f32.gmra.mrb[0].mxu0 %v77
  %v180 = vpop.f32.mrb[0].mxu0
  %v181 = vadd.f32 %v52, %v180
  %v182 = vpop.f32.mrb[0].mxu0
  %183 = vdwg.mxu0
  %184 = vst.msk [vmem:[%s9] sm:$0xff] %vm54, %v146
  %185 = vst.msk [vmem:[%s9 + $0x8] sm:$0xff] %vm54, %v151
  %186 = vst.msk [vmem:[%s9 + $0x10] sm:$0xff] %vm54, %v156
  %187 = vst.msk [vmem:[%s9 + $0x18] sm:$0xff] %vm54, %v161
  %188 = vst.msk [vmem:[%s9 + $0x20] sm:$0xff] %vm54, %v166
  %189 = vst.msk [vmem:[%s9 + $0x28] sm:$0xff] %vm54, %v171
  %190 = vst.msk [vmem:[%s9 + $0x30] sm:$0xff] %vm54, %v176
  %191 = vst.msk [vmem:[%s9 + $0x38] sm:$0xff] %vm54, %v181
  %v192 = vld [vmem:[%s1] sm:$0xff]
  %v193 = vld [vmem:[%s1 + $0x8] sm:$0xff]
  %v194 = vld [vmem:[%s1 + $0x10] sm:$0xff]
  %v195 = vld [vmem:[%s1 + $0x18] sm:$0xff]
  %v196 = vld [vmem:[%s1 + $0x20] sm:$0xff]
  %v197 = vld [vmem:[%s1 + $0x28] sm:$0xff]
  %v198 = vld [vmem:[%s1 + $0x30] sm:$0xff]
  %v199 = vld [vmem:[%s1 + $0x38] sm:$0xff]
  %v200 = vld [vmem:[%s4] sm:$0xff]
  %v201 = vld [vmem:[%s4 + $0x8] sm:$0xff]
  %v202 = vld [vmem:[%s4 + $0x10] sm:$0xff]
  %v203 = vld [vmem:[%s4 + $0x18] sm:$0xff]
  %v204 = vld [vmem:[%s7] sm:$0x1]
  %v206 = vlaneseq
  %v207 = vshrl.u32 %v206, 7
  %v208 = vsub.s32 0, %v207
  %v209 = vrot.slane %v204, %v208
  %v212 = vsel %vm54, %v192, 0
  %v215 = vsel %vm54, %v193, 0
  %v218 = vsel %vm54, %v194, 0
  %v221 = vsel %vm54, %v195, 0
  %v224 = vsel %vm54, %v196, 0
  %v227 = vsel %vm54, %v197, 0
  %v230 = vsel %vm54, %v198, 0
  %v233 = vsel %vm54, %v199, 0
  %235 = vmatprep.subr.mxu0 0.0
  %236 = vmatpush1.msra.mxu0 %v200
  %237 = vmatprep.subr.mxu0 0.0
  %238 = vmatpush1.msra.mxu0 %v201
  %239 = vmatprep.subr.mxu0 0.0
  %240 = vmatpush1.msra.mxu0 %v202
  %241 = vmatprep.subr.mxu0 0.0
  %242 = vmatpush1.msra.mxu0 %v203
  %243 = vmatprep.subr.mxu0 0.0
  %244 = vmatpush1.msra.mxu0 0.0
  %245 = vmatprep.subr.mxu0 0.0
  %246 = vmatpush1.msra.mxu0 0.0
  %247 = vmatprep.subr.mxu0 0.0
  %248 = vmatpush1.msra.mxu0 0.0
  %249 = vmatprep.subr.mxu0 0.0
  %250 = vmatpush1.msra.mxu0 0.0
  %251 = vmatprep.subr.mxu0 0.0
  %252 = vmatpush1.msra.mxu0 0.0
  %253 = vmatprep.subr.mxu0 0.0
  %254 = vmatpush1.msra.mxu0 0.0
  %255 = vmatprep.subr.mxu0 0.0
  %256 = vmatpush1.msra.mxu0 0.0
  %257 = vmatprep.subr.mxu0 0.0
  %258 = vmatpush1.msra.mxu0 0.0
  %259 = vmatprep.subr.mxu0 0.0
  %260 = vmatpush1.msra.mxu0 0.0
  %261 = vmatprep.subr.mxu0 0.0
  %262 = vmatpush1.msra.mxu0 0.0
  %263 = vmatprep.subr.mxu0 0.0
  %264 = vmatpush1.msra.mxu0 0.0
  %265 = vmatprep.subr.mxu0 0.0
  %266 = vmatpush1.msra.mxu0 0.0
  %267 = vmatprep.subr.mxu0 0.0
  %268 = vmatpush1.msra.mxu0 0.0
  %269 = vmatprep.subr.mxu0 0.0
  %270 = vmatpush1.msra.mxu0 0.0
  %271 = vmatprep.subr.mxu0 0.0
  %272 = vmatpush1.msra.mxu0 0.0
  %273 = vmatprep.subr.mxu0 0.0
  %274 = vmatpush1.msra.mxu0 0.0
  %275 = vmatprep.subr.mxu0 0.0
  %276 = vmatpush1.msra.mxu0 0.0
  %277 = vmatprep.subr.mxu0 0.0
  %278 = vmatpush1.msra.mxu0 0.0
  %279 = vmatprep.subr.mxu0 0.0
  %280 = vmatpush1.msra.mxu0 0.0
  %281 = vmatprep.subr.mxu0 0.0
  %282 = vmatpush1.msra.mxu0 0.0
  %283 = vmatprep.subr.mxu0 0.0
  %284 = vmatpush1.msra.mxu0 0.0
  %285 = vmatprep.subr.mxu0 0.0
  %286 = vmatpush1.msra.mxu0 0.0
  %287 = vmatprep.subr.mxu0 0.0
  %288 = vmatpush1.msra.mxu0 0.0
  %289 = vmatprep.subr.mxu0 0.0
  %290 = vmatpush1.msra.mxu0 0.0
  %291 = vmatprep.subr.mxu0 0.0
  %292 = vmatpush1.msra.mxu0 0.0
  %293 = vmatprep.subr.mxu0 0.0
  %294 = vmatpush1.msra.mxu0 0.0
  %295 = vmatprep.subr.mxu0 0.0
  %296 = vmatpush1.msra.mxu0 0.0
  %297 = vmatprep.subr.mxu0 0.0
  %298 = vmatpush1.msra.mxu0 0.0
  %299 = vmatprep.mubr.f32.mxu0 0.0
  %300 = vmatmul.mubr.f32.gmra.mrb[0].mxu0 %v212
  %v301 = vpop.f32.mrb[0].mxu0
  %v302 = vadd.f32 %v209, %v301
  %v303 = vpop.f32.mrb[0].mxu0
  %304 = vmatprep.mubr.f32.mxu0 0.0
  %305 = vmatmul.mubr.f32.gmra.mrb[0].mxu0 %v215
  %v306 = vpop.f32.mrb[0].mxu0
  %v307 = vadd.f32 %v209, %v306
  %v308 = vpop.f32.mrb[0].mxu0
  %309 = vmatprep.mubr.f32.mxu0 0.0
  %310 = vmatmul.mubr.f32.gmra.mrb[0].mxu0 %v218
  %v311 = vpop.f32.mrb[0].mxu0
  %v312 = vadd.f32 %v209, %v311
  %v313 = vpop.f32.mrb[0].mxu0
  %314 = vmatprep.mubr.f32.mxu0 0.0
  %315 = vmatmul.mubr.f32.gmra.mrb[0].mxu0 %v221
  %v316 = vpop.f32.mrb[0].mxu0
  %v317 = vadd.f32 %v209, %v316
  %v318 = vpop.f32.mrb[0].mxu0
  %319 = vmatprep.mubr.f32.mxu0 0.0
  %320 = vmatmul.mubr.f32.gmra.mrb[0].mxu0 %v224
  %v321 = vpop.f32.mrb[0].mxu0
  %v322 = vadd.f32 %v209, %v321
  %v323 = vpop.f32.mrb[0].mxu0
  %324 = vmatprep.mubr.f32.mxu0 0.0
  %325 = vmatmul.mubr.f32.gmra.mrb[0].mxu0 %v227
  %v326 = vpop.f32.mrb[0].mxu0
  %v327 = vadd.f32 %v209, %v326
  %v328 = vpop.f32.mrb[0].mxu0
  %329 = vmatprep.mubr.f32.mxu0 0.0
  %330 = vmatmul.mubr.f32.gmra.mrb[0].mxu0 %v230
  %v331 = vpop.f32.mrb[0].mxu0
  %v332 = vadd.f32 %v209, %v331
  %v333 = vpop.f32.mrb[0].mxu0
  %334 = vmatprep.mubr.f32.mxu0 0.0
  %335 = vmatmul.mubr.f32.gmra.mrb[0].mxu0 %v233
  %v336 = vpop.f32.mrb[0].mxu0
  %v337 = vadd.f32 %v209, %v336
  %v338 = vpop.f32.mrb[0].mxu0
  %339 = vdwg.mxu0
  %340 = vst.msk [vmem:[%s10] sm:$0xff] %vm54, %v302
  %341 = vst.msk [vmem:[%s10 + $0x8] sm:$0xff] %vm54, %v307
  %342 = vst.msk [vmem:[%s10 + $0x10] sm:$0xff] %vm54, %v312
  %343 = vst.msk [vmem:[%s10 + $0x18] sm:$0xff] %vm54, %v317
  %344 = vst.msk [vmem:[%s10 + $0x20] sm:$0xff] %vm54, %v322
  %345 = vst.msk [vmem:[%s10 + $0x28] sm:$0xff] %vm54, %v327
  %346 = vst.msk [vmem:[%s10 + $0x30] sm:$0xff] %vm54, %v332
  %347 = vst.msk [vmem:[%s10 + $0x38] sm:$0xff] %vm54, %v337
  %v348 = vld [vmem:[%s2] sm:$0xff]
  %v349 = vld [vmem:[%s2 + $0x8] sm:$0xff]
  %v350 = vld [vmem:[%s2 + $0x10] sm:$0xff]
  %v351 = vld [vmem:[%s2 + $0x18] sm:$0xff]
  %v352 = vld [vmem:[%s2 + $0x20] sm:$0xff]
  %v353 = vld [vmem:[%s2 + $0x28] sm:$0xff]
  %v354 = vld [vmem:[%s2 + $0x30] sm:$0xff]
  %v355 = vld [vmem:[%s2 + $0x38] sm:$0xff]
  %v356 = vld [vmem:[%s5] sm:$0xff]
  %v357 = vld [vmem:[%s5 + $0x8] sm:$0xff]
  %v358 = vld [vmem:[%s5 + $0x10] sm:$0xff]
  %v359 = vld [vmem:[%s5 + $0x18] sm:$0xff]
  %v360 = vld [vmem:[%s8] sm:$0x1]
  %v362 = vlaneseq
  %v363 = vshrl.u32 %v362, 7
  %v364 = vsub.s32 0, %v363
  %v365 = vrot.slane %v360, %v364
  %v368 = vsel %vm54, %v348, 0
  %v371 = vsel %vm54, %v349, 0
  %v374 = vsel %vm54, %v350, 0
  %v377 = vsel %vm54, %v351, 0
  %v380 = vsel %vm54, %v352, 0
  %v383 = vsel %vm54, %v353, 0
  %v386 = vsel %vm54, %v354, 0
  %v389 = vsel %vm54, %v355, 0
  %391 = vmatprep.subr.mxu0 0.0
  %392 = vmatpush1.msra.mxu0 %v356
  %393 = vmatprep.subr.mxu0 0.0
  %394 = vmatpush1.msra.mxu0 %v357
  %395 = vmatprep.subr.mxu0 0.0
  %396 = vmatpush1.msra.mxu0 %v358
  %397 = vmatprep.subr.mxu0 0.0
  %398 = vmatpush1.msra.mxu0 %v359
  %399 = vmatprep.subr.mxu0 0.0
  %400 = vmatpush1.msra.mxu0 0.0
  %401 = vmatprep.subr.mxu0 0.0
  %402 = vmatpush1.msra.mxu0 0.0
  %403 = vmatprep.subr.mxu0 0.0
  %404 = vmatpush1.msra.mxu0 0.0
  %405 = vmatprep.subr.mxu0 0.0
  %406 = vmatpush1.msra.mxu0 0.0
  %407 = vmatprep.subr.mxu0 0.0
  %408 = vmatpush1.msra.mxu0 0.0
  %409 = vmatprep.subr.mxu0 0.0
  %410 = vmatpush1.msra.mxu0 0.0
  %411 = vmatprep.subr.mxu0 0.0
  %412 = vmatpush1.msra.mxu0 0.0
  %413 = vmatprep.subr.mxu0 0.0
  %414 = vmatpush1.msra.mxu0 0.0
  %415 = vmatprep.subr.mxu0 0.0
  %416 = vmatpush1.msra.mxu0 0.0
  %417 = vmatprep.subr.mxu0 0.0
  %418 = vmatpush1.msra.mxu0 0.0
  %419 = vmatprep.subr.mxu0 0.0
  %420 = vmatpush1.msra.mxu0 0.0
  %421 = vmatprep.subr.mxu0 0.0
  %422 = vmatpush1.msra.mxu0 0.0
  %423 = vmatprep.subr.mxu0 0.0
  %424 = vmatpush1.msra.mxu0 0.0
  %425 = vmatprep.subr.mxu0 0.0
  %426 = vmatpush1.msra.mxu0 0.0
  %427 = vmatprep.subr.mxu0 0.0
  %428 = vmatpush1.msra.mxu0 0.0
  %429 = vmatprep.subr.mxu0 0.0
  %430 = vmatpush1.msra.mxu0 0.0
  %431 = vmatprep.subr.mxu0 0.0
  %432 = vmatpush1.msra.mxu0 0.0
  %433 = vmatprep.subr.mxu0 0.0
  %434 = vmatpush1.msra.mxu0 0.0
  %435 = vmatprep.subr.mxu0 0.0
  %436 = vmatpush1.msra.mxu0 0.0
  %437 = vmatprep.subr.mxu0 0.0
  %438 = vmatpush1.msra.mxu0 0.0
  %439 = vmatprep.subr.mxu0 0.0
  %440 = vmatpush1.msra.mxu0 0.0
  %441 = vmatprep.subr.mxu0 0.0
  %442 = vmatpush1.msra.mxu0 0.0
  %443 = vmatprep.subr.mxu0 0.0
  %444 = vmatpush1.msra.mxu0 0.0
  %445 = vmatprep.subr.mxu0 0.0
  %446 = vmatpush1.msra.mxu0 0.0
  %447 = vmatprep.subr.mxu0 0.0
  %448 = vmatpush1.msra.mxu0 0.0
  %449 = vmatprep.subr.mxu0 0.0
  %450 = vmatpush1.msra.mxu0 0.0
  %451 = vmatprep.subr.mxu0 0.0
  %452 = vmatpush1.msra.mxu0 0.0
  %453 = vmatprep.subr.mxu0 0.0
  %454 = vmatpush1.msra.mxu0 0.0
  %455 = vmatprep.mubr.f32.mxu0 0.0
  %456 = vmatmul.mubr.f32.gmra.mrb[0].mxu0 %v368
  %v457 = vpop.f32.mrb[0].mxu0
  %v458 = vadd.f32 %v365, %v457
  %v459 = vpop.f32.mrb[0].mxu0
  %460 = vmatprep.mubr.f32.mxu0 0.0
  %461 = vmatmul.mubr.f32.gmra.mrb[0].mxu0 %v371
  %v462 = vpop.f32.mrb[0].mxu0
  %v463 = vadd.f32 %v365, %v462
  %v464 = vpop.f32.mrb[0].mxu0
  %465 = vmatprep.mubr.f32.mxu0 0.0
  %466 = vmatmul.mubr.f32.gmra.mrb[0].mxu0 %v374
  %v467 = vpop.f32.mrb[0].mxu0
  %v468 = vadd.f32 %v365, %v467
  %v469 = vpop.f32.mrb[0].mxu0
  %470 = vmatprep.mubr.f32.mxu0 0.0
  %471 = vmatmul.mubr.f32.gmra.mrb[0].mxu0 %v377
  %v472 = vpop.f32.mrb[0].mxu0
  %v473 = vadd.f32 %v365, %v472
  %v474 = vpop.f32.mrb[0].mxu0
  %475 = vmatprep.mubr.f32.mxu0 0.0
  %476 = vmatmul.mubr.f32.gmra.mrb[0].mxu0 %v380
  %v477 = vpop.f32.mrb[0].mxu0
  %v478 = vadd.f32 %v365, %v477
  %v479 = vpop.f32.mrb[0].mxu0
  %480 = vmatprep.mubr.f32.mxu0 0.0
  %481 = vmatmul.mubr.f32.gmra.mrb[0].mxu0 %v383
  %v482 = vpop.f32.mrb[0].mxu0
  %v483 = vadd.f32 %v365, %v482
  %v484 = vpop.f32.mrb[0].mxu0
  %485 = vmatprep.mubr.f32.mxu0 0.0
  %486 = vmatmul.mubr.f32.gmra.mrb[0].mxu0 %v386
  %v487 = vpop.f32.mrb[0].mxu0
  %v488 = vadd.f32 %v365, %v487
  %v489 = vpop.f32.mrb[0].mxu0
  %490 = vmatprep.mubr.f32.mxu0 0.0
  %491 = vmatmul.mubr.f32.gmra.mrb[0].mxu0 %v389
  %v492 = vpop.f32.mrb[0].mxu0
  %v493 = vadd.f32 %v365, %v492
  %v494 = vpop.f32.mrb[0].mxu0
  %495 = vdwg.mxu0
  %496 = vst.msk [vmem:[%s11] sm:$0xff] %vm54, %v458
  %497 = vst.msk [vmem:[%s11 + $0x8] sm:$0xff] %vm54, %v463
  %498 = vst.msk [vmem:[%s11 + $0x10] sm:$0xff] %vm54, %v468
  %499 = vst.msk [vmem:[%s11 + $0x18] sm:$0xff] %vm54, %v473
  %500 = vst.msk [vmem:[%s11 + $0x20] sm:$0xff] %vm54, %v478
  %501 = vst.msk [vmem:[%s11 + $0x28] sm:$0xff] %vm54, %v483
  %502 = vst.msk [vmem:[%s11 + $0x30] sm:$0xff] %vm54, %v488
  %503 = vst.msk [vmem:[%s11 + $0x38] sm:$0xff] %vm54, %v493
  // Predicated region
  $region38: #{time_mha_forward.2} parent=0 // pred_check
    _
  $region39: #{time_mha_forward.2} parent=0 // pred_check_branch
    %505 = sbr.rel (0) target = $region41
  $region40: #{time_mha_forward.2} parent=0 // pred_region
    _
  $region41: #{time_mha_forward.2} parent=0 // pred_fallthru
    _
  // Predicated region
  $region42: #{time_mha_forward.2} parent=0 // pred_check
    _
  $region43: #{time_mha_forward.2} parent=0 // pred_check_branch
    %507 = sbr.rel (0) target = $region45
  $region44: #{time_mha_forward.2} parent=0 // pred_region
    _
  $region45: #{time_mha_forward.2} parent=0 // pred_fallthru
    _
  // Predicated region
  $region46: #{time_mha_forward.2} parent=0 // pred_check
    _
  $region47: #{time_mha_forward.2} parent=0 // pred_check_branch
    %509 = sbr.rel (0) target = $region49
  $region48: #{time_mha_forward.2} parent=0 // pred_region
    _
  $region49: #{time_mha_forward.2} parent=0 // pred_fallthru
    _
  // Predicated region
  $region50: #{time_mha_forward.2} parent=0 // pred_check
    _
  $region51: #{time_mha_forward.2} parent=0 // pred_check_branch
    %511 = sbr.rel (0) target = $region53
  $region52: #{time_mha_forward.2} parent=0 // pred_region
    _
  $region53: #{time_mha_forward.2} parent=0 // pred_fallthru
    _
  // Predicated region
  $region54: #{time_mha_forward.2} parent=0 // pred_check
    _
  $region55: #{time_mha_forward.2} parent=0 // pred_check_branch
    %513 = sbr.rel (0) target = $region57
  $region56: #{time_mha_forward.2} parent=0 // pred_region
    _
  $region57: #{time_mha_forward.2} parent=0 // pred_fallthru
    _
  // Predicated region
  $region58: #{time_mha_forward.2} parent=0 // pred_check
    _
  $region59: #{time_mha_forward.2} parent=0 // pred_check_branch
    %515 = sbr.rel (0) target = $region61
  $region60: #{time_mha_forward.2} parent=0 // pred_region
    _
  $region61: #{time_mha_forward.2} parent=0 // pred_fallthru
    _

// kernel: time_mha_forward.3
$region0: #{time_mha_forward.3}
  #allocation0 [shape = 'u32[]', space=smem, size = 0x4, offset = 0x4, fixed_abs, tag = 'smem constant byte address 0x4 - core index']
  #allocation1 [shape = 'u32[144,128]{1,0:T(1,128)}', space=vmem, size = 0x12000, scoped, tag = 'internal scratch']
  %s0 = inlined_call_operand.vmem [shape: f32[2,4,8,32], index: 0, kind: input, shape index: {}]
  %s1 = inlined_call_operand.vmem [shape: f32[2,4,8,32], index: 1, kind: input, shape index: {}, may-alias: {1,2}]
  %s2 = inlined_call_operand.vmem [shape: f32[2,4,8,32], index: 2, kind: input, shape index: {}, may-alias: {1,2}]
  %s3 = inlined_call_operand.vmem [shape: f32[2,4,8,32], index: 3, kind: input, shape index: {}, may-alias: {3,4}]
  %s4 = inlined_call_operand.vmem [shape: f32[2,4,8,32], index: 4, kind: input, shape index: {}, may-alias: {3,4}]
  %s5 = inlined_call_operand.vmem [shape: f32[2,4,8,2], index: 5, kind: input, shape index: {}]
  %s6 = inlined_call_operand.vmem [shape: f32[2,4,2,8], index: 6, kind: input, shape index: {}]
  %s7 = inlined_call_operand.vmem [shape: f32[2,4,2,8], index: 7, kind: input, shape index: {}]
  %s8 = inlined_call_operand.vmem [shape: f32[32,32], index: 8, kind: input, shape index: {}]
  %s9 = inlined_call_operand.vmem [shape: f32[1,32], index: 9, kind: input, shape index: {}]
  %s10 = inlined_call_operand.hbm [shape: f32[2,4,8,32], index: 10, kind: output, shape index: {0}]
  %s11 = inlined_call_operand.vmem [shape: f32[2,4,4,8,8], index: 11, kind: output, shape index: {1}]
  %12 = xla_tuple %s10, %s11
  %s13 = sld [smem:[#allocation0]]
  $region81: #{time_mha_forward.3} parent=0
    _
  %s15 = ssub.s32 1, %s13
  %s16 = scalar_select 0, %s15, %s13
  $region1: #{time_mha_forward.3} parent=0
    #allocation2 [shape = 'u8[8192]{0}', space=vmem, size = 0x2000, scoped, tag = 'output window, operand 0']
    #allocation3 [shape = 's32[2]{0}', space=sflag, size = 0x8, scoped, tag = 'scoped memory for time_mha_forward.3']
    %17 = vsyncpa [#allocation3], 0
    %s18 = scalar_lea.sflag [#allocation3], 1
    %19 = vsyncpa %s18, 0
    loop: start=0, step=1, limit=10
    $region2: #{time_mha_forward.3} parent=1 // loop_pre_header
      _
    $region3: #{time_mha_forward.3} parent=1 // loop_header
      %s21 = sphi 0, %s25
      %p22 = scmp.ge.s32.totalorder %s21, 10
      %s28 = sphi 0, %s40
      %s29 = sphi 0, %s36
      %s30 = sphi 0, %s28
      %s31 = sphi 0, %s29
      %s32 = sphi 0, %s30
      %s33 = sphi 0, %s31
      %s45 = sphi 0, %s47
      %s48 = sphi 0, %s45
      %s49 = sphi 0, %s48
      %s65 = sphi 0, %s49
      %s79 = sphi 0, %s81
      %s82 = sphi 0, %s79
      %s83 = sphi 0, %s82
      %s99 = sphi 0, %s83
      %s113 = sphi 0, %s115
      %s116 = sphi 0, %s113
      %s117 = sphi 0, %s116
      %s133 = sphi 0, %s117
      %s147 = sphi 0, %s149
      %s150 = sphi 0, %s147
      %s151 = sphi 0, %s150
      %s167 = sphi 0, %s151
      %s181 = sphi 0, %s183
      %s184 = sphi 0, %s181
      %s185 = sphi 0, %s184
      %s201 = sphi 0, %s185
      %s209 = sphi 0, %s211
      %s212 = sphi 0, %s209
      %s213 = sphi 0, %s212
      %s229 = sphi 0, %s213
      %s237 = sphi 0, %s239
      %s240 = sphi 0, %s237
      %s241 = sphi 0, %s240
      %s257 = sphi 0, %s241
      %s265 = sphi 0, %s267
      %s268 = sphi 0, %s265
      %s269 = sphi 0, %s268
      %s285 = sphi 0, %s269
      %s289 = sphi 0, %s289
      %s291 = sphi 0, %s289
      %s292 = sphi 0, %s291
      %s306 = sphi 0, %s292
      %s310 = sphi 0, %s310
      %s312 = sphi 0, %s310
      %s313 = sphi 0, %s312
      %s327 = sphi 0, %s313
      %s335 = sphi 0, %s337
      %s338 = sphi 0, %s335
      %s339 = sphi 0, %s338
      %s355 = sphi 0, %s339
      %s363 = sphi 0, %s365
      %s366 = sphi 0, %s363
      %s367 = sphi 0, %s366
      %s383 = sphi 0, %s367
    $region4: #{time_mha_forward.3} parent=1 // loop_header_branch
      %24 = sbr.rel (%p22) target = $region8
    $region5: #{time_mha_forward.3} parent=1 // loop_body
      %s26 = ssub.s32 %s21, 1
      %s27 = ssub.s32 %s21, 2
      %s34 = sadd.s32 1, %s29
      %p35 = scmp.ge.s32.totalorder %s34, 4
      %s36 = scalar_select %p35, 0, %s34
      %s37 = sadd.s32 1, %s28
      %s38 = scalar_select %p35, %s37, %s28
      %p39 = scmp.ge.s32.totalorder %s38, 2
      %s40 = scalar_select %p39, 0, %s38
      %s41 = ssub.s32 %s28, %s40
      %s42 = ssub.s32 %s29, %s36
      %s43 = sor.u32 %s41, %s42
      %p44 = scmp.eq.s32.totalorder %s43, 0
      %s46 = sadd.s32 %s45, 1
      %s47 = scalar_select %p44, %s45, %s46
      %p50 = pneg %p44
      %p51 = scmp.eq.s32.totalorder %s21, 7
      %p52 = por %p50, %p51
      %p53 = scmp.ne.s32.totalorder %s45, %s48
      %p54 = scmp.eq.s32.totalorder %s21, 0
      %p55 = por %p53, %p54
      %p56 = scmp.ne.s32.totalorder %s45, %s48
      %p57 = scmp.eq.s32.totalorder %s26, 7
      %p58 = por %p56, %p57
      %p59 = scmp.ne.s32.totalorder %s48, %s49
      %p60 = scmp.eq.s32.totalorder %s26, 0
      %p61 = por %p59, %p60
      %p62 = scmp.ne.s32.totalorder %s48, %s49
      %p63 = scmp.eq.s32.totalorder %s27, 7
      %p64 = por %p62, %p63
      %p66 = scmp.ne.s32.totalorder %s49, %s65
      %p67 = scmp.eq.s32.totalorder %s27, 0
      %p68 = por %p66, %p67
      %s69 = ssub.s32 %s29, 1
      %p70 = scmp.gt.s32.totalorder %s69, 0
      %s71 = scalar_select %p70, %s69, 0
      %s72 = ssub.s32 %s36, 1
      %p73 = scmp.gt.s32.totalorder %s72, 0
      %s74 = scalar_select %p73, %s72, 0
      %s75 = ssub.s32 %s28, %s40
      %s76 = ssub.s32 %s71, %s74
      %s77 = sor.u32 %s75, %s76
      %p78 = scmp.eq.s32.totalorder %s77, 0
      %s80 = sadd.s32 %s79, 1
      %s81 = scalar_select %p78, %s79, %s80
      %p84 = pneg %p78
      %p85 = scmp.eq.s32.totalorder %s21, 7
      %p86 = por %p84, %p85
      %p87 = scmp.ne.s32.totalorder %s79, %s82
      %p88 = scmp.eq.s32.totalorder %s21, 0
      %p89 = por %p87, %p88
      %p90 = scmp.ne.s32.totalorder %s79, %s82
      %p91 = scmp.eq.s32.totalorder %s26, 7
      %p92 = por %p90, %p91
      %p93 = scmp.ne.s32.totalorder %s82, %s83
      %p94 = scmp.eq.s32.totalorder %s26, 0
      %p95 = por %p93, %p94
      %p96 = scmp.ne.s32.totalorder %s82, %s83
      %p97 = scmp.eq.s32.totalorder %s27, 7
      %p98 = por %p96, %p97
      %p100 = scmp.ne.s32.totalorder %s83, %s99
      %p101 = scmp.eq.s32.totalorder %s27, 0
      %p102 = por %p100, %p101
      %s103 = sadd.s32 %s29, 1
      %p104 = scmp.lt.s32.totalorder %s103, 3
      %s105 = scalar_select %p104, %s103, 3
      %s106 = sadd.s32 %s36, 1
      %p107 = scmp.lt.s32.totalorder %s106, 3
      %s108 = scalar_select %p107, %s106, 3
      %s109 = ssub.s32 %s28, %s40
      %s110 = ssub.s32 %s105, %s108
      %s111 = sor.u32 %s109, %s110
      %p112 = scmp.eq.s32.totalorder %s111, 0
      %s114 = sadd.s32 %s113, 1
      %s115 = scalar_select %p112, %s113, %s114
      %p118 = pneg %p112
      %p119 = scmp.eq.s32.totalorder %s21, 7
      %p120 = por %p118, %p119
      %p121 = scmp.ne.s32.totalorder %s113, %s116
      %p122 = scmp.eq.s32.totalorder %s21, 0
      %p123 = por %p121, %p122
      %p124 = scmp.ne.s32.totalorder %s113, %s116
      %p125 = scmp.eq.s32.totalorder %s26, 7
      %p126 = por %p124, %p125
      %p127 = scmp.ne.s32.totalorder %s116, %s117
      %p128 = scmp.eq.s32.totalorder %s26, 0
      %p129 = por %p127, %p128
      %p130 = scmp.ne.s32.totalorder %s116, %s117
      %p131 = scmp.eq.s32.totalorder %s27, 7
      %p132 = por %p130, %p131
      %p134 = scmp.ne.s32.totalorder %s117, %s133
      %p135 = scmp.eq.s32.totalorder %s27, 0
      %p136 = por %p134, %p135
      %s137 = ssub.s32 %s29, 1
      %p138 = scmp.gt.s32.totalorder %s137, 0
      %s139 = scalar_select %p138, %s137, 0
      %s140 = ssub.s32 %s36, 1
      %p141 = scmp.gt.s32.totalorder %s140, 0
      %s142 = scalar_select %p141, %s140, 0
      %s143 = ssub.s32 %s28, %s40
      %s144 = ssub.s32 %s139, %s142
      %s145 = sor.u32 %s143, %s144
      %p146 = scmp.eq.s32.totalorder %s145, 0
      %s148 = sadd.s32 %s147, 1
      %s149 = scalar_select %p146, %s147, %s148
      %p152 = pneg %p146
      %p153 = scmp.eq.s32.totalorder %s21, 7
      %p154 = por %p152, %p153
      %p155 = scmp.ne.s32.totalorder %s147, %s150
      %p156 = scmp.eq.s32.totalorder %s21, 0
      %p157 = por %p155, %p156
      %p158 = scmp.ne.s32.totalorder %s147, %s150
      %p159 = scmp.eq.s32.totalorder %s26, 7
      %p160 = por %p158, %p159
      %p161 = scmp.ne.s32.totalorder %s150, %s151
      %p162 = scmp.eq.s32.totalorder %s26, 0
      %p163 = por %p161, %p162
      %p164 = scmp.ne.s32.totalorder %s150, %s151
      %p165 = scmp.eq.s32.totalorder %s27, 7
      %p166 = por %p164, %p165
      %p168 = scmp.ne.s32.totalorder %s151, %s167
      %p169 = scmp.eq.s32.totalorder %s27, 0
      %p170 = por %p168, %p169
      %s171 = sadd.s32 %s29, 1
      %p172 = scmp.lt.s32.totalorder %s171, 3
      %s173 = scalar_select %p172, %s171, 3
      %s174 = sadd.s32 %s36, 1
      %p175 = scmp.lt.s32.totalorder %s174, 3
      %s176 = scalar_select %p175, %s174, 3
      %s177 = ssub.s32 %s28, %s40
      %s178 = ssub.s32 %s173, %s176
      %s179 = sor.u32 %s177, %s178
      %p180 = scmp.eq.s32.totalorder %s179, 0
      %s182 = sadd.s32 %s181, 1
      %s183 = scalar_select %p180, %s181, %s182
      %p186 = pneg %p180
      %p187 = scmp.eq.s32.totalorder %s21, 7
      %p188 = por %p186, %p187
      %p189 = scmp.ne.s32.totalorder %s181, %s184
      %p190 = scmp.eq.s32.totalorder %s21, 0
      %p191 = por %p189, %p190
      %p192 = scmp.ne.s32.totalorder %s181, %s184
      %p193 = scmp.eq.s32.totalorder %s26, 7
      %p194 = por %p192, %p193
      %p195 = scmp.ne.s32.totalorder %s184, %s185
      %p196 = scmp.eq.s32.totalorder %s26, 0
      %p197 = por %p195, %p196
      %p198 = scmp.ne.s32.totalorder %s184, %s185
      %p199 = scmp.eq.s32.totalorder %s27, 7
      %p200 = por %p198, %p199
      %p202 = scmp.ne.s32.totalorder %s185, %s201
      %p203 = scmp.eq.s32.totalorder %s27, 0
      %p204 = por %p202, %p203
      %s205 = ssub.s32 %s28, %s40
      %s206 = ssub.s32 %s29, %s36
      %s207 = sor.u32 %s205, %s206
      %p208 = scmp.eq.s32.totalorder %s207, 0
      %s210 = sadd.s32 %s209, 1
      %s211 = scalar_select %p208, %s209, %s210
      %p214 = pneg %p208
      %p215 = scmp.eq.s32.totalorder %s21, 7
      %p216 = por %p214, %p215
      %p217 = scmp.ne.s32.totalorder %s209, %s212
      %p218 = scmp.eq.s32.totalorder %s21, 0
      %p219 = por %p217, %p218
      %p220 = scmp.ne.s32.totalorder %s209, %s212
      %p221 = scmp.eq.s32.totalorder %s26, 7
      %p222 = por %p220, %p221
      %p223 = scmp.ne.s32.totalorder %s212, %s213
      %p224 = scmp.eq.s32.totalorder %s26, 0
      %p225 = por %p223, %p224
      %p226 = scmp.ne.s32.totalorder %s212, %s213
      %p227 = scmp.eq.s32.totalorder %s27, 7
      %p228 = por %p226, %p227
      %p230 = scmp.ne.s32.totalorder %s213, %s229
      %p231 = scmp.eq.s32.totalorder %s27, 0
      %p232 = por %p230, %p231
      %s233 = ssub.s32 %s28, %s40
      %s234 = ssub.s32 %s29, %s36
      %s235 = sor.u32 %s233, %s234
      %p236 = scmp.eq.s32.totalorder %s235, 0
      %s238 = sadd.s32 %s237, 1
      %s239 = scalar_select %p236, %s237, %s238
      %p242 = pneg %p236
      %p243 = scmp.eq.s32.totalorder %s21, 7
      %p244 = por %p242, %p243
      %p245 = scmp.ne.s32.totalorder %s237, %s240
      %p246 = scmp.eq.s32.totalorder %s21, 0
      %p247 = por %p245, %p246
      %p248 = scmp.ne.s32.totalorder %s237, %s240
      %p249 = scmp.eq.s32.totalorder %s26, 7
      %p250 = por %p248, %p249
      %p251 = scmp.ne.s32.totalorder %s240, %s241
      %p252 = scmp.eq.s32.totalorder %s26, 0
      %p253 = por %p251, %p252
      %p254 = scmp.ne.s32.totalorder %s240, %s241
      %p255 = scmp.eq.s32.totalorder %s27, 7
      %p256 = por %p254, %p255
      %p258 = scmp.ne.s32.totalorder %s241, %s257
      %p259 = scmp.eq.s32.totalorder %s27, 0
      %p260 = por %p258, %p259
      %s261 = ssub.s32 %s28, %s40
      %s262 = ssub.s32 %s29, %s36
      %s263 = sor.u32 %s261, %s262
      %p264 = scmp.eq.s32.totalorder %s263, 0
      %s266 = sadd.s32 %s265, 1
      %s267 = scalar_select %p264, %s265, %s266
      %p270 = pneg %p264
      %p271 = scmp.eq.s32.totalorder %s21, 7
      %p272 = por %p270, %p271
      %p273 = scmp.ne.s32.totalorder %s265, %s268
      %p274 = scmp.eq.s32.totalorder %s21, 0
      %p275 = por %p273, %p274
      %p276 = scmp.ne.s32.totalorder %s265, %s268
      %p277 = scmp.eq.s32.totalorder %s26, 7
      %p278 = por %p276, %p277
      %p279 = scmp.ne.s32.totalorder %s268, %s269
      %p280 = scmp.eq.s32.totalorder %s26, 0
      %p281 = por %p279, %p280
      %p282 = scmp.ne.s32.totalorder %s268, %s269
      %p283 = scmp.eq.s32.totalorder %s27, 7
      %p284 = por %p282, %p283
      %p286 = scmp.ne.s32.totalorder %s269, %s285
      %p287 = scmp.eq.s32.totalorder %s27, 0
      %p288 = por %p286, %p287
      %s290 = sadd.s32 %s289, 1
      %p293 = scmp.eq.s32.totalorder %s21, 7
      %p294 = scmp.ne.s32.totalorder %s289, %s291
      %p295 = scmp.eq.s32.totalorder %s21, 0
      %p296 = por %p294, %p295
      %p297 = scmp.ne.s32.totalorder %s289, %s291
      %p298 = scmp.eq.s32.totalorder %s26, 7
      %p299 = por %p297, %p298
      %p300 = scmp.ne.s32.totalorder %s291, %s292
      %p301 = scmp.eq.s32.totalorder %s26, 0
      %p302 = por %p300, %p301
      %p303 = scmp.ne.s32.totalorder %s291, %s292
      %p304 = scmp.eq.s32.totalorder %s27, 7
      %p305 = por %p303, %p304
      %p307 = scmp.ne.s32.totalorder %s292, %s306
      %p308 = scmp.eq.s32.totalorder %s27, 0
      %p309 = por %p307, %p308
      %s311 = sadd.s32 %s310, 1
      %p314 = scmp.eq.s32.totalorder %s21, 7
      %p315 = scmp.ne.s32.totalorder %s310, %s312
      %p316 = scmp.eq.s32.totalorder %s21, 0
      %p317 = por %p315, %p316
      %p318 = scmp.ne.s32.totalorder %s310, %s312
      %p319 = scmp.eq.s32.totalorder %s26, 7
      %p320 = por %p318, %p319
      %p321 = scmp.ne.s32.totalorder %s312, %s313
      %p322 = scmp.eq.s32.totalorder %s26, 0
      %p323 = por %p321, %p322
      %p324 = scmp.ne.s32.totalorder %s312, %s313
      %p325 = scmp.eq.s32.totalorder %s27, 7
      %p326 = por %p324, %p325
      %p328 = scmp.ne.s32.totalorder %s313, %s327
      %p329 = scmp.eq.s32.totalorder %s27, 0
      %p330 = por %p328, %p329
      %s331 = ssub.s32 %s28, %s40
      %s332 = ssub.s32 %s29, %s36
      %s333 = sor.u32 %s331, %s332
      %p334 = scmp.eq.s32.totalorder %s333, 0
      %s336 = sadd.s32 %s335, 1
      %s337 = scalar_select %p334, %s335, %s336
      %p340 = pneg %p334
      %p341 = scmp.eq.s32.totalorder %s21, 7
      %p342 = por %p340, %p341
      %p343 = scmp.ne.s32.totalorder %s335, %s338
      %p344 = scmp.eq.s32.totalorder %s21, 0
      %p345 = por %p343, %p344
      %p346 = scmp.ne.s32.totalorder %s335, %s338
      %p347 = scmp.eq.s32.totalorder %s26, 7
      %p348 = por %p346, %p347
      %p349 = scmp.ne.s32.totalorder %s338, %s339
      %p350 = scmp.eq.s32.totalorder %s26, 0
      %p351 = por %p349, %p350
      %p352 = scmp.ne.s32.totalorder %s338, %s339
      %p353 = scmp.eq.s32.totalorder %s27, 7
      %p354 = por %p352, %p353
      %p356 = scmp.ne.s32.totalorder %s339, %s355
      %p357 = scmp.eq.s32.totalorder %s27, 0
      %p358 = por %p356, %p357
      %s359 = ssub.s32 %s28, %s40
      %s360 = ssub.s32 %s29, %s36
      %s361 = sor.u32 %s359, %s360
      %p362 = scmp.eq.s32.totalorder %s361, 0
      %s364 = sadd.s32 %s363, 1
      %s365 = scalar_select %p362, %s363, %s364
      %p368 = pneg %p362
      %p369 = scmp.eq.s32.totalorder %s21, 7
      %p370 = por %p368, %p369
      %p371 = scmp.ne.s32.totalorder %s363, %s366
      %p372 = scmp.eq.s32.totalorder %s21, 0
      %p373 = por %p371, %p372
      %p374 = scmp.ne.s32.totalorder %s363, %s366
      %p375 = scmp.eq.s32.totalorder %s26, 7
      %p376 = por %p374, %p375
      %p377 = scmp.ne.s32.totalorder %s366, %s367
      %p378 = scmp.eq.s32.totalorder %s26, 0
      %p379 = por %p377, %p378
      %p380 = scmp.ne.s32.totalorder %s366, %s367
      %p381 = scmp.eq.s32.totalorder %s27, 7
      %p382 = por %p380, %p381
      %p384 = scmp.ne.s32.totalorder %s367, %s383
      %p385 = scmp.eq.s32.totalorder %s27, 0
      %p386 = por %p384, %p385
      %p387 = scmp.le.s32.totalorder 1, %s21
      %p388 = scmp.lt.s32.totalorder %s21, 9
      %p389 = pnand %p387, %p388
      %p390 = pneg %p389
      // Predicated region
      $region9: #{time_mha_forward.3} parent=5 // pred_check
        _
      $region10: #{time_mha_forward.3} parent=5 // pred_check_branch
        %392 = sbr.rel (%p389) target = $region12
      $region11: #{time_mha_forward.3} parent=5 // pred_region
        %s393 = ssub.s32 %s21, 1
        // Predicated region
        $region13: #{time_mha_forward.3} parent=11 // pred_check
          %p394 = pneg %p302
        $region14: #{time_mha_forward.3} parent=11 // pred_check_branch
          %396 = sbr.rel (%p394) target = $region16
        $region15: #{time_mha_forward.3} parent=11 // pred_region
          _
        $region16: #{time_mha_forward.3} parent=11 // pred_fallthru
          _
        // Predicated region
        $region17: #{time_mha_forward.3} parent=11 // pred_check
          %p397 = pneg %p323
        $region18: #{time_mha_forward.3} parent=11 // pred_check_branch
          %399 = sbr.rel (%p397) target = $region20
        $region19: #{time_mha_forward.3} parent=11 // pred_region
          _
        $region20: #{time_mha_forward.3} parent=11 // pred_fallthru
          _
      $region12: #{time_mha_forward.3} parent=5 // pred_fallthru
        _
      %p400 = scmp.lt.s32.totalorder %s21, 8
      // Predicated region
      $region21: #{time_mha_forward.3} parent=5 // pred_check
        %p401 = pneg %p400
      $region22: #{time_mha_forward.3} parent=5 // pred_check_branch
        %403 = sbr.rel (%p401) target = $region24
      $region23: #{time_mha_forward.3} parent=5 // pred_region
        // Predicated region
        $region25: #{time_mha_forward.3} parent=23 // pred_check
          %p404 = pneg %p55
        $region26: #{time_mha_forward.3} parent=23 // pred_check_branch
          %406 = sbr.rel (%p404) target = $region28
        $region27: #{time_mha_forward.3} parent=23 // pred_region
          %p407 = scmp.lt.s32.totalorder %s28, 1
          %s408 = scalar_select %p407, %s28, 1
          %p409 = scmp.lt.s32.totalorder %s29, 3
          %s410 = scalar_select %p409, %s29, 3
          %s411 = smul.addr %s408, 4
          %s412 = sadd.s32 %s410, %s411
          %s413 = smul.addr %s412, 8
          %s414 = scalar_lea.vmem %s0, %s413
        $region28: #{time_mha_forward.3} parent=23 // pred_fallthru
          _
        // Predicated region
        $region29: #{time_mha_forward.3} parent=23 // pred_check
          %p415 = pneg %p89
        $region30: #{time_mha_forward.3} parent=23 // pred_check_branch
          %417 = sbr.rel (%p415) target = $region32
        $region31: #{time_mha_forward.3} parent=23 // pred_region
          %s418 = ssub.s32 %s29, 1
          %p419 = scmp.gt.s32.totalorder %s418, 0
          %s420 = scalar_select %p419, %s418, 0
          %p421 = scmp.lt.s32.totalorder %s28, 1
          %s422 = scalar_select %p421, %s28, 1
          %p423 = scmp.lt.s32.totalorder %s420, 3
          %s424 = scalar_select %p423, %s420, 3
          %s425 = smul.addr %s422, 4
          %s426 = sadd.s32 %s424, %s425
          %s427 = smul.addr %s426, 8
          %s428 = scalar_lea.vmem %s1, %s427
          %s429 = ssub.s32 %s29, 1
          %p430 = scmp.gt.s32.totalorder %s429, 0
          %s431 = scalar_select %p430, %s429, 0
        $region32: #{time_mha_forward.3} parent=23 // pred_fallthru
          _
        // Predicated region
        $region33: #{time_mha_forward.3} parent=23 // pred_check
          %p432 = pneg %p123
        $region34: #{time_mha_forward.3} parent=23 // pred_check_branch
          %434 = sbr.rel (%p432) target = $region36
        $region35: #{time_mha_forward.3} parent=23 // pred_region
          %s435 = sadd.s32 %s29, 1
          %p436 = scmp.lt.s32.totalorder %s435, 3
          %s437 = scalar_select %p436, %s435, 3
          %p438 = scmp.lt.s32.totalorder %s28, 1
          %s439 = scalar_select %p438, %s28, 1
          %p440 = scmp.lt.s32.totalorder %s437, 3
          %s441 = scalar_select %p440, %s437, 3
          %s442 = smul.addr %s439, 4
          %s443 = sadd.s32 %s441, %s442
          %s444 = smul.addr %s443, 8
          %s445 = scalar_lea.vmem %s2, %s444
          %s446 = sadd.s32 %s29, 1
          %p447 = scmp.lt.s32.totalorder %s446, 3
          %s448 = scalar_select %p447, %s446, 3
        $region36: #{time_mha_forward.3} parent=23 // pred_fallthru
          _
        // Predicated region
        $region37: #{time_mha_forward.3} parent=23 // pred_check
          %p449 = pneg %p157
        $region38: #{time_mha_forward.3} parent=23 // pred_check_branch
          %451 = sbr.rel (%p449) target = $region40
        $region39: #{time_mha_forward.3} parent=23 // pred_region
          %s452 = ssub.s32 %s29, 1
          %p453 = scmp.gt.s32.totalorder %s452, 0
          %s454 = scalar_select %p453, %s452, 0
          %p455 = scmp.lt.s32.totalorder %s28, 1
          %s456 = scalar_select %p455, %s28, 1
          %p457 = scmp.lt.s32.totalorder %s454, 3
          %s458 = scalar_select %p457, %s454, 3
          %s459 = smul.addr %s456, 4
          %s460 = sadd.s32 %s458, %s459
          %s461 = smul.addr %s460, 8
          %s462 = scalar_lea.vmem %s3, %s461
          %s463 = ssub.s32 %s29, 1
          %p464 = scmp.gt.s32.totalorder %s463, 0
          %s465 = scalar_select %p464, %s463, 0
        $region40: #{time_mha_forward.3} parent=23 // pred_fallthru
          _
        // Predicated region
        $region41: #{time_mha_forward.3} parent=23 // pred_check
          %p466 = pneg %p191
        $region42: #{time_mha_forward.3} parent=23 // pred_check_branch
          %468 = sbr.rel (%p466) target = $region44
        $region43: #{time_mha_forward.3} parent=23 // pred_region
          %s469 = sadd.s32 %s29, 1
          %p470 = scmp.lt.s32.totalorder %s469, 3
          %s471 = scalar_select %p470, %s469, 3
          %p472 = scmp.lt.s32.totalorder %s28, 1
          %s473 = scalar_select %p472, %s28, 1
          %p474 = scmp.lt.s32.totalorder %s471, 3
          %s475 = scalar_select %p474, %s471, 3
          %s476 = smul.addr %s473, 4
          %s477 = sadd.s32 %s475, %s476
          %s478 = smul.addr %s477, 8
          %s479 = scalar_lea.vmem %s4, %s478
          %s480 = sadd.s32 %s29, 1
          %p481 = scmp.lt.s32.totalorder %s480, 3
          %s482 = scalar_select %p481, %s480, 3
        $region44: #{time_mha_forward.3} parent=23 // pred_fallthru
          _
        // Predicated region
        $region45: #{time_mha_forward.3} parent=23 // pred_check
          %p483 = pneg %p219
        $region46: #{time_mha_forward.3} parent=23 // pred_check_branch
          %485 = sbr.rel (%p483) target = $region48
        $region47: #{time_mha_forward.3} parent=23 // pred_region
          %p486 = scmp.lt.s32.totalorder %s28, 1
          %s487 = scalar_select %p486, %s28, 1
          %p488 = scmp.lt.s32.totalorder %s29, 3
          %s489 = scalar_select %p488, %s29, 3
          %s490 = smul.addr %s487, 4
          %s491 = sadd.s32 %s489, %s490
          %s492 = smul.addr %s491, 8
          %s493 = scalar_lea.vmem %s5, %s492
        $region48: #{time_mha_forward.3} parent=23 // pred_fallthru
          _
        // Predicated region
        $region49: #{time_mha_forward.3} parent=23 // pred_check
          %p494 = pneg %p247
        $region50: #{time_mha_forward.3} parent=23 // pred_check_branch
          %496 = sbr.rel (%p494) target = $region52
        $region51: #{time_mha_forward.3} parent=23 // pred_region
          %p497 = scmp.lt.s32.totalorder %s28, 1
          %s498 = scalar_select %p497, %s28, 1
          %p499 = scmp.lt.s32.totalorder %s29, 3
          %s500 = scalar_select %p499, %s29, 3
          %s501 = smul.addr %s498, 4
          %s502 = sadd.s32 %s500, %s501
          %s503 = smul.addr %s502, 2
          %s504 = scalar_lea.vmem %s6, %s503
        $region52: #{time_mha_forward.3} parent=23 // pred_fallthru
          _
        // Predicated region
        $region53: #{time_mha_forward.3} parent=23 // pred_check
          %p505 = pneg %p275
        $region54: #{time_mha_forward.3} parent=23 // pred_check_branch
          %507 = sbr.rel (%p505) target = $region56
        $region55: #{time_mha_forward.3} parent=23 // pred_region
          %p508 = scmp.lt.s32.totalorder %s28, 1
          %s509 = scalar_select %p508, %s28, 1
          %p510 = scmp.lt.s32.totalorder %s29, 3
          %s511 = scalar_select %p510, %s29, 3
          %s512 = smul.addr %s509, 4
          %s513 = sadd.s32 %s511, %s512
          %s514 = smul.addr %s513, 2
          %s515 = scalar_lea.vmem %s7, %s514
        $region56: #{time_mha_forward.3} parent=23 // pred_fallthru
          _
      $region24: #{time_mha_forward.3} parent=5 // pred_fallthru
        _
      %p516 = scmp.le.s32.totalorder 1, %s21
      %p517 = scmp.lt.s32.totalorder %s21, 9
      %p518 = pnand %p516, %p517
      %p519 = pneg %p518
      // Predicated region
      $region57: #{time_mha_forward.3} parent=5 // pred_check
        _
      $region58: #{time_mha_forward.3} parent=5 // pred_check_branch
        %521 = sbr.rel (%p518) target = $region60
      $region59: #{time_mha_forward.3} parent=5 // pred_region
        %s522 = ssub.s32 %s21, 1
        %p523 = scmp.lt.s32.totalorder %s30, 1
        %s524 = scalar_select %p523, %s30, 1
        %p525 = scmp.lt.s32.totalorder %s31, 3
        %s526 = scalar_select %p525, %s31, 3
        %s527 = smul.addr %s524, 4
        %s528 = sadd.s32 %s526, %s527
        %s529 = smul.addr %s528, 8
        %s530 = scalar_lea.vmem %s0, %s529
        %p531 = pneg %p61
        %p532 = pneg %p58
        %s533 = ssub.s32 %s31, 1
        %p534 = scmp.gt.s32.totalorder %s533, 0
        %s535 = scalar_select %p534, %s533, 0
        %p536 = scmp.lt.s32.totalorder %s30, 1
        %s537 = scalar_select %p536, %s30, 1
        %p538 = scmp.lt.s32.totalorder %s535, 3
        %s539 = scalar_select %p538, %s535, 3
        %s540 = smul.addr %s537, 4
        %s541 = sadd.s32 %s539, %s540
        %s542 = smul.addr %s541, 8
        %s543 = scalar_lea.vmem %s1, %s542
        %p544 = pneg %p95
        %p545 = pneg %p92
        %s546 = sadd.s32 %s31, 1
        %p547 = scmp.lt.s32.totalorder %s546, 3
        %s548 = scalar_select %p547, %s546, 3
        %p549 = scmp.lt.s32.totalorder %s30, 1
        %s550 = scalar_select %p549, %s30, 1
        %p551 = scmp.lt.s32.totalorder %s548, 3
        %s552 = scalar_select %p551, %s548, 3
        %s553 = smul.addr %s550, 4
        %s554 = sadd.s32 %s552, %s553
        %s555 = smul.addr %s554, 8
        %s556 = scalar_lea.vmem %s2, %s555
        %p557 = pneg %p129
        %p558 = pneg %p126
        %s559 = ssub.s32 %s31, 1
        %p560 = scmp.gt.s32.totalorder %s559, 0
        %s561 = scalar_select %p560, %s559, 0
        %p562 = scmp.lt.s32.totalorder %s30, 1
        %s563 = scalar_select %p562, %s30, 1
        %p564 = scmp.lt.s32.totalorder %s561, 3
        %s565 = scalar_select %p564, %s561, 3
        %s566 = smul.addr %s563, 4
        %s567 = sadd.s32 %s565, %s566
        %s568 = smul.addr %s567, 8
        %s569 = scalar_lea.vmem %s3, %s568
        %p570 = pneg %p163
        %p571 = pneg %p160
        %s572 = sadd.s32 %s31, 1
        %p573 = scmp.lt.s32.totalorder %s572, 3
        %s574 = scalar_select %p573, %s572, 3
        %p575 = scmp.lt.s32.totalorder %s30, 1
        %s576 = scalar_select %p575, %s30, 1
        %p577 = scmp.lt.s32.totalorder %s574, 3
        %s578 = scalar_select %p577, %s574, 3
        %s579 = smul.addr %s576, 4
        %s580 = sadd.s32 %s578, %s579
        %s581 = smul.addr %s580, 8
        %s582 = scalar_lea.vmem %s4, %s581
        %p583 = pneg %p197
        %p584 = pneg %p194
        %p585 = scmp.lt.s32.totalorder %s30, 1
        %s586 = scalar_select %p585, %s30, 1
        %p587 = scmp.lt.s32.totalorder %s31, 3
        %s588 = scalar_select %p587, %s31, 3
        %s589 = smul.addr %s586, 4
        %s590 = sadd.s32 %s588, %s589
        %s591 = smul.addr %s590, 8
        %s592 = scalar_lea.vmem %s5, %s591
        %p593 = pneg %p225
        %p594 = pneg %p222
        %p595 = scmp.lt.s32.totalorder %s30, 1
        %s596 = scalar_select %p595, %s30, 1
        %p597 = scmp.lt.s32.totalorder %s31, 3
        %s598 = scalar_select %p597, %s31, 3
        %s599 = smul.addr %s596, 4
        %s600 = sadd.s32 %s598, %s599
        %s601 = smul.addr %s600, 2
        %s602 = scalar_lea.vmem %s6, %s601
        %p603 = pneg %p253
        %p604 = pneg %p250
        %p605 = scmp.lt.s32.totalorder %s30, 1
        %s606 = scalar_select %p605, %s30, 1
        %p607 = scmp.lt.s32.totalorder %s31, 3
        %s608 = scalar_select %p607, %s31, 3
        %s609 = smul.addr %s606, 4
        %s610 = sadd.s32 %s608, %s609
        %s611 = smul.addr %s610, 2
        %s612 = scalar_lea.vmem %s7, %s611
        %p613 = pneg %p281
        %p614 = pneg %p278
        %p615 = pneg %p302
        %p616 = pneg %p299
        %p617 = pneg %p323
        %p618 = pneg %p320
        %p619 = pneg %p351
        %p620 = pneg %p348
        %s621 = sand.u32 %s338, 1
        %s622 = scalar_lea.sflag [#allocation3], %s621
        %s623 = sand.u32 %s338, 1
        %s624 = smul.addr %s623, 8
        %s625 = scalar_lea.vmem [#allocation2], %s624
        %p626 = pneg %p379
        %p627 = pneg %p376
        %p628 = scmp.lt.s32.totalorder %s30, 1
        %s629 = scalar_select %p628, %s30, 1
        %p630 = scmp.lt.s32.totalorder %s31, 3
        %s631 = scalar_select %p630, %s31, 3
        %s632 = smul.addr %s631, 4
        %s633 = smul.addr %s629, 16
        %s634 = sadd.s32 %s632, %s633
        %s635 = smul.addr %s634, 8
        %s636 = scalar_lea.vmem %s11, %s635
        %p637 = scmp.lt.s32.totalorder %s30, 1
        %s638 = scalar_select %p637, %s30, 1
        %p639 = scmp.lt.s32.totalorder %s31, 3
        %s640 = scalar_select %p639, %s31, 3
        %s641 = smul.addr %s638, 4
        %s642 = sadd.s32 %s640, %s641
        %s643 = smul.addr %s642, 8
        %s644 = scalar_lea.vmem %s0, %s643
        %s645 = ssub.s32 %s31, 1
        %p646 = scmp.gt.s32.totalorder %s645, 0
        %s647 = scalar_select %p646, %s645, 0
        %p648 = scmp.lt.s32.totalorder %s30, 1
        %s649 = scalar_select %p648, %s30, 1
        %p650 = scmp.lt.s32.totalorder %s647, 3
        %s651 = scalar_select %p650, %s647, 3
        %s652 = smul.addr %s649, 4
        %s653 = sadd.s32 %s651, %s652
        %s654 = smul.addr %s653, 8
        %s655 = scalar_lea.vmem %s1, %s654
        %s656 = ssub.s32 %s31, 1
        %p657 = scmp.gt.s32.totalorder %s656, 0
        %s658 = scalar_select %p657, %s656, 0
        %s659 = sadd.s32 %s31, 1
        %p660 = scmp.lt.s32.totalorder %s659, 3
        %s661 = scalar_select %p660, %s659, 3
        %p662 = scmp.lt.s32.totalorder %s30, 1
        %s663 = scalar_select %p662, %s30, 1
        %p664 = scmp.lt.s32.totalorder %s661, 3
        %s665 = scalar_select %p664, %s661, 3
        %s666 = smul.addr %s663, 4
        %s667 = sadd.s32 %s665, %s666
        %s668 = smul.addr %s667, 8
        %s669 = scalar_lea.vmem %s2, %s668
        %s670 = sadd.s32 %s31, 1
        %p671 = scmp.lt.s32.totalorder %s670, 3
        %s672 = scalar_select %p671, %s670, 3
        %s673 = ssub.s32 %s31, 1
        %p674 = scmp.gt.s32.totalorder %s673, 0
        %s675 = scalar_select %p674, %s673, 0
        %p676 = scmp.lt.s32.totalorder %s30, 1
        %s677 = scalar_select %p676, %s30, 1
        %p678 = scmp.lt.s32.totalorder %s675, 3
        %s679 = scalar_select %p678, %s675, 3
        %s680 = smul.addr %s677, 4
        %s681 = sadd.s32 %s679, %s680
        %s682 = smul.addr %s681, 8
        %s683 = scalar_lea.vmem %s3, %s682
        %s684 = ssub.s32 %s31, 1
        %p685 = scmp.gt.s32.totalorder %s684, 0
        %s686 = scalar_select %p685, %s684, 0
        %s687 = sadd.s32 %s31, 1
        %p688 = scmp.lt.s32.totalorder %s687, 3
        %s689 = scalar_select %p688, %s687, 3
        %p690 = scmp.lt.s32.totalorder %s30, 1
        %s691 = scalar_select %p690, %s30, 1
        %p692 = scmp.lt.s32.totalorder %s689, 3
        %s693 = scalar_select %p692, %s689, 3
        %s694 = smul.addr %s691, 4
        %s695 = sadd.s32 %s693, %s694
        %s696 = smul.addr %s695, 8
        %s697 = scalar_lea.vmem %s4, %s696
        %s698 = sadd.s32 %s31, 1
        %p699 = scmp.lt.s32.totalorder %s698, 3
        %s700 = scalar_select %p699, %s698, 3
        %p701 = scmp.lt.s32.totalorder %s30, 1
        %s702 = scalar_select %p701, %s30, 1
        %p703 = scmp.lt.s32.totalorder %s31, 3
        %s704 = scalar_select %p703, %s31, 3
        %s705 = smul.addr %s702, 4
        %s706 = sadd.s32 %s704, %s705
        %s707 = smul.addr %s706, 8
        %s708 = scalar_lea.vmem %s5, %s707
        %p709 = scmp.lt.s32.totalorder %s30, 1
        %s710 = scalar_select %p709, %s30, 1
        %p711 = scmp.lt.s32.totalorder %s31, 3
        %s712 = scalar_select %p711, %s31, 3
        %s713 = smul.addr %s710, 4
        %s714 = sadd.s32 %s712, %s713
        %s715 = smul.addr %s714, 2
        %s716 = scalar_lea.vmem %s6, %s715
        %p717 = scmp.lt.s32.totalorder %s30, 1
        %s718 = scalar_select %p717, %s30, 1
        %p719 = scmp.lt.s32.totalorder %s31, 3
        %s720 = scalar_select %p719, %s31, 3
        %s721 = smul.addr %s718, 4
        %s722 = sadd.s32 %s720, %s721
        %s723 = smul.addr %s722, 2
        %s724 = scalar_lea.vmem %s7, %s723
        %p725 = scmp.lt.s32.totalorder %s30, 1
        %s726 = scalar_select %p725, %s30, 1
        %p727 = scmp.lt.s32.totalorder %s31, 3
        %s728 = scalar_select %p727, %s31, 3
        %s729 = smul.addr %s728, 4
        %s730 = smul.addr %s726, 16
        %s731 = sadd.s32 %s729, %s730
        %s732 = smul.addr %s731, 8
        %s733 = scalar_lea.vmem %s11, %s732
        %v734 = vld [vmem:[%s708] sm:$0xff]
        %v735 = vld [vmem:[%s716] sm:$0x1]
        %737 = vset.pattern.permute.xlu0 0
        %738 = vperm.xlu0 %737, %v734
        %v739 = vpop.permute.xlu0 %738
        %v741 = vlaneseq
        %v742 = vshrl.u32 %v741, 7
        %v743 = vsub.s32 0, %v742
        %v744 = vrot.slane %v735, %v743
        %v745 = vsub.f32 %v739, %v744
        %v746 = vmul.f32 %v745, %v745
        %v747 = vadd.f32 %v746, 0.0
        %v748 = vld [vmem:[%s716 + $0x1] sm:$0x1]
        %749 = vset.pattern.permute.xlu0 1
        %750 = vperm.xlu0 %749, %v734
        %v751 = vpop.permute.xlu0 %750
        %v753 = vlaneseq
        %v754 = vshrl.u32 %v753, 7
        %v755 = vsub.s32 0, %v754
        %v756 = vrot.slane %v748, %v755
        %v757 = vsub.f32 %v751, %v756
        %v758 = vmul.f32 %v757, %v757
        %v759 = vadd.f32 %v747, %v758
        %vm760 = vcmp.lt.f32.partialorder %v759, 625.0
        %v761 = vsel %vm760, 1, 0
        %v762 = vcvt.s32.f32 %v761
        %v763 = vld [vmem:[%s724] sm:$0x1]
        %v764 = vlaneseq
        %v765 = vshrl.u32 %v764, 7
        %v766 = vsub.s32 0, %v765
        %v767 = vrot.slane %v763, %v766
        %v768 = vsub.f32 %v739, %v767
        %v769 = vmul.f32 %v768, %v768
        %v770 = vadd.f32 %v769, 0.0
        %v771 = vld [vmem:[%s724 + $0x1] sm:$0x1]
        %v772 = vlaneseq
        %v773 = vshrl.u32 %v772, 7
        %v774 = vsub.s32 0, %v773
        %v775 = vrot.slane %v771, %v774
        %v776 = vsub.f32 %v751, %v775
        %v777 = vmul.f32 %v776, %v776
        %v778 = vadd.f32 %v770, %v777
        %vm779 = vcmp.lt.f32.partialorder %v778, 625.0
        %v780 = vsel %vm779, 1, 0
        %v781 = vcvt.s32.f32 %v780
        %v782 = vld [vmem:[%s644] sm:$0xff]
        %v783 = vld [vmem:[%s655] sm:$0xff]
        %v784 = vld [vmem:[%s669] sm:$0xff]
        %v785 = vld [vmem:[%s683] sm:$0xff]
        %v786 = vld [vmem:[%s697] sm:$0xff]
        %v787 = vld [vmem:[%s8] sm:$0xff]
        %v788 = vld [vmem:[%s8 + $0x8] sm:$0xff]
        %v789 = vld [vmem:[%s8 + $0x10] sm:$0xff]
        %v790 = vld [vmem:[%s8 + $0x18] sm:$0xff]
        %vm791 = vcmask 64512
        %v793 = vsel %vm791, %v782, 0
        %v796 = vsel %vm791, %v783, 0
        %798 = vmatprep.subr.mxu0 0.0
        %799 = vmatpush1.xpose.msra.mxu0 %v796
        %800 = vmatprep.subr.mxu0 0.0
        %801 = vmatpush1.xpose.msra.mxu0 0.0
        %802 = vmatprep.subr.mxu0 0.0
        %803 = vmatpush1.xpose.msra.mxu0 0.0
        %804 = vmatprep.subr.mxu0 0.0
        %805 = vmatpush1.xpose.msra.mxu0 0.0
        %806 = vmatprep.subr.mxu0 0.0
        %807 = vmatpush1.xpose.msra.mxu0 0.0
        %808 = vmatprep.subr.mxu0 0.0
        %809 = vmatpush1.xpose.msra.mxu0 0.0
        %810 = vmatprep.subr.mxu0 0.0
        %811 = vmatpush1.xpose.msra.mxu0 0.0
        %812 = vmatprep.subr.mxu0 0.0
        %813 = vmatpush1.xpose.msra.mxu0 0.0
        %814 = vmatprep.subr.mxu0 0.0
        %815 = vmatpush1.xpose.msra.mxu0 0.0
        %816 = vmatprep.subr.mxu0 0.0
        %817 = vmatpush1.xpose.msra.mxu0 0.0
        %818 = vmatprep.subr.mxu0 0.0
        %819 = vmatpush1.xpose.msra.mxu0 0.0
        %820 = vmatprep.subr.mxu0 0.0
        %821 = vmatpush1.xpose.msra.mxu0 0.0
        %822 = vmatprep.subr.mxu0 0.0
        %823 = vmatpush1.xpose.msra.mxu0 0.0
        %824 = vmatprep.subr.mxu0 0.0
        %825 = vmatpush1.xpose.msra.mxu0 0.0
        %826 = vmatprep.subr.mxu0 0.0
        %827 = vmatpush1.xpose.msra.mxu0 0.0
        %828 = vmatprep.subr.mxu0 0.0
        %829 = vmatpush1.xpose.msra.mxu0 0.0
        %830 = vmatprep.subr.mxu0 0.0
        %831 = vmatpush1.xpose.msra.mxu0 0.0
        %832 = vmatprep.subr.mxu0 0.0
        %833 = vmatpush1.xpose.msra.mxu0 0.0
        %834 = vmatprep.subr.mxu0 0.0
        %835 = vmatpush1.xpose.msra.mxu0 0.0
        %836 = vmatprep.subr.mxu0 0.0
        %837 = vmatpush1.xpose.msra.mxu0 0.0
        %838 = vmatprep.subr.mxu0 0.0
        %839 = vmatpush1.xpose.msra.mxu0 0.0
        %840 = vmatprep.subr.mxu0 0.0
        %841 = vmatpush1.xpose.msra.mxu0 0.0
        %842 = vmatprep.subr.mxu0 0.0
        %843 = vmatpush1.xpose.msra.mxu0 0.0
        %844 = vmatprep.subr.mxu0 0.0
        %845 = vmatpush1.xpose.msra.mxu0 0.0
        %846 = vmatprep.subr.mxu0 0.0
        %847 = vmatpush1.xpose.msra.mxu0 0.0
        %848 = vmatprep.subr.mxu0 0.0
        %849 = vmatpush1.xpose.msra.mxu0 0.0
        %850 = vmatprep.subr.mxu0 0.0
        %851 = vmatpush1.xpose.msra.mxu0 0.0
        %852 = vmatprep.subr.mxu0 0.0
        %853 = vmatpush1.xpose.msra.mxu0 0.0
        %854 = vmatprep.subr.mxu0 0.0
        %855 = vmatpush1.xpose.msra.mxu0 0.0
        %856 = vmatprep.subr.mxu0 0.0
        %857 = vmatpush1.xpose.msra.mxu0 0.0
        %858 = vmatprep.subr.mxu0 0.0
        %859 = vmatpush1.xpose.msra.mxu0 0.0
        %860 = vmatprep.subr.mxu0 0.0
        %861 = vmatpush1.xpose.msra.mxu0 0.0
        %862 = vmatprep.mubr.f32.mxu0 0.0
        %863 = vmatmul.mubr.f32.gmra.mrb[0].mxu0 %v793
        %v864 = vpop.f32.mrb[0].mxu0
        %v865 = vadd.f32 0.0, %v864
        %v866 = vpop.f32.mrb[0].mxu0
        %867 = vdwg.mxu0
        %v868 = vmul.f32 %v865, 0.35355338
        %v869 = vmul.f32 %v868, %v762
        %v870 = vsel %vm791, %v869, -inf
        %871 = vmax.xlane.f32.xlu0 %v870
        %v872 = vpop.xlane.xlu0 %871
        %v873 = vsub.f32 %v869, %v872
        %v874 = vmul.f32 %v873, 1.442695
        %v875 = vpow.pop %v874
        %v876 = vsel %vm791, %v875, 0.0
        %877 = vadd.xlane.f32.xlu0 %v876
        %v878 = vpop.xlane.xlu0 %877
        %v879 = vrcp.pop %v878
        %v880 = vmul.f32 %v875, %v879
        %v882 = vsel %vm791, %v784, 0
        %884 = vmatprep.subr.mxu0 0.0
        %885 = vmatpush1.xpose.msra.mxu0 %v882
        %886 = vmatprep.subr.mxu0 0.0
        %887 = vmatpush1.xpose.msra.mxu0 0.0
        %888 = vmatprep.subr.mxu0 0.0
        %889 = vmatpush1.xpose.msra.mxu0 0.0
        %890 = vmatprep.subr.mxu0 0.0
        %891 = vmatpush1.xpose.msra.mxu0 0.0
        %892 = vmatprep.subr.mxu0 0.0
        %893 = vmatpush1.xpose.msra.mxu0 0.0
        %894 = vmatprep.subr.mxu0 0.0
        %895 = vmatpush1.xpose.msra.mxu0 0.0
        %896 = vmatprep.subr.mxu0 0.0
        %897 = vmatpush1.xpose.msra.mxu0 0.0
        %898 = vmatprep.subr.mxu0 0.0
        %899 = vmatpush1.xpose.msra.mxu0 0.0
        %900 = vmatprep.subr.mxu0 0.0
        %901 = vmatpush1.xpose.msra.mxu0 0.0
        %902 = vmatprep.subr.mxu0 0.0
        %903 = vmatpush1.xpose.msra.mxu0 0.0
        %904 = vmatprep.subr.mxu0 0.0
        %905 = vmatpush1.xpose.msra.mxu0 0.0
        %906 = vmatprep.subr.mxu0 0.0
        %907 = vmatpush1.xpose.msra.mxu0 0.0
        %908 = vmatprep.subr.mxu0 0.0
        %909 = vmatpush1.xpose.msra.mxu0 0.0
        %910 = vmatprep.subr.mxu0 0.0
        %911 = vmatpush1.xpose.msra.mxu0 0.0
        %912 = vmatprep.subr.mxu0 0.0
        %913 = vmatpush1.xpose.msra.mxu0 0.0
        %914 = vmatprep.subr.mxu0 0.0
        %915 = vmatpush1.xpose.msra.mxu0 0.0
        %916 = vmatprep.subr.mxu0 0.0
        %917 = vmatpush1.xpose.msra.mxu0 0.0
        %918 = vmatprep.subr.mxu0 0.0
        %919 = vmatpush1.xpose.msra.mxu0 0.0
        %920 = vmatprep.subr.mxu0 0.0
        %921 = vmatpush1.xpose.msra.mxu0 0.0
        %922 = vmatprep.subr.mxu0 0.0
        %923 = vmatpush1.xpose.msra.mxu0 0.0
        %924 = vmatprep.subr.mxu0 0.0
        %925 = vmatpush1.xpose.msra.mxu0 0.0
        %926 = vmatprep.subr.mxu0 0.0
        %927 = vmatpush1.xpose.msra.mxu0 0.0
        %928 = vmatprep.subr.mxu0 0.0
        %929 = vmatpush1.xpose.msra.mxu0 0.0
        %930 = vmatprep.subr.mxu0 0.0
        %931 = vmatpush1.xpose.msra.mxu0 0.0
        %932 = vmatprep.subr.mxu0 0.0
        %933 = vmatpush1.xpose.msra.mxu0 0.0
        %934 = vmatprep.subr.mxu0 0.0
        %935 = vmatpush1.xpose.msra.mxu0 0.0
        %936 = vmatprep.subr.mxu0 0.0
        %937 = vmatpush1.xpose.msra.mxu0 0.0
        %938 = vmatprep.subr.mxu0 0.0
        %939 = vmatpush1.xpose.msra.mxu0 0.0
        %940 = vmatprep.subr.mxu0 0.0
        %941 = vmatpush1.xpose.msra.mxu0 0.0
        %942 = vmatprep.subr.mxu0 0.0
        %943 = vmatpush1.xpose.msra.mxu0 0.0
        %944 = vmatprep.subr.mxu0 0.0
        %945 = vmatpush1.xpose.msra.mxu0 0.0
        %946 = vmatprep.subr.mxu0 0.0
        %947 = vmatpush1.xpose.msra.mxu0 0.0
        %948 = vmatprep.mubr.f32.mxu0 0.0
        %949 = vmatmul.mubr.f32.gmra.mrb[0].mxu0 %v793
        %v950 = vpop.f32.mrb[0].mxu0
        %v951 = vadd.f32 0.0, %v950
        %v952 = vpop.f32.mrb[0].mxu0
        %953 = vdwg.mxu0
        %v954 = vmul.f32 %v951, 0.35355338
        %v955 = vmul.f32 %v954, %v781
        %v956 = vsel %vm791, %v955, -inf
        %957 = vmax.xlane.f32.xlu0 %v956
        %v958 = vpop.xlane.xlu0 %957
        %v959 = vsub.f32 %v955, %v958
        %v960 = vmul.f32 %v959, 1.442695
        %v961 = vpow.pop %v960
        %v962 = vsel %vm791, %v961, 0.0
        %963 = vadd.xlane.f32.xlu0 %v962
        %v964 = vpop.xlane.xlu0 %963
        %v965 = vrcp.pop %v964
        %v966 = vmul.f32 %v961, %v965
        %v968 = vsel %vm791, %v966, 0
        %970 = vmatprep.subr.mxu0 0.0
        %971 = vmatpush1.msra.mxu0 %v786
        %972 = vmatprep.subr.mxu0 0.0
        %973 = vmatpush1.msra.mxu0 0.0
        %974 = vmatprep.subr.mxu0 0.0
        %975 = vmatpush1.msra.mxu0 0.0
        %976 = vmatprep.subr.mxu0 0.0
        %977 = vmatpush1.msra.mxu0 0.0
        %978 = vmatprep.subr.mxu0 0.0
        %979 = vmatpush1.msra.mxu0 0.0
        %980 = vmatprep.subr.mxu0 0.0
        %981 = vmatpush1.msra.mxu0 0.0
        %982 = vmatprep.subr.mxu0 0.0
        %983 = vmatpush1.msra.mxu0 0.0
        %984 = vmatprep.subr.mxu0 0.0
        %985 = vmatpush1.msra.mxu0 0.0
        %986 = vmatprep.subr.mxu0 0.0
        %987 = vmatpush1.msra.mxu0 0.0
        %988 = vmatprep.subr.mxu0 0.0
        %989 = vmatpush1.msra.mxu0 0.0
        %990 = vmatprep.subr.mxu0 0.0
        %991 = vmatpush1.msra.mxu0 0.0
        %992 = vmatprep.subr.mxu0 0.0
        %993 = vmatpush1.msra.mxu0 0.0
        %994 = vmatprep.subr.mxu0 0.0
        %995 = vmatpush1.msra.mxu0 0.0
        %996 = vmatprep.subr.mxu0 0.0
        %997 = vmatpush1.msra.mxu0 0.0
        %998 = vmatprep.subr.mxu0 0.0
        %999 = vmatpush1.msra.mxu0 0.0
        %1000 = vmatprep.subr.mxu0 0.0
        %1001 = vmatpush1.msra.mxu0 0.0
        %1002 = vmatprep.subr.mxu0 0.0
        %1003 = vmatpush1.msra.mxu0 0.0
        %1004 = vmatprep.subr.mxu0 0.0
        %1005 = vmatpush1.msra.mxu0 0.0
        %1006 = vmatprep.subr.mxu0 0.0
        %1007 = vmatpush1.msra.mxu0 0.0
        %1008 = vmatprep.subr.mxu0 0.0
        %1009 = vmatpush1.msra.mxu0 0.0
        %1010 = vmatprep.subr.mxu0 0.0
        %1011 = vmatpush1.msra.mxu0 0.0
        %1012 = vmatprep.subr.mxu0 0.0
        %1013 = vmatpush1.msra.mxu0 0.0
        %1014 = vmatprep.subr.mxu0 0.0
        %1015 = vmatpush1.msra.mxu0 0.0
        %1016 = vmatprep.subr.mxu0 0.0
        %1017 = vmatpush1.msra.mxu0 0.0
        %1018 = vmatprep.subr.mxu0 0.0
        %1019 = vmatpush1.msra.mxu0 0.0
        %1020 = vmatprep.subr.mxu0 0.0
        %1021 = vmatpush1.msra.mxu0 0.0
        %1022 = vmatprep.subr.mxu0 0.0
        %1023 = vmatpush1.msra.mxu0 0.0
        %1024 = vmatprep.subr.mxu0 0.0
        %1025 = vmatpush1.msra.mxu0 0.0
        %1026 = vmatprep.subr.mxu0 0.0
        %1027 = vmatpush1.msra.mxu0 0.0
        %1028 = vmatprep.subr.mxu0 0.0
        %1029 = vmatpush1.msra.mxu0 0.0
        %1030 = vmatprep.subr.mxu0 0.0
        %1031 = vmatpush1.msra.mxu0 0.0
        %1032 = vmatprep.subr.mxu0 0.0
        %1033 = vmatpush1.msra.mxu0 0.0
        %1034 = vmatprep.mubr.f32.mxu0 0.0
        %1035 = vmatmul.mubr.f32.gmra.mrb[0].mxu0 %v968
        %v1036 = vpop.f32.mrb[0].mxu0
        %v1037 = vadd.f32 0.0, %v1036
        %v1038 = vpop.f32.mrb[0].mxu0
        %1039 = vdwg.mxu0
        %1040 = vst.msk [vmem:[%s733] sm:$0xff] %vm791, %v966
        %v1042 = vsel %vm791, %v880, 0
        %1044 = vmatprep.subr.mxu0 0.0
        %1045 = vmatpush1.msra.mxu0 %v785
        %1046 = vmatprep.subr.mxu0 0.0
        %1047 = vmatpush1.msra.mxu0 0.0
        %1048 = vmatprep.subr.mxu0 0.0
        %1049 = vmatpush1.msra.mxu0 0.0
        %1050 = vmatprep.subr.mxu0 0.0
        %1051 = vmatpush1.msra.mxu0 0.0
        %1052 = vmatprep.subr.mxu0 0.0
        %1053 = vmatpush1.msra.mxu0 0.0
        %1054 = vmatprep.subr.mxu0 0.0
        %1055 = vmatpush1.msra.mxu0 0.0
        %1056 = vmatprep.subr.mxu0 0.0
        %1057 = vmatpush1.msra.mxu0 0.0
        %1058 = vmatprep.subr.mxu0 0.0
        %1059 = vmatpush1.msra.mxu0 0.0
        %1060 = vmatprep.subr.mxu0 0.0
        %1061 = vmatpush1.msra.mxu0 0.0
        %1062 = vmatprep.subr.mxu0 0.0
        %1063 = vmatpush1.msra.mxu0 0.0
        %1064 = vmatprep.subr.mxu0 0.0
        %1065 = vmatpush1.msra.mxu0 0.0
        %1066 = vmatprep.subr.mxu0 0.0
        %1067 = vmatpush1.msra.mxu0 0.0
        %1068 = vmatprep.subr.mxu0 0.0
        %1069 = vmatpush1.msra.mxu0 0.0
        %1070 = vmatprep.subr.mxu0 0.0
        %1071 = vmatpush1.msra.mxu0 0.0
        %1072 = vmatprep.subr.mxu0 0.0
        %1073 = vmatpush1.msra.mxu0 0.0
        %1074 = vmatprep.subr.mxu0 0.0
        %1075 = vmatpush1.msra.mxu0 0.0
        %1076 = vmatprep.subr.mxu0 0.0
        %1077 = vmatpush1.msra.mxu0 0.0
        %1078 = vmatprep.subr.mxu0 0.0
        %1079 = vmatpush1.msra.mxu0 0.0
        %1080 = vmatprep.subr.mxu0 0.0
        %1081 = vmatpush1.msra.mxu0 0.0
        %1082 = vmatprep.subr.mxu0 0.0
        %1083 = vmatpush1.msra.mxu0 0.0
        %1084 = vmatprep.subr.mxu0 0.0
        %1085 = vmatpush1.msra.mxu0 0.0
        %1086 = vmatprep.subr.mxu0 0.0
        %1087 = vmatpush1.msra.mxu0 0.0
        %1088 = vmatprep.subr.mxu0 0.0
        %1089 = vmatpush1.msra.mxu0 0.0
        %1090 = vmatprep.subr.mxu0 0.0
        %1091 = vmatpush1.msra.mxu0 0.0
        %1092 = vmatprep.subr.mxu0 0.0
        %1093 = vmatpush1.msra.mxu0 0.0
        %1094 = vmatprep.subr.mxu0 0.0
        %1095 = vmatpush1.msra.mxu0 0.0
        %1096 = vmatprep.subr.mxu0 0.0
        %1097 = vmatpush1.msra.mxu0 0.0
        %1098 = vmatprep.subr.mxu0 0.0
        %1099 = vmatpush1.msra.mxu0 0.0
        %1100 = vmatprep.subr.mxu0 0.0
        %1101 = vmatpush1.msra.mxu0 0.0
        %1102 = vmatprep.subr.mxu0 0.0
        %1103 = vmatpush1.msra.mxu0 0.0
        %1104 = vmatprep.subr.mxu0 0.0
        %1105 = vmatpush1.msra.mxu0 0.0
        %1106 = vmatprep.subr.mxu0 0.0
        %1107 = vmatpush1.msra.mxu0 0.0
        %1108 = vmatprep.mubr.f32.mxu0 0.0
        %1109 = vmatmul.mubr.f32.gmra.mrb[0].mxu0 %v1042
        %v1110 = vpop.f32.mrb[0].mxu0
        %v1111 = vadd.f32 %v1037, %v1110
        %v1112 = vpop.f32.mrb[0].mxu0
        %1113 = vdwg.mxu0
        %v1114 = vmul.f32 %v1111, 0.5
        %1115 = vrot.lane.b32.xlu0 %v782, 120
        %v1116 = vpop.permute.xlu0 %1115
        %1117 = vrot.lane.b32.xlu0 %v783, 120
        %v1118 = vpop.permute.xlu0 %1117
        %v1119 = vsel %vm791, %v1116, 0
        %v1121 = vsel %vm791, %v1118, 0
        %1123 = vmatprep.subr.mxu0 0.0
        %1124 = vmatpush1.xpose.msra.mxu0 %v1121
        %1125 = vmatprep.subr.mxu0 0.0
        %1126 = vmatpush1.xpose.msra.mxu0 0.0
        %1127 = vmatprep.subr.mxu0 0.0
        %1128 = vmatpush1.xpose.msra.mxu0 0.0
        %1129 = vmatprep.subr.mxu0 0.0
        %1130 = vmatpush1.xpose.msra.mxu0 0.0
        %1131 = vmatprep.subr.mxu0 0.0
        %1132 = vmatpush1.xpose.msra.mxu0 0.0
        %1133 = vmatprep.subr.mxu0 0.0
        %1134 = vmatpush1.xpose.msra.mxu0 0.0
        %1135 = vmatprep.subr.mxu0 0.0
        %1136 = vmatpush1.xpose.msra.mxu0 0.0
        %1137 = vmatprep.subr.mxu0 0.0
        %1138 = vmatpush1.xpose.msra.mxu0 0.0
        %1139 = vmatprep.subr.mxu0 0.0
        %1140 = vmatpush1.xpose.msra.mxu0 0.0
        %1141 = vmatprep.subr.mxu0 0.0
        %1142 = vmatpush1.xpose.msra.mxu0 0.0
        %1143 = vmatprep.subr.mxu0 0.0
        %1144 = vmatpush1.xpose.msra.mxu0 0.0
        %1145 = vmatprep.subr.mxu0 0.0
        %1146 = vmatpush1.xpose.msra.mxu0 0.0
        %1147 = vmatprep.subr.mxu0 0.0
        %1148 = vmatpush1.xpose.msra.mxu0 0.0
        %1149 = vmatprep.subr.mxu0 0.0
        %1150 = vmatpush1.xpose.msra.mxu0 0.0
        %1151 = vmatprep.subr.mxu0 0.0
        %1152 = vmatpush1.xpose.msra.mxu0 0.0
        %1153 = vmatprep.subr.mxu0 0.0
        %1154 = vmatpush1.xpose.msra.mxu0 0.0
        %1155 = vmatprep.subr.mxu0 0.0
        %1156 = vmatpush1.xpose.msra.mxu0 0.0
        %1157 = vmatprep.subr.mxu0 0.0
        %1158 = vmatpush1.xpose.msra.mxu0 0.0
        %1159 = vmatprep.subr.mxu0 0.0
        %1160 = vmatpush1.xpose.msra.mxu0 0.0
        %1161 = vmatprep.subr.mxu0 0.0
        %1162 = vmatpush1.xpose.msra.mxu0 0.0
        %1163 = vmatprep.subr.mxu0 0.0
        %1164 = vmatpush1.xpose.msra.mxu0 0.0
        %1165 = vmatprep.subr.mxu0 0.0
        %1166 = vmatpush1.xpose.msra.mxu0 0.0
        %1167 = vmatprep.subr.mxu0 0.0
        %1168 = vmatpush1.xpose.msra.mxu0 0.0
        %1169 = vmatprep.subr.mxu0 0.0
        %1170 = vmatpush1.xpose.msra.mxu0 0.0
        %1171 = vmatprep.subr.mxu0 0.0
        %1172 = vmatpush1.xpose.msra.mxu0 0.0
        %1173 = vmatprep.subr.mxu0 0.0
        %1174 = vmatpush1.xpose.msra.mxu0 0.0
        %1175 = vmatprep.subr.mxu0 0.0
        %1176 = vmatpush1.xpose.msra.mxu0 0.0
        %1177 = vmatprep.subr.mxu0 0.0
        %1178 = vmatpush1.xpose.msra.mxu0 0.0
        %1179 = vmatprep.subr.mxu0 0.0
        %1180 = vmatpush1.xpose.msra.mxu0 0.0
        %1181 = vmatprep.subr.mxu0 0.0
        %1182 = vmatpush1.xpose.msra.mxu0 0.0
        %1183 = vmatprep.subr.mxu0 0.0
        %1184 = vmatpush1.xpose.msra.mxu0 0.0
        %1185 = vmatprep.subr.mxu0 0.0
        %1186 = vmatpush1.xpose.msra.mxu0 0.0
        %1187 = vmatprep.mubr.f32.mxu0 0.0
        %1188 = vmatmul.mubr.f32.gmra.mrb[0].mxu0 %v1119
        %v1189 = vpop.f32.mrb[0].mxu0
        %v1190 = vadd.f32 0.0, %v1189
        %v1191 = vpop.f32.mrb[0].mxu0
        %1192 = vdwg.mxu0
        %v1193 = vmul.f32 %v1190, 0.35355338
        %v1194 = vmul.f32 %v1193, %v762
        %v1195 = vsel %vm791, %v1194, -inf
        %1196 = vmax.xlane.f32.xlu0 %v1195
        %v1197 = vpop.xlane.xlu0 %1196
        %v1198 = vsub.f32 %v1194, %v1197
        %v1199 = vmul.f32 %v1198, 1.442695
        %v1200 = vpow.pop %v1199
        %v1201 = vsel %vm791, %v1200, 0.0
        %1202 = vadd.xlane.f32.xlu0 %v1201
        %v1203 = vpop.xlane.xlu0 %1202
        %v1204 = vrcp.pop %v1203
        %v1205 = vmul.f32 %v1200, %v1204
        %1206 = vrot.lane.b32.xlu0 %v784, 120
        %v1207 = vpop.permute.xlu0 %1206
        %v1208 = vsel %vm791, %v1207, 0
        %1210 = vmatprep.subr.mxu0 0.0
        %1211 = vmatpush1.xpose.msra.mxu0 %v1208
        %1212 = vmatprep.subr.mxu0 0.0
        %1213 = vmatpush1.xpose.msra.mxu0 0.0
        %1214 = vmatprep.subr.mxu0 0.0
        %1215 = vmatpush1.xpose.msra.mxu0 0.0
        %1216 = vmatprep.subr.mxu0 0.0
        %1217 = vmatpush1.xpose.msra.mxu0 0.0
        %1218 = vmatprep.subr.mxu0 0.0
        %1219 = vmatpush1.xpose.msra.mxu0 0.0
        %1220 = vmatprep.subr.mxu0 0.0
        %1221 = vmatpush1.xpose.msra.mxu0 0.0
        %1222 = vmatprep.subr.mxu0 0.0
        %1223 = vmatpush1.xpose.msra.mxu0 0.0
        %1224 = vmatprep.subr.mxu0 0.0
        %1225 = vmatpush1.xpose.msra.mxu0 0.0
        %1226 = vmatprep.subr.mxu0 0.0
        %1227 = vmatpush1.xpose.msra.mxu0 0.0
        %1228 = vmatprep.subr.mxu0 0.0
        %1229 = vmatpush1.xpose.msra.mxu0 0.0
        %1230 = vmatprep.subr.mxu0 0.0
        %1231 = vmatpush1.xpose.msra.mxu0 0.0
        %1232 = vmatprep.subr.mxu0 0.0
        %1233 = vmatpush1.xpose.msra.mxu0 0.0
        %1234 = vmatprep.subr.mxu0 0.0
        %1235 = vmatpush1.xpose.msra.mxu0 0.0
        %1236 = vmatprep.subr.mxu0 0.0
        %1237 = vmatpush1.xpose.msra.mxu0 0.0
        %1238 = vmatprep.subr.mxu0 0.0
        %1239 = vmatpush1.xpose.msra.mxu0 0.0
        %1240 = vmatprep.subr.mxu0 0.0
        %1241 = vmatpush1.xpose.msra.mxu0 0.0
        %1242 = vmatprep.subr.mxu0 0.0
        %1243 = vmatpush1.xpose.msra.mxu0 0.0
        %1244 = vmatprep.subr.mxu0 0.0
        %1245 = vmatpush1.xpose.msra.mxu0 0.0
        %1246 = vmatprep.subr.mxu0 0.0
        %1247 = vmatpush1.xpose.msra.mxu0 0.0
        %1248 = vmatprep.subr.mxu0 0.0
        %1249 = vmatpush1.xpose.msra.mxu0 0.0
        %1250 = vmatprep.subr.mxu0 0.0
        %1251 = vmatpush1.xpose.msra.mxu0 0.0
        %1252 = vmatprep.subr.mxu0 0.0
        %1253 = vmatpush1.xpose.msra.mxu0 0.0
        %1254 = vmatprep.subr.mxu0 0.0
        %1255 = vmatpush1.xpose.msra.mxu0 0.0
        %1256 = vmatprep.subr.mxu0 0.0
        %1257 = vmatpush1.xpose.msra.mxu0 0.0
        %1258 = vmatprep.subr.mxu0 0.0
        %1259 = vmatpush1.xpose.msra.mxu0 0.0
        %1260 = vmatprep.subr.mxu0 0.0
        %1261 = vmatpush1.xpose.msra.mxu0 0.0
        %1262 = vmatprep.subr.mxu0 0.0
        %1263 = vmatpush1.xpose.msra.mxu0 0.0
        %1264 = vmatprep.subr.mxu0 0.0
        %1265 = vmatpush1.xpose.msra.mxu0 0.0
        %1266 = vmatprep.subr.mxu0 0.0
        %1267 = vmatpush1.xpose.msra.mxu0 0.0
        %1268 = vmatprep.subr.mxu0 0.0
        %1269 = vmatpush1.xpose.msra.mxu0 0.0
        %1270 = vmatprep.subr.mxu0 0.0
        %1271 = vmatpush1.xpose.msra.mxu0 0.0
        %1272 = vmatprep.subr.mxu0 0.0
        %1273 = vmatpush1.xpose.msra.mxu0 0.0
        %1274 = vmatprep.mubr.f32.mxu0 0.0
        %1275 = vmatmul.mubr.f32.gmra.mrb[0].mxu0 %v1119
        %v1276 = vpop.f32.mrb[0].mxu0
        %v1277 = vadd.f32 0.0, %v1276
        %v1278 = vpop.f32.mrb[0].mxu0
        %1279 = vdwg.mxu0
        %v1280 = vmul.f32 %v1277, 0.35355338
        %v1281 = vmul.f32 %v1280, %v781
        %v1282 = vsel %vm791, %v1281, -inf
        %1283 = vmax.xlane.f32.xlu0 %v1282
        %v1284 = vpop.xlane.xlu0 %1283
        %v1285 = vsub.f32 %v1281, %v1284
        %v1286 = vmul.f32 %v1285, 1.442695
        %v1287 = vpow.pop %v1286
        %v1288 = vsel %vm791, %v1287, 0.0
        %1289 = vadd.xlane.f32.xlu0 %v1288
        %v1290 = vpop.xlane.xlu0 %1289
        %v1291 = vrcp.pop %v1290
        %v1292 = vmul.f32 %v1287, %v1291
        %1294 = vrot.lane.b32.xlu0 %v786, 120
        %v1295 = vpop.permute.xlu0 %1294
        %v1298 = vsel %vm791, %v1292, 0
        %1300 = vmatprep.subr.mxu0 0.0
        %1301 = vmatpush1.msra.mxu0 %v1295
        %1302 = vmatprep.subr.mxu0 0.0
        %1303 = vmatpush1.msra.mxu0 0.0
        %1304 = vmatprep.subr.mxu0 0.0
        %1305 = vmatpush1.msra.mxu0 0.0
        %1306 = vmatprep.subr.mxu0 0.0
        %1307 = vmatpush1.msra.mxu0 0.0
        %1308 = vmatprep.subr.mxu0 0.0
        %1309 = vmatpush1.msra.mxu0 0.0
        %1310 = vmatprep.subr.mxu0 0.0
        %1311 = vmatpush1.msra.mxu0 0.0
        %1312 = vmatprep.subr.mxu0 0.0
        %1313 = vmatpush1.msra.mxu0 0.0
        %1314 = vmatprep.subr.mxu0 0.0
        %1315 = vmatpush1.msra.mxu0 0.0
        %1316 = vmatprep.subr.mxu0 0.0
        %1317 = vmatpush1.msra.mxu0 0.0
        %1318 = vmatprep.subr.mxu0 0.0
        %1319 = vmatpush1.msra.mxu0 0.0
        %1320 = vmatprep.subr.mxu0 0.0
        %1321 = vmatpush1.msra.mxu0 0.0
        %1322 = vmatprep.subr.mxu0 0.0
        %1323 = vmatpush1.msra.mxu0 0.0
        %1324 = vmatprep.subr.mxu0 0.0
        %1325 = vmatpush1.msra.mxu0 0.0
        %1326 = vmatprep.subr.mxu0 0.0
        %1327 = vmatpush1.msra.mxu0 0.0
        %1328 = vmatprep.subr.mxu0 0.0
        %1329 = vmatpush1.msra.mxu0 0.0
        %1330 = vmatprep.subr.mxu0 0.0
        %1331 = vmatpush1.msra.mxu0 0.0
        %1332 = vmatprep.subr.mxu0 0.0
        %1333 = vmatpush1.msra.mxu0 0.0
        %1334 = vmatprep.subr.mxu0 0.0
        %1335 = vmatpush1.msra.mxu0 0.0
        %1336 = vmatprep.subr.mxu0 0.0
        %1337 = vmatpush1.msra.mxu0 0.0
        %1338 = vmatprep.subr.mxu0 0.0
        %1339 = vmatpush1.msra.mxu0 0.0
        %1340 = vmatprep.subr.mxu0 0.0
        %1341 = vmatpush1.msra.mxu0 0.0
        %1342 = vmatprep.subr.mxu0 0.0
        %1343 = vmatpush1.msra.mxu0 0.0
        %1344 = vmatprep.subr.mxu0 0.0
        %1345 = vmatpush1.msra.mxu0 0.0
        %1346 = vmatprep.subr.mxu0 0.0
        %1347 = vmatpush1.msra.mxu0 0.0
        %1348 = vmatprep.subr.mxu0 0.0
        %1349 = vmatpush1.msra.mxu0 0.0
        %1350 = vmatprep.subr.mxu0 0.0
        %1351 = vmatpush1.msra.mxu0 0.0
        %1352 = vmatprep.subr.mxu0 0.0
        %1353 = vmatpush1.msra.mxu0 0.0
        %1354 = vmatprep.subr.mxu0 0.0
        %1355 = vmatpush1.msra.mxu0 0.0
        %1356 = vmatprep.subr.mxu0 0.0
        %1357 = vmatpush1.msra.mxu0 0.0
        %1358 = vmatprep.subr.mxu0 0.0
        %1359 = vmatpush1.msra.mxu0 0.0
        %1360 = vmatprep.subr.mxu0 0.0
        %1361 = vmatpush1.msra.mxu0 0.0
        %1362 = vmatprep.subr.mxu0 0.0
        %1363 = vmatpush1.msra.mxu0 0.0
        %1364 = vmatprep.mubr.f32.mxu0 0.0
        %1365 = vmatmul.mubr.f32.gmra.mrb[0].mxu0 %v1298
        %v1366 = vpop.f32.mrb[0].mxu0
        %v1367 = vadd.f32 0.0, %v1366
        %v1368 = vpop.f32.mrb[0].mxu0
        %1369 = vdwg.mxu0
        %s1370 = scalar_lea.vmem %s733, 8
        %1371 = vst.msk [vmem:[%s1370] sm:$0xff] %vm791, %v1292
        %1373 = vrot.lane.b32.xlu0 %v785, 120
        %v1374 = vpop.permute.xlu0 %1373
        %v1377 = vsel %vm791, %v1205, 0
        %1379 = vmatprep.subr.mxu0 0.0
        %1380 = vmatpush1.msra.mxu0 %v1374
        %1381 = vmatprep.subr.mxu0 0.0
        %1382 = vmatpush1.msra.mxu0 0.0
        %1383 = vmatprep.subr.mxu0 0.0
        %1384 = vmatpush1.msra.mxu0 0.0
        %1385 = vmatprep.subr.mxu0 0.0
        %1386 = vmatpush1.msra.mxu0 0.0
        %1387 = vmatprep.subr.mxu0 0.0
        %1388 = vmatpush1.msra.mxu0 0.0
        %1389 = vmatprep.subr.mxu0 0.0
        %1390 = vmatpush1.msra.mxu0 0.0
        %1391 = vmatprep.subr.mxu0 0.0
        %1392 = vmatpush1.msra.mxu0 0.0
        %1393 = vmatprep.subr.mxu0 0.0
        %1394 = vmatpush1.msra.mxu0 0.0
        %1395 = vmatprep.subr.mxu0 0.0
        %1396 = vmatpush1.msra.mxu0 0.0
        %1397 = vmatprep.subr.mxu0 0.0
        %1398 = vmatpush1.msra.mxu0 0.0
        %1399 = vmatprep.subr.mxu0 0.0
        %1400 = vmatpush1.msra.mxu0 0.0
        %1401 = vmatprep.subr.mxu0 0.0
        %1402 = vmatpush1.msra.mxu0 0.0
        %1403 = vmatprep.subr.mxu0 0.0
        %1404 = vmatpush1.msra.mxu0 0.0
        %1405 = vmatprep.subr.mxu0 0.0
        %1406 = vmatpush1.msra.mxu0 0.0
        %1407 = vmatprep.subr.mxu0 0.0
        %1408 = vmatpush1.msra.mxu0 0.0
        %1409 = vmatprep.subr.mxu0 0.0
        %1410 = vmatpush1.msra.mxu0 0.0
        %1411 = vmatprep.subr.mxu0 0.0
        %1412 = vmatpush1.msra.mxu0 0.0
        %1413 = vmatprep.subr.mxu0 0.0
        %1414 = vmatpush1.msra.mxu0 0.0
        %1415 = vmatprep.subr.mxu0 0.0
        %1416 = vmatpush1.msra.mxu0 0.0
        %1417 = vmatprep.subr.mxu0 0.0
        %1418 = vmatpush1.msra.mxu0 0.0
        %1419 = vmatprep.subr.mxu0 0.0
        %1420 = vmatpush1.msra.mxu0 0.0
        %1421 = vmatprep.subr.mxu0 0.0
        %1422 = vmatpush1.msra.mxu0 0.0
        %1423 = vmatprep.subr.mxu0 0.0
        %1424 = vmatpush1.msra.mxu0 0.0
        %1425 = vmatprep.subr.mxu0 0.0
        %1426 = vmatpush1.msra.mxu0 0.0
        %1427 = vmatprep.subr.mxu0 0.0
        %1428 = vmatpush1.msra.mxu0 0.0
        %1429 = vmatprep.subr.mxu0 0.0
        %1430 = vmatpush1.msra.mxu0 0.0
        %1431 = vmatprep.subr.mxu0 0.0
        %1432 = vmatpush1.msra.mxu0 0.0
        %1433 = vmatprep.subr.mxu0 0.0
        %1434 = vmatpush1.msra.mxu0 0.0
        %1435 = vmatprep.subr.mxu0 0.0
        %1436 = vmatpush1.msra.mxu0 0.0
        %1437 = vmatprep.subr.mxu0 0.0
        %1438 = vmatpush1.msra.mxu0 0.0
        %1439 = vmatprep.subr.mxu0 0.0
        %1440 = vmatpush1.msra.mxu0 0.0
        %1441 = vmatprep.subr.mxu0 0.0
        %1442 = vmatpush1.msra.mxu0 0.0
        %1443 = vmatprep.mubr.f32.mxu0 0.0
        %1444 = vmatmul.mubr.f32.gmra.mrb[0].mxu0 %v1377
        %v1445 = vpop.f32.mrb[0].mxu0
        %v1446 = vadd.f32 %v1367, %v1445
        %v1447 = vpop.f32.mrb[0].mxu0
        %1448 = vdwg.mxu0
        %v1449 = vmul.f32 %v1446, 0.5
        %v1451 = vsel %vm791, %v1449, 0
        %1453 = vmatprep.subr.mxu0 0.0
        %1454 = vmatpush1.msra.mxu0 %v788
        %1455 = vmatprep.subr.mxu0 0.0
        %1456 = vmatpush1.msra.mxu0 0.0
        %1457 = vmatprep.subr.mxu0 0.0
        %1458 = vmatpush1.msra.mxu0 0.0
        %1459 = vmatprep.subr.mxu0 0.0
        %1460 = vmatpush1.msra.mxu0 0.0
        %1461 = vmatprep.subr.mxu0 0.0
        %1462 = vmatpush1.msra.mxu0 0.0
        %1463 = vmatprep.subr.mxu0 0.0
        %1464 = vmatpush1.msra.mxu0 0.0
        %1465 = vmatprep.subr.mxu0 0.0
        %1466 = vmatpush1.msra.mxu0 0.0
        %1467 = vmatprep.subr.mxu0 0.0
        %1468 = vmatpush1.msra.mxu0 0.0
        %1469 = vmatprep.subr.mxu0 0.0
        %1470 = vmatpush1.msra.mxu0 0.0
        %1471 = vmatprep.subr.mxu0 0.0
        %1472 = vmatpush1.msra.mxu0 0.0
        %1473 = vmatprep.subr.mxu0 0.0
        %1474 = vmatpush1.msra.mxu0 0.0
        %1475 = vmatprep.subr.mxu0 0.0
        %1476 = vmatpush1.msra.mxu0 0.0
        %1477 = vmatprep.subr.mxu0 0.0
        %1478 = vmatpush1.msra.mxu0 0.0
        %1479 = vmatprep.subr.mxu0 0.0
        %1480 = vmatpush1.msra.mxu0 0.0
        %1481 = vmatprep.subr.mxu0 0.0
        %1482 = vmatpush1.msra.mxu0 0.0
        %1483 = vmatprep.subr.mxu0 0.0
        %1484 = vmatpush1.msra.mxu0 0.0
        %1485 = vmatprep.subr.mxu0 0.0
        %1486 = vmatpush1.msra.mxu0 0.0
        %1487 = vmatprep.subr.mxu0 0.0
        %1488 = vmatpush1.msra.mxu0 0.0
        %1489 = vmatprep.subr.mxu0 0.0
        %1490 = vmatpush1.msra.mxu0 0.0
        %1491 = vmatprep.subr.mxu0 0.0
        %1492 = vmatpush1.msra.mxu0 0.0
        %1493 = vmatprep.subr.mxu0 0.0
        %1494 = vmatpush1.msra.mxu0 0.0
        %1495 = vmatprep.subr.mxu0 0.0
        %1496 = vmatpush1.msra.mxu0 0.0
        %1497 = vmatprep.subr.mxu0 0.0
        %1498 = vmatpush1.msra.mxu0 0.0
        %1499 = vmatprep.subr.mxu0 0.0
        %1500 = vmatpush1.msra.mxu0 0.0
        %1501 = vmatprep.subr.mxu0 0.0
        %1502 = vmatpush1.msra.mxu0 0.0
        %1503 = vmatprep.subr.mxu0 0.0
        %1504 = vmatpush1.msra.mxu0 0.0
        %1505 = vmatprep.subr.mxu0 0.0
        %1506 = vmatpush1.msra.mxu0 0.0
        %1507 = vmatprep.subr.mxu0 0.0
        %1508 = vmatpush1.msra.mxu0 0.0
        %1509 = vmatprep.subr.mxu0 0.0
        %1510 = vmatpush1.msra.mxu0 0.0
        %1511 = vmatprep.subr.mxu0 0.0
        %1512 = vmatpush1.msra.mxu0 0.0
        %1513 = vmatprep.subr.mxu0 0.0
        %1514 = vmatpush1.msra.mxu0 0.0
        %1515 = vmatprep.subr.mxu0 0.0
        %1516 = vmatpush1.msra.mxu0 0.0
        %1517 = vmatprep.mubr.f32.mxu0 0.0
        %1518 = vmatmul.mubr.f32.gmra.mrb[0].mxu0 %v1451
        %v1519 = vpop.f32.mrb[0].mxu0
        %v1520 = vadd.f32 0.0, %v1519
        %v1521 = vpop.f32.mrb[0].mxu0
        %1522 = vdwg.mxu0
        %v1524 = vsel %vm791, %v1114, 0
        %1526 = vmatprep.subr.mxu0 0.0
        %1527 = vmatpush1.msra.mxu0 %v787
        %1528 = vmatprep.subr.mxu0 0.0
        %1529 = vmatpush1.msra.mxu0 0.0
        %1530 = vmatprep.subr.mxu0 0.0
        %1531 = vmatpush1.msra.mxu0 0.0
        %1532 = vmatprep.subr.mxu0 0.0
        %1533 = vmatpush1.msra.mxu0 0.0
        %1534 = vmatprep.subr.mxu0 0.0
        %1535 = vmatpush1.msra.mxu0 0.0
        %1536 = vmatprep.subr.mxu0 0.0
        %1537 = vmatpush1.msra.mxu0 0.0
        %1538 = vmatprep.subr.mxu0 0.0
        %1539 = vmatpush1.msra.mxu0 0.0
        %1540 = vmatprep.subr.mxu0 0.0
        %1541 = vmatpush1.msra.mxu0 0.0
        %1542 = vmatprep.subr.mxu0 0.0
        %1543 = vmatpush1.msra.mxu0 0.0
        %1544 = vmatprep.subr.mxu0 0.0
        %1545 = vmatpush1.msra.mxu0 0.0
        %1546 = vmatprep.subr.mxu0 0.0
        %1547 = vmatpush1.msra.mxu0 0.0
        %1548 = vmatprep.subr.mxu0 0.0
        %1549 = vmatpush1.msra.mxu0 0.0
        %1550 = vmatprep.subr.mxu0 0.0
        %1551 = vmatpush1.msra.mxu0 0.0
        %1552 = vmatprep.subr.mxu0 0.0
        %1553 = vmatpush1.msra.mxu0 0.0
        %1554 = vmatprep.subr.mxu0 0.0
        %1555 = vmatpush1.msra.mxu0 0.0
        %1556 = vmatprep.subr.mxu0 0.0
        %1557 = vmatpush1.msra.mxu0 0.0
        %1558 = vmatprep.subr.mxu0 0.0
        %1559 = vmatpush1.msra.mxu0 0.0
        %1560 = vmatprep.subr.mxu0 0.0
        %1561 = vmatpush1.msra.mxu0 0.0
        %1562 = vmatprep.subr.mxu0 0.0
        %1563 = vmatpush1.msra.mxu0 0.0
        %1564 = vmatprep.subr.mxu0 0.0
        %1565 = vmatpush1.msra.mxu0 0.0
        %1566 = vmatprep.subr.mxu0 0.0
        %1567 = vmatpush1.msra.mxu0 0.0
        %1568 = vmatprep.subr.mxu0 0.0
        %1569 = vmatpush1.msra.mxu0 0.0
        %1570 = vmatprep.subr.mxu0 0.0
        %1571 = vmatpush1.msra.mxu0 0.0
        %1572 = vmatprep.subr.mxu0 0.0
        %1573 = vmatpush1.msra.mxu0 0.0
        %1574 = vmatprep.subr.mxu0 0.0
        %1575 = vmatpush1.msra.mxu0 0.0
        %1576 = vmatprep.subr.mxu0 0.0
        %1577 = vmatpush1.msra.mxu0 0.0
        %1578 = vmatprep.subr.mxu0 0.0
        %1579 = vmatpush1.msra.mxu0 0.0
        %1580 = vmatprep.subr.mxu0 0.0
        %1581 = vmatpush1.msra.mxu0 0.0
        %1582 = vmatprep.subr.mxu0 0.0
        %1583 = vmatpush1.msra.mxu0 0.0
        %1584 = vmatprep.subr.mxu0 0.0
        %1585 = vmatpush1.msra.mxu0 0.0
        %1586 = vmatprep.subr.mxu0 0.0
        %1587 = vmatpush1.msra.mxu0 0.0
        %1588 = vmatprep.subr.mxu0 0.0
        %1589 = vmatpush1.msra.mxu0 0.0
        %1590 = vmatprep.mubr.f32.mxu0 0.0
        %1591 = vmatmul.mubr.f32.gmra.mrb[0].mxu0 %v1524
        %v1592 = vpop.f32.mrb[0].mxu0
        %v1593 = vadd.f32 %v1520, %v1592
        %v1594 = vpop.f32.mrb[0].mxu0
        %1595 = vdwg.mxu0
        %1596 = vrot.lane.b32.xlu0 %v782, 112
        %v1597 = vpop.permute.xlu0 %1596
        %1598 = vrot.lane.b32.xlu0 %v783, 112
        %v1599 = vpop.permute.xlu0 %1598
        %v1600 = vsel %vm791, %v1597, 0
        %v1602 = vsel %vm791, %v1599, 0
        %1604 = vmatprep.subr.mxu0 0.0
        %1605 = vmatpush1.xpose.msra.mxu0 %v1602
        %1606 = vmatprep.subr.mxu0 0.0
        %1607 = vmatpush1.xpose.msra.mxu0 0.0
        %1608 = vmatprep.subr.mxu0 0.0
        %1609 = vmatpush1.xpose.msra.mxu0 0.0
        %1610 = vmatprep.subr.mxu0 0.0
        %1611 = vmatpush1.xpose.msra.mxu0 0.0
        %1612 = vmatprep.subr.mxu0 0.0
        %1613 = vmatpush1.xpose.msra.mxu0 0.0
        %1614 = vmatprep.subr.mxu0 0.0
        %1615 = vmatpush1.xpose.msra.mxu0 0.0
        %1616 = vmatprep.subr.mxu0 0.0
        %1617 = vmatpush1.xpose.msra.mxu0 0.0
        %1618 = vmatprep.subr.mxu0 0.0
        %1619 = vmatpush1.xpose.msra.mxu0 0.0
        %1620 = vmatprep.subr.mxu0 0.0
        %1621 = vmatpush1.xpose.msra.mxu0 0.0
        %1622 = vmatprep.subr.mxu0 0.0
        %1623 = vmatpush1.xpose.msra.mxu0 0.0
        %1624 = vmatprep.subr.mxu0 0.0
        %1625 = vmatpush1.xpose.msra.mxu0 0.0
        %1626 = vmatprep.subr.mxu0 0.0
        %1627 = vmatpush1.xpose.msra.mxu0 0.0
        %1628 = vmatprep.subr.mxu0 0.0
        %1629 = vmatpush1.xpose.msra.mxu0 0.0
        %1630 = vmatprep.subr.mxu0 0.0
        %1631 = vmatpush1.xpose.msra.mxu0 0.0
        %1632 = vmatprep.subr.mxu0 0.0
        %1633 = vmatpush1.xpose.msra.mxu0 0.0
        %1634 = vmatprep.subr.mxu0 0.0
        %1635 = vmatpush1.xpose.msra.mxu0 0.0
        %1636 = vmatprep.subr.mxu0 0.0
        %1637 = vmatpush1.xpose.msra.mxu0 0.0
        %1638 = vmatprep.subr.mxu0 0.0
        %1639 = vmatpush1.xpose.msra.mxu0 0.0
        %1640 = vmatprep.subr.mxu0 0.0
        %1641 = vmatpush1.xpose.msra.mxu0 0.0
        %1642 = vmatprep.subr.mxu0 0.0
        %1643 = vmatpush1.xpose.msra.mxu0 0.0
        %1644 = vmatprep.subr.mxu0 0.0
        %1645 = vmatpush1.xpose.msra.mxu0 0.0
        %1646 = vmatprep.subr.mxu0 0.0
        %1647 = vmatpush1.xpose.msra.mxu0 0.0
        %1648 = vmatprep.subr.mxu0 0.0
        %1649 = vmatpush1.xpose.msra.mxu0 0.0
        %1650 = vmatprep.subr.mxu0 0.0
        %1651 = vmatpush1.xpose.msra.mxu0 0.0
        %1652 = vmatprep.subr.mxu0 0.0
        %1653 = vmatpush1.xpose.msra.mxu0 0.0
        %1654 = vmatprep.subr.mxu0 0.0
        %1655 = vmatpush1.xpose.msra.mxu0 0.0
        %1656 = vmatprep.subr.mxu0 0.0
        %1657 = vmatpush1.xpose.msra.mxu0 0.0
        %1658 = vmatprep.subr.mxu0 0.0
        %1659 = vmatpush1.xpose.msra.mxu0 0.0
        %1660 = vmatprep.subr.mxu0 0.0
        %1661 = vmatpush1.xpose.msra.mxu0 0.0
        %1662 = vmatprep.subr.mxu0 0.0
        %1663 = vmatpush1.xpose.msra.mxu0 0.0
        %1664 = vmatprep.subr.mxu0 0.0
        %1665 = vmatpush1.xpose.msra.mxu0 0.0
        %1666 = vmatprep.subr.mxu0 0.0
        %1667 = vmatpush1.xpose.msra.mxu0 0.0
        %1668 = vmatprep.mubr.f32.mxu0 0.0
        %1669 = vmatmul.mubr.f32.gmra.mrb[0].mxu0 %v1600
        %v1670 = vpop.f32.mrb[0].mxu0
        %v1671 = vadd.f32 0.0, %v1670
        %v1672 = vpop.f32.mrb[0].mxu0
        %1673 = vdwg.mxu0
        %v1674 = vmul.f32 %v1671, 0.35355338
        %v1675 = vmul.f32 %v1674, %v762
        %v1676 = vsel %vm791, %v1675, -inf
        %1677 = vmax.xlane.f32.xlu0 %v1676
        %v1678 = vpop.xlane.xlu0 %1677
        %v1679 = vsub.f32 %v1675, %v1678
        %v1680 = vmul.f32 %v1679, 1.442695
        %v1681 = vpow.pop %v1680
        %v1682 = vsel %vm791, %v1681, 0.0
        %1683 = vadd.xlane.f32.xlu0 %v1682
        %v1684 = vpop.xlane.xlu0 %1683
        %v1685 = vrcp.pop %v1684
        %v1686 = vmul.f32 %v1681, %v1685
        %1687 = vrot.lane.b32.xlu0 %v784, 112
        %v1688 = vpop.permute.xlu0 %1687
        %v1689 = vsel %vm791, %v1688, 0
        %1691 = vmatprep.subr.mxu0 0.0
        %1692 = vmatpush1.xpose.msra.mxu0 %v1689
        %1693 = vmatprep.subr.mxu0 0.0
        %1694 = vmatpush1.xpose.msra.mxu0 0.0
        %1695 = vmatprep.subr.mxu0 0.0
        %1696 = vmatpush1.xpose.msra.mxu0 0.0
        %1697 = vmatprep.subr.mxu0 0.0
        %1698 = vmatpush1.xpose.msra.mxu0 0.0
        %1699 = vmatprep.subr.mxu0 0.0
        %1700 = vmatpush1.xpose.msra.mxu0 0.0
        %1701 = vmatprep.subr.mxu0 0.0
        %1702 = vmatpush1.xpose.msra.mxu0 0.0
        %1703 = vmatprep.subr.mxu0 0.0
        %1704 = vmatpush1.xpose.msra.mxu0 0.0
        %1705 = vmatprep.subr.mxu0 0.0
        %1706 = vmatpush1.xpose.msra.mxu0 0.0
        %1707 = vmatprep.subr.mxu0 0.0
        %1708 = vmatpush1.xpose.msra.mxu0 0.0
        %1709 = vmatprep.subr.mxu0 0.0
        %1710 = vmatpush1.xpose.msra.mxu0 0.0
        %1711 = vmatprep.subr.mxu0 0.0
        %1712 = vmatpush1.xpose.msra.mxu0 0.0
        %1713 = vmatprep.subr.mxu0 0.0
        %1714 = vmatpush1.xpose.msra.mxu0 0.0
        %1715 = vmatprep.subr.mxu0 0.0
        %1716 = vmatpush1.xpose.msra.mxu0 0.0
        %1717 = vmatprep.subr.mxu0 0.0
        %1718 = vmatpush1.xpose.msra.mxu0 0.0
        %1719 = vmatprep.subr.mxu0 0.0
        %1720 = vmatpush1.xpose.msra.mxu0 0.0
        %1721 = vmatprep.subr.mxu0 0.0
        %1722 = vmatpush1.xpose.msra.mxu0 0.0
        %1723 = vmatprep.subr.mxu0 0.0
        %1724 = vmatpush1.xpose.msra.mxu0 0.0
        %1725 = vmatprep.subr.mxu0 0.0
        %1726 = vmatpush1.xpose.msra.mxu0 0.0
        %1727 = vmatprep.subr.mxu0 0.0
        %1728 = vmatpush1.xpose.msra.mxu0 0.0
        %1729 = vmatprep.subr.mxu0 0.0
        %1730 = vmatpush1.xpose.msra.mxu0 0.0
        %1731 = vmatprep.subr.mxu0 0.0
        %1732 = vmatpush1.xpose.msra.mxu0 0.0
        %1733 = vmatprep.subr.mxu0 0.0
        %1734 = vmatpush1.xpose.msra.mxu0 0.0
        %1735 = vmatprep.subr.mxu0 0.0
        %1736 = vmatpush1.xpose.msra.mxu0 0.0
        %1737 = vmatprep.subr.mxu0 0.0
        %1738 = vmatpush1.xpose.msra.mxu0 0.0
        %1739 = vmatprep.subr.mxu0 0.0
        %1740 = vmatpush1.xpose.msra.mxu0 0.0
        %1741 = vmatprep.subr.mxu0 0.0
        %1742 = vmatpush1.xpose.msra.mxu0 0.0
        %1743 = vmatprep.subr.mxu0 0.0
        %1744 = vmatpush1.xpose.msra.mxu0 0.0
        %1745 = vmatprep.subr.mxu0 0.0
        %1746 = vmatpush1.xpose.msra.mxu0 0.0
        %1747 = vmatprep.subr.mxu0 0.0
        %1748 = vmatpush1.xpose.msra.mxu0 0.0
        %1749 = vmatprep.subr.mxu0 0.0
        %1750 = vmatpush1.xpose.msra.mxu0 0.0
        %1751 = vmatprep.subr.mxu0 0.0
        %1752 = vmatpush1.xpose.msra.mxu0 0.0
        %1753 = vmatprep.subr.mxu0 0.0
        %1754 = vmatpush1.xpose.msra.mxu0 0.0
        %1755 = vmatprep.mubr.f32.mxu0 0.0
        %1756 = vmatmul.mubr.f32.gmra.mrb[0].mxu0 %v1600
        %v1757 = vpop.f32.mrb[0].mxu0
        %v1758 = vadd.f32 0.0, %v1757
        %v1759 = vpop.f32.mrb[0].mxu0
        %1760 = vdwg.mxu0
        %v1761 = vmul.f32 %v1758, 0.35355338
        %v1762 = vmul.f32 %v1761, %v781
        %v1763 = vsel %vm791, %v1762, -inf
        %1764 = vmax.xlane.f32.xlu0 %v1763
        %v1765 = vpop.xlane.xlu0 %1764
        %v1766 = vsub.f32 %v1762, %v1765
        %v1767 = vmul.f32 %v1766, 1.442695
        %v1768 = vpow.pop %v1767
        %v1769 = vsel %vm791, %v1768, 0.0
        %1770 = vadd.xlane.f32.xlu0 %v1769
        %v1771 = vpop.xlane.xlu0 %1770
        %v1772 = vrcp.pop %v1771
        %v1773 = vmul.f32 %v1768, %v1772
        %1774 = vrot.lane.b32.xlu0 %v786, 112
        %v1775 = vpop.permute.xlu0 %1774
        %v1778 = vsel %vm791, %v1773, 0
        %1780 = vmatprep.subr.mxu0 0.0
        %1781 = vmatpush1.msra.mxu0 %v1775
        %1782 = vmatprep.subr.mxu0 0.0
        %1783 = vmatpush1.msra.mxu0 0.0
        %1784 = vmatprep.subr.mxu0 0.0
        %1785 = vmatpush1.msra.mxu0 0.0
        %1786 = vmatprep.subr.mxu0 0.0
        %1787 = vmatpush1.msra.mxu0 0.0
        %1788 = vmatprep.subr.mxu0 0.0
        %1789 = vmatpush1.msra.mxu0 0.0
        %1790 = vmatprep.subr.mxu0 0.0
        %1791 = vmatpush1.msra.mxu0 0.0
        %1792 = vmatprep.subr.mxu0 0.0
        %1793 = vmatpush1.msra.mxu0 0.0
        %1794 = vmatprep.subr.mxu0 0.0
        %1795 = vmatpush1.msra.mxu0 0.0
        %1796 = vmatprep.subr.mxu0 0.0
        %1797 = vmatpush1.msra.mxu0 0.0
        %1798 = vmatprep.subr.mxu0 0.0
        %1799 = vmatpush1.msra.mxu0 0.0
        %1800 = vmatprep.subr.mxu0 0.0
        %1801 = vmatpush1.msra.mxu0 0.0
        %1802 = vmatprep.subr.mxu0 0.0
        %1803 = vmatpush1.msra.mxu0 0.0
        %1804 = vmatprep.subr.mxu0 0.0
        %1805 = vmatpush1.msra.mxu0 0.0
        %1806 = vmatprep.subr.mxu0 0.0
        %1807 = vmatpush1.msra.mxu0 0.0
        %1808 = vmatprep.subr.mxu0 0.0
        %1809 = vmatpush1.msra.mxu0 0.0
        %1810 = vmatprep.subr.mxu0 0.0
        %1811 = vmatpush1.msra.mxu0 0.0
        %1812 = vmatprep.subr.mxu0 0.0
        %1813 = vmatpush1.msra.mxu0 0.0
        %1814 = vmatprep.subr.mxu0 0.0
        %1815 = vmatpush1.msra.mxu0 0.0
        %1816 = vmatprep.subr.mxu0 0.0
        %1817 = vmatpush1.msra.mxu0 0.0
        %1818 = vmatprep.subr.mxu0 0.0
        %1819 = vmatpush1.msra.mxu0 0.0
        %1820 = vmatprep.subr.mxu0 0.0
        %1821 = vmatpush1.msra.mxu0 0.0
        %1822 = vmatprep.subr.mxu0 0.0
        %1823 = vmatpush1.msra.mxu0 0.0
        %1824 = vmatprep.subr.mxu0 0.0
        %1825 = vmatpush1.msra.mxu0 0.0
        %1826 = vmatprep.subr.mxu0 0.0
        %1827 = vmatpush1.msra.mxu0 0.0
        %1828 = vmatprep.subr.mxu0 0.0
        %1829 = vmatpush1.msra.mxu0 0.0
        %1830 = vmatprep.subr.mxu0 0.0
        %1831 = vmatpush1.msra.mxu0 0.0
        %1832 = vmatprep.subr.mxu0 0.0
        %1833 = vmatpush1.msra.mxu0 0.0
        %1834 = vmatprep.subr.mxu0 0.0
        %1835 = vmatpush1.msra.mxu0 0.0
        %1836 = vmatprep.subr.mxu0 0.0
        %1837 = vmatpush1.msra.mxu0 0.0
        %1838 = vmatprep.subr.mxu0 0.0
        %1839 = vmatpush1.msra.mxu0 0.0
        %1840 = vmatprep.subr.mxu0 0.0
        %1841 = vmatpush1.msra.mxu0 0.0
        %1842 = vmatprep.subr.mxu0 0.0
        %1843 = vmatpush1.msra.mxu0 0.0
        %1844 = vmatprep.mubr.f32.mxu0 0.0
        %1845 = vmatmul.mubr.f32.gmra.mrb[0].mxu0 %v1778
        %v1846 = vpop.f32.mrb[0].mxu0
        %v1847 = vadd.f32 0.0, %v1846
        %v1848 = vpop.f32.mrb[0].mxu0
        %1849 = vdwg.mxu0
        %s1850 = scalar_lea.vmem %s733, 16
        %1851 = vst.msk [vmem:[%s1850] sm:$0xff] %vm791, %v1773
        %1852 = vrot.lane.b32.xlu0 %v785, 112
        %v1853 = vpop.permute.xlu0 %1852
        %v1856 = vsel %vm791, %v1686, 0
        %1858 = vmatprep.subr.mxu0 0.0
        %1859 = vmatpush1.msra.mxu0 %v1853
        %1860 = vmatprep.subr.mxu0 0.0
        %1861 = vmatpush1.msra.mxu0 0.0
        %1862 = vmatprep.subr.mxu0 0.0
        %1863 = vmatpush1.msra.mxu0 0.0
        %1864 = vmatprep.subr.mxu0 0.0
        %1865 = vmatpush1.msra.mxu0 0.0
        %1866 = vmatprep.subr.mxu0 0.0
        %1867 = vmatpush1.msra.mxu0 0.0
        %1868 = vmatprep.subr.mxu0 0.0
        %1869 = vmatpush1.msra.mxu0 0.0
        %1870 = vmatprep.subr.mxu0 0.0
        %1871 = vmatpush1.msra.mxu0 0.0
        %1872 = vmatprep.subr.mxu0 0.0
        %1873 = vmatpush1.msra.mxu0 0.0
        %1874 = vmatprep.subr.mxu0 0.0
        %1875 = vmatpush1.msra.mxu0 0.0
        %1876 = vmatprep.subr.mxu0 0.0
        %1877 = vmatpush1.msra.mxu0 0.0
        %1878 = vmatprep.subr.mxu0 0.0
        %1879 = vmatpush1.msra.mxu0 0.0
        %1880 = vmatprep.subr.mxu0 0.0
        %1881 = vmatpush1.msra.mxu0 0.0
        %1882 = vmatprep.subr.mxu0 0.0
        %1883 = vmatpush1.msra.mxu0 0.0
        %1884 = vmatprep.subr.mxu0 0.0
        %1885 = vmatpush1.msra.mxu0 0.0
        %1886 = vmatprep.subr.mxu0 0.0
        %1887 = vmatpush1.msra.mxu0 0.0
        %1888 = vmatprep.subr.mxu0 0.0
        %1889 = vmatpush1.msra.mxu0 0.0
        %1890 = vmatprep.subr.mxu0 0.0
        %1891 = vmatpush1.msra.mxu0 0.0
        %1892 = vmatprep.subr.mxu0 0.0
        %1893 = vmatpush1.msra.mxu0 0.0
        %1894 = vmatprep.subr.mxu0 0.0
        %1895 = vmatpush1.msra.mxu0 0.0
        %1896 = vmatprep.subr.mxu0 0.0
        %1897 = vmatpush1.msra.mxu0 0.0
        %1898 = vmatprep.subr.mxu0 0.0
        %1899 = vmatpush1.msra.mxu0 0.0
        %1900 = vmatprep.subr.mxu0 0.0
        %1901 = vmatpush1.msra.mxu0 0.0
        %1902 = vmatprep.subr.mxu0 0.0
        %1903 = vmatpush1.msra.mxu0 0.0
        %1904 = vmatprep.subr.mxu0 0.0
        %1905 = vmatpush1.msra.mxu0 0.0
        %1906 = vmatprep.subr.mxu0 0.0
        %1907 = vmatpush1.msra.mxu0 0.0
        %1908 = vmatprep.subr.mxu0 0.0
        %1909 = vmatpush1.msra.mxu0 0.0
        %1910 = vmatprep.subr.mxu0 0.0
        %1911 = vmatpush1.msra.mxu0 0.0
        %1912 = vmatprep.subr.mxu0 0.0
        %1913 = vmatpush1.msra.mxu0 0.0
        %1914 = vmatprep.subr.mxu0 0.0
        %1915 = vmatpush1.msra.mxu0 0.0
        %1916 = vmatprep.subr.mxu0 0.0
        %1917 = vmatpush1.msra.mxu0 0.0
        %1918 = vmatprep.subr.mxu0 0.0
        %1919 = vmatpush1.msra.mxu0 0.0
        %1920 = vmatprep.subr.mxu0 0.0
        %1921 = vmatpush1.msra.mxu0 0.0
        %1922 = vmatprep.mubr.f32.mxu0 0.0
        %1923 = vmatmul.mubr.f32.gmra.mrb[0].mxu0 %v1856
        %v1924 = vpop.f32.mrb[0].mxu0
        %v1925 = vadd.f32 %v1847, %v1924
        %v1926 = vpop.f32.mrb[0].mxu0
        %1927 = vdwg.mxu0
        %v1928 = vmul.f32 %v1925, 0.5
        %v1930 = vsel %vm791, %v1928, 0
        %1932 = vmatprep.subr.mxu0 0.0
        %1933 = vmatpush1.msra.mxu0 %v789
        %1934 = vmatprep.subr.mxu0 0.0
        %1935 = vmatpush1.msra.mxu0 0.0
        %1936 = vmatprep.subr.mxu0 0.0
        %1937 = vmatpush1.msra.mxu0 0.0
        %1938 = vmatprep.subr.mxu0 0.0
        %1939 = vmatpush1.msra.mxu0 0.0
        %1940 = vmatprep.subr.mxu0 0.0
        %1941 = vmatpush1.msra.mxu0 0.0
        %1942 = vmatprep.subr.mxu0 0.0
        %1943 = vmatpush1.msra.mxu0 0.0
        %1944 = vmatprep.subr.mxu0 0.0
        %1945 = vmatpush1.msra.mxu0 0.0
        %1946 = vmatprep.subr.mxu0 0.0
        %1947 = vmatpush1.msra.mxu0 0.0
        %1948 = vmatprep.subr.mxu0 0.0
        %1949 = vmatpush1.msra.mxu0 0.0
        %1950 = vmatprep.subr.mxu0 0.0
        %1951 = vmatpush1.msra.mxu0 0.0
        %1952 = vmatprep.subr.mxu0 0.0
        %1953 = vmatpush1.msra.mxu0 0.0
        %1954 = vmatprep.subr.mxu0 0.0
        %1955 = vmatpush1.msra.mxu0 0.0
        %1956 = vmatprep.subr.mxu0 0.0
        %1957 = vmatpush1.msra.mxu0 0.0
        %1958 = vmatprep.subr.mxu0 0.0
        %1959 = vmatpush1.msra.mxu0 0.0
        %1960 = vmatprep.subr.mxu0 0.0
        %1961 = vmatpush1.msra.mxu0 0.0
        %1962 = vmatprep.subr.mxu0 0.0
        %1963 = vmatpush1.msra.mxu0 0.0
        %1964 = vmatprep.subr.mxu0 0.0
        %1965 = vmatpush1.msra.mxu0 0.0
        %1966 = vmatprep.subr.mxu0 0.0
        %1967 = vmatpush1.msra.mxu0 0.0
        %1968 = vmatprep.subr.mxu0 0.0
        %1969 = vmatpush1.msra.mxu0 0.0
        %1970 = vmatprep.subr.mxu0 0.0
        %1971 = vmatpush1.msra.mxu0 0.0
        %1972 = vmatprep.subr.mxu0 0.0
        %1973 = vmatpush1.msra.mxu0 0.0
        %1974 = vmatprep.subr.mxu0 0.0
        %1975 = vmatpush1.msra.mxu0 0.0
        %1976 = vmatprep.subr.mxu0 0.0
        %1977 = vmatpush1.msra.mxu0 0.0
        %1978 = vmatprep.subr.mxu0 0.0
        %1979 = vmatpush1.msra.mxu0 0.0
        %1980 = vmatprep.subr.mxu0 0.0
        %1981 = vmatpush1.msra.mxu0 0.0
        %1982 = vmatprep.subr.mxu0 0.0
        %1983 = vmatpush1.msra.mxu0 0.0
        %1984 = vmatprep.subr.mxu0 0.0
        %1985 = vmatpush1.msra.mxu0 0.0
        %1986 = vmatprep.subr.mxu0 0.0
        %1987 = vmatpush1.msra.mxu0 0.0
        %1988 = vmatprep.subr.mxu0 0.0
        %1989 = vmatpush1.msra.mxu0 0.0
        %1990 = vmatprep.subr.mxu0 0.0
        %1991 = vmatpush1.msra.mxu0 0.0
        %1992 = vmatprep.subr.mxu0 0.0
        %1993 = vmatpush1.msra.mxu0 0.0
        %1994 = vmatprep.subr.mxu0 0.0
        %1995 = vmatpush1.msra.mxu0 0.0
        %1996 = vmatprep.mubr.f32.mxu0 0.0
        %1997 = vmatmul.mubr.f32.gmra.mrb[0].mxu0 %v1930
        %v1998 = vpop.f32.mrb[0].mxu0
        %v1999 = vadd.f32 0.0, %v1998
        %v2000 = vpop.f32.mrb[0].mxu0
        %2001 = vdwg.mxu0
        %v2002 = vadd.f32 %v1593, %v1999
        %2003 = vrot.lane.b32.xlu0 %v782, 104
        %v2004 = vpop.permute.xlu0 %2003
        %2005 = vrot.lane.b32.xlu0 %v783, 104
        %v2006 = vpop.permute.xlu0 %2005
        %v2007 = vsel %vm791, %v2004, 0
        %v2009 = vsel %vm791, %v2006, 0
        %2011 = vmatprep.subr.mxu0 0.0
        %2012 = vmatpush1.xpose.msra.mxu0 %v2009
        %2013 = vmatprep.subr.mxu0 0.0
        %2014 = vmatpush1.xpose.msra.mxu0 0.0
        %2015 = vmatprep.subr.mxu0 0.0
        %2016 = vmatpush1.xpose.msra.mxu0 0.0
        %2017 = vmatprep.subr.mxu0 0.0
        %2018 = vmatpush1.xpose.msra.mxu0 0.0
        %2019 = vmatprep.subr.mxu0 0.0
        %2020 = vmatpush1.xpose.msra.mxu0 0.0
        %2021 = vmatprep.subr.mxu0 0.0
        %2022 = vmatpush1.xpose.msra.mxu0 0.0
        %2023 = vmatprep.subr.mxu0 0.0
        %2024 = vmatpush1.xpose.msra.mxu0 0.0
        %2025 = vmatprep.subr.mxu0 0.0
        %2026 = vmatpush1.xpose.msra.mxu0 0.0
        %2027 = vmatprep.subr.mxu0 0.0
        %2028 = vmatpush1.xpose.msra.mxu0 0.0
        %2029 = vmatprep.subr.mxu0 0.0
        %2030 = vmatpush1.xpose.msra.mxu0 0.0
        %2031 = vmatprep.subr.mxu0 0.0
        %2032 = vmatpush1.xpose.msra.mxu0 0.0
        %2033 = vmatprep.subr.mxu0 0.0
        %2034 = vmatpush1.xpose.msra.mxu0 0.0
        %2035 = vmatprep.subr.mxu0 0.0
        %2036 = vmatpush1.xpose.msra.mxu0 0.0
        %2037 = vmatprep.subr.mxu0 0.0
        %2038 = vmatpush1.xpose.msra.mxu0 0.0
        %2039 = vmatprep.subr.mxu0 0.0
        %2040 = vmatpush1.xpose.msra.mxu0 0.0
        %2041 = vmatprep.subr.mxu0 0.0
        %2042 = vmatpush1.xpose.msra.mxu0 0.0
        %2043 = vmatprep.subr.mxu0 0.0
        %2044 = vmatpush1.xpose.msra.mxu0 0.0
        %2045 = vmatprep.subr.mxu0 0.0
        %2046 = vmatpush1.xpose.msra.mxu0 0.0
        %2047 = vmatprep.subr.mxu0 0.0
        %2048 = vmatpush1.xpose.msra.mxu0 0.0
        %2049 = vmatprep.subr.mxu0 0.0
        %2050 = vmatpush1.xpose.msra.mxu0 0.0
        %2051 = vmatprep.subr.mxu0 0.0
        %2052 = vmatpush1.xpose.msra.mxu0 0.0
        %2053 = vmatprep.subr.mxu0 0.0
        %2054 = vmatpush1.xpose.msra.mxu0 0.0
        %2055 = vmatprep.subr.mxu0 0.0
        %2056 = vmatpush1.xpose.msra.mxu0 0.0
        %2057 = vmatprep.subr.mxu0 0.0
        %2058 = vmatpush1.xpose.msra.mxu0 0.0
        %2059 = vmatprep.subr.mxu0 0.0
        %2060 = vmatpush1.xpose.msra.mxu0 0.0
        %2061 = vmatprep.subr.mxu0 0.0
        %2062 = vmatpush1.xpose.msra.mxu0 0.0
        %2063 = vmatprep.subr.mxu0 0.0
        %2064 = vmatpush1.xpose.msra.mxu0 0.0
        %2065 = vmatprep.subr.mxu0 0.0
        %2066 = vmatpush1.xpose.msra.mxu0 0.0
        %2067 = vmatprep.subr.mxu0 0.0
        %2068 = vmatpush1.xpose.msra.mxu0 0.0
        %2069 = vmatprep.subr.mxu0 0.0
        %2070 = vmatpush1.xpose.msra.mxu0 0.0
        %2071 = vmatprep.subr.mxu0 0.0
        %2072 = vmatpush1.xpose.msra.mxu0 0.0
        %2073 = vmatprep.subr.mxu0 0.0
        %2074 = vmatpush1.xpose.msra.mxu0 0.0
        %2075 = vmatprep.mubr.f32.mxu0 0.0
        %2076 = vmatmul.mubr.f32.gmra.mrb[0].mxu0 %v2007
        %v2077 = vpop.f32.mrb[0].mxu0
        %v2078 = vadd.f32 0.0, %v2077
        %v2079 = vpop.f32.mrb[0].mxu0
        %2080 = vdwg.mxu0
        %v2081 = vmul.f32 %v2078, 0.35355338
        %v2082 = vmul.f32 %v2081, %v762
        %v2083 = vsel %vm791, %v2082, -inf
        %2084 = vmax.xlane.f32.xlu0 %v2083
        %v2085 = vpop.xlane.xlu0 %2084
        %v2086 = vsub.f32 %v2082, %v2085
        %v2087 = vmul.f32 %v2086, 1.442695
        %v2088 = vpow.pop %v2087
        %v2089 = vsel %vm791, %v2088, 0.0
        %2090 = vadd.xlane.f32.xlu0 %v2089
        %v2091 = vpop.xlane.xlu0 %2090
        %v2092 = vrcp.pop %v2091
        %v2093 = vmul.f32 %v2088, %v2092
        %2094 = vrot.lane.b32.xlu0 %v784, 104
        %v2095 = vpop.permute.xlu0 %2094
        %v2096 = vsel %vm791, %v2095, 0
        %2098 = vmatprep.subr.mxu0 0.0
        %2099 = vmatpush1.xpose.msra.mxu0 %v2096
        %2100 = vmatprep.subr.mxu0 0.0
        %2101 = vmatpush1.xpose.msra.mxu0 0.0
        %2102 = vmatprep.subr.mxu0 0.0
        %2103 = vmatpush1.xpose.msra.mxu0 0.0
        %2104 = vmatprep.subr.mxu0 0.0
        %2105 = vmatpush1.xpose.msra.mxu0 0.0
        %2106 = vmatprep.subr.mxu0 0.0
        %2107 = vmatpush1.xpose.msra.mxu0 0.0
        %2108 = vmatprep.subr.mxu0 0.0
        %2109 = vmatpush1.xpose.msra.mxu0 0.0
        %2110 = vmatprep.subr.mxu0 0.0
        %2111 = vmatpush1.xpose.msra.mxu0 0.0
        %2112 = vmatprep.subr.mxu0 0.0
        %2113 = vmatpush1.xpose.msra.mxu0 0.0
        %2114 = vmatprep.subr.mxu0 0.0
        %2115 = vmatpush1.xpose.msra.mxu0 0.0
        %2116 = vmatprep.subr.mxu0 0.0
        %2117 = vmatpush1.xpose.msra.mxu0 0.0
        %2118 = vmatprep.subr.mxu0 0.0
        %2119 = vmatpush1.xpose.msra.mxu0 0.0
        %2120 = vmatprep.subr.mxu0 0.0
        %2121 = vmatpush1.xpose.msra.mxu0 0.0
        %2122 = vmatprep.subr.mxu0 0.0
        %2123 = vmatpush1.xpose.msra.mxu0 0.0
        %2124 = vmatprep.subr.mxu0 0.0
        %2125 = vmatpush1.xpose.msra.mxu0 0.0
        %2126 = vmatprep.subr.mxu0 0.0
        %2127 = vmatpush1.xpose.msra.mxu0 0.0
        %2128 = vmatprep.subr.mxu0 0.0
        %2129 = vmatpush1.xpose.msra.mxu0 0.0
        %2130 = vmatprep.subr.mxu0 0.0
        %2131 = vmatpush1.xpose.msra.mxu0 0.0
        %2132 = vmatprep.subr.mxu0 0.0
        %2133 = vmatpush1.xpose.msra.mxu0 0.0
        %2134 = vmatprep.subr.mxu0 0.0
        %2135 = vmatpush1.xpose.msra.mxu0 0.0
        %2136 = vmatprep.subr.mxu0 0.0
        %2137 = vmatpush1.xpose.msra.mxu0 0.0
        %2138 = vmatprep.subr.mxu0 0.0
        %2139 = vmatpush1.xpose.msra.mxu0 0.0
        %2140 = vmatprep.subr.mxu0 0.0
        %2141 = vmatpush1.xpose.msra.mxu0 0.0
        %2142 = vmatprep.subr.mxu0 0.0
        %2143 = vmatpush1.xpose.msra.mxu0 0.0
        %2144 = vmatprep.subr.mxu0 0.0
        %2145 = vmatpush1.xpose.msra.mxu0 0.0
        %2146 = vmatprep.subr.mxu0 0.0
        %2147 = vmatpush1.xpose.msra.mxu0 0.0
        %2148 = vmatprep.subr.mxu0 0.0
        %2149 = vmatpush1.xpose.msra.mxu0 0.0
        %2150 = vmatprep.subr.mxu0 0.0
        %2151 = vmatpush1.xpose.msra.mxu0 0.0
        %2152 = vmatprep.subr.mxu0 0.0
        %2153 = vmatpush1.xpose.msra.mxu0 0.0
        %2154 = vmatprep.subr.mxu0 0.0
        %2155 = vmatpush1.xpose.msra.mxu0 0.0
        %2156 = vmatprep.subr.mxu0 0.0
        %2157 = vmatpush1.xpose.msra.mxu0 0.0
        %2158 = vmatprep.subr.mxu0 0.0
        %2159 = vmatpush1.xpose.msra.mxu0 0.0
        %2160 = vmatprep.subr.mxu0 0.0
        %2161 = vmatpush1.xpose.msra.mxu0 0.0
        %2162 = vmatprep.mubr.f32.mxu0 0.0
        %2163 = vmatmul.mubr.f32.gmra.mrb[0].mxu0 %v2007
        %v2164 = vpop.f32.mrb[0].mxu0
        %v2165 = vadd.f32 0.0, %v2164
        %v2166 = vpop.f32.mrb[0].mxu0
        %2167 = vdwg.mxu0
        %v2168 = vmul.f32 %v2165, 0.35355338
        %v2169 = vmul.f32 %v2168, %v781
        %v2170 = vsel %vm791, %v2169, -inf
        %2171 = vmax.xlane.f32.xlu0 %v2170
        %v2172 = vpop.xlane.xlu0 %2171
        %v2173 = vsub.f32 %v2169, %v2172
        %v2174 = vmul.f32 %v2173, 1.442695
        %v2175 = vpow.pop %v2174
        %v2176 = vsel %vm791, %v2175, 0.0
        %2177 = vadd.xlane.f32.xlu0 %v2176
        %v2178 = vpop.xlane.xlu0 %2177
        %v2179 = vrcp.pop %v2178
        %v2180 = vmul.f32 %v2175, %v2179
        %2181 = vrot.lane.b32.xlu0 %v786, 104
        %v2182 = vpop.permute.xlu0 %2181
        %v2185 = vsel %vm791, %v2180, 0
        %2187 = vmatprep.subr.mxu0 0.0
        %2188 = vmatpush1.msra.mxu0 %v2182
        %2189 = vmatprep.subr.mxu0 0.0
        %2190 = vmatpush1.msra.mxu0 0.0
        %2191 = vmatprep.subr.mxu0 0.0
        %2192 = vmatpush1.msra.mxu0 0.0
        %2193 = vmatprep.subr.mxu0 0.0
        %2194 = vmatpush1.msra.mxu0 0.0
        %2195 = vmatprep.subr.mxu0 0.0
        %2196 = vmatpush1.msra.mxu0 0.0
        %2197 = vmatprep.subr.mxu0 0.0
        %2198 = vmatpush1.msra.mxu0 0.0
        %2199 = vmatprep.subr.mxu0 0.0
        %2200 = vmatpush1.msra.mxu0 0.0
        %2201 = vmatprep.subr.mxu0 0.0
        %2202 = vmatpush1.msra.mxu0 0.0
        %2203 = vmatprep.subr.mxu0 0.0
        %2204 = vmatpush1.msra.mxu0 0.0
        %2205 = vmatprep.subr.mxu0 0.0
        %2206 = vmatpush1.msra.mxu0 0.0
        %2207 = vmatprep.subr.mxu0 0.0
        %2208 = vmatpush1.msra.mxu0 0.0
        %2209 = vmatprep.subr.mxu0 0.0
        %2210 = vmatpush1.msra.mxu0 0.0
        %2211 = vmatprep.subr.mxu0 0.0
        %2212 = vmatpush1.msra.mxu0 0.0
        %2213 = vmatprep.subr.mxu0 0.0
        %2214 = vmatpush1.msra.mxu0 0.0
        %2215 = vmatprep.subr.mxu0 0.0
        %2216 = vmatpush1.msra.mxu0 0.0
        %2217 = vmatprep.subr.mxu0 0.0
        %2218 = vmatpush1.msra.mxu0 0.0
        %2219 = vmatprep.subr.mxu0 0.0
        %2220 = vmatpush1.msra.mxu0 0.0
        %2221 = vmatprep.subr.mxu0 0.0
        %2222 = vmatpush1.msra.mxu0 0.0
        %2223 = vmatprep.subr.mxu0 0.0
        %2224 = vmatpush1.msra.mxu0 0.0
        %2225 = vmatprep.subr.mxu0 0.0
        %2226 = vmatpush1.msra.mxu0 0.0
        %2227 = vmatprep.subr.mxu0 0.0
        %2228 = vmatpush1.msra.mxu0 0.0
        %2229 = vmatprep.subr.mxu0 0.0
        %2230 = vmatpush1.msra.mxu0 0.0
        %2231 = vmatprep.subr.mxu0 0.0
        %2232 = vmatpush1.msra.mxu0 0.0
        %2233 = vmatprep.subr.mxu0 0.0
        %2234 = vmatpush1.msra.mxu0 0.0
        %2235 = vmatprep.subr.mxu0 0.0
        %2236 = vmatpush1.msra.mxu0 0.0
        %2237 = vmatprep.subr.mxu0 0.0
        %2238 = vmatpush1.msra.mxu0 0.0
        %2239 = vmatprep.subr.mxu0 0.0
        %2240 = vmatpush1.msra.mxu0 0.0
        %2241 = vmatprep.subr.mxu0 0.0
        %2242 = vmatpush1.msra.mxu0 0.0
        %2243 = vmatprep.subr.mxu0 0.0
        %2244 = vmatpush1.msra.mxu0 0.0
        %2245 = vmatprep.subr.mxu0 0.0
        %2246 = vmatpush1.msra.mxu0 0.0
        %2247 = vmatprep.subr.mxu0 0.0
        %2248 = vmatpush1.msra.mxu0 0.0
        %2249 = vmatprep.subr.mxu0 0.0
        %2250 = vmatpush1.msra.mxu0 0.0
        %2251 = vmatprep.mubr.f32.mxu0 0.0
        %2252 = vmatmul.mubr.f32.gmra.mrb[0].mxu0 %v2185
        %v2253 = vpop.f32.mrb[0].mxu0
        %v2254 = vadd.f32 0.0, %v2253
        %v2255 = vpop.f32.mrb[0].mxu0
        %2256 = vdwg.mxu0
        %s2257 = scalar_lea.vmem %s733, 24
        %2258 = vst.msk [vmem:[%s2257] sm:$0xff] %vm791, %v2180
        %2259 = vrot.lane.b32.xlu0 %v785, 104
        %v2260 = vpop.permute.xlu0 %2259
        %v2263 = vsel %vm791, %v2093, 0
        %2265 = vmatprep.subr.mxu0 0.0
        %2266 = vmatpush1.msra.mxu0 %v2260
        %2267 = vmatprep.subr.mxu0 0.0
        %2268 = vmatpush1.msra.mxu0 0.0
        %2269 = vmatprep.subr.mxu0 0.0
        %2270 = vmatpush1.msra.mxu0 0.0
        %2271 = vmatprep.subr.mxu0 0.0
        %2272 = vmatpush1.msra.mxu0 0.0
        %2273 = vmatprep.subr.mxu0 0.0
        %2274 = vmatpush1.msra.mxu0 0.0
        %2275 = vmatprep.subr.mxu0 0.0
        %2276 = vmatpush1.msra.mxu0 0.0
        %2277 = vmatprep.subr.mxu0 0.0
        %2278 = vmatpush1.msra.mxu0 0.0
        %2279 = vmatprep.subr.mxu0 0.0
        %2280 = vmatpush1.msra.mxu0 0.0
        %2281 = vmatprep.subr.mxu0 0.0
        %2282 = vmatpush1.msra.mxu0 0.0
        %2283 = vmatprep.subr.mxu0 0.0
        %2284 = vmatpush1.msra.mxu0 0.0
        %2285 = vmatprep.subr.mxu0 0.0
        %2286 = vmatpush1.msra.mxu0 0.0
        %2287 = vmatprep.subr.mxu0 0.0
        %2288 = vmatpush1.msra.mxu0 0.0
        %2289 = vmatprep.subr.mxu0 0.0
        %2290 = vmatpush1.msra.mxu0 0.0
        %2291 = vmatprep.subr.mxu0 0.0
        %2292 = vmatpush1.msra.mxu0 0.0
        %2293 = vmatprep.subr.mxu0 0.0
        %2294 = vmatpush1.msra.mxu0 0.0
        %2295 = vmatprep.subr.mxu0 0.0
        %2296 = vmatpush1.msra.mxu0 0.0
        %2297 = vmatprep.subr.mxu0 0.0
        %2298 = vmatpush1.msra.mxu0 0.0
        %2299 = vmatprep.subr.mxu0 0.0
        %2300 = vmatpush1.msra.mxu0 0.0
        %2301 = vmatprep.subr.mxu0 0.0
        %2302 = vmatpush1.msra.mxu0 0.0
        %2303 = vmatprep.subr.mxu0 0.0
        %2304 = vmatpush1.msra.mxu0 0.0
        %2305 = vmatprep.subr.mxu0 0.0
        %2306 = vmatpush1.msra.mxu0 0.0
        %2307 = vmatprep.subr.mxu0 0.0
        %2308 = vmatpush1.msra.mxu0 0.0
        %2309 = vmatprep.subr.mxu0 0.0
        %2310 = vmatpush1.msra.mxu0 0.0
        %2311 = vmatprep.subr.mxu0 0.0
        %2312 = vmatpush1.msra.mxu0 0.0
        %2313 = vmatprep.subr.mxu0 0.0
        %2314 = vmatpush1.msra.mxu0 0.0
        %2315 = vmatprep.subr.mxu0 0.0
        %2316 = vmatpush1.msra.mxu0 0.0
        %2317 = vmatprep.subr.mxu0 0.0
        %2318 = vmatpush1.msra.mxu0 0.0
        %2319 = vmatprep.subr.mxu0 0.0
        %2320 = vmatpush1.msra.mxu0 0.0
        %2321 = vmatprep.subr.mxu0 0.0
        %2322 = vmatpush1.msra.mxu0 0.0
        %2323 = vmatprep.subr.mxu0 0.0
        %2324 = vmatpush1.msra.mxu0 0.0
        %2325 = vmatprep.subr.mxu0 0.0
        %2326 = vmatpush1.msra.mxu0 0.0
        %2327 = vmatprep.subr.mxu0 0.0
        %2328 = vmatpush1.msra.mxu0 0.0
        %2329 = vmatprep.mubr.f32.mxu0 0.0
        %2330 = vmatmul.mubr.f32.gmra.mrb[0].mxu0 %v2263
        %v2331 = vpop.f32.mrb[0].mxu0
        %v2332 = vadd.f32 %v2254, %v2331
        %v2333 = vpop.f32.mrb[0].mxu0
        %2334 = vdwg.mxu0
        %v2335 = vmul.f32 %v2332, 0.5
        %v2337 = vsel %vm791, %v2335, 0
        %2339 = vmatprep.subr.mxu0 0.0
        %2340 = vmatpush1.msra.mxu0 %v790
        %2341 = vmatprep.subr.mxu0 0.0
        %2342 = vmatpush1.msra.mxu0 0.0
        %2343 = vmatprep.subr.mxu0 0.0
        %2344 = vmatpush1.msra.mxu0 0.0
        %2345 = vmatprep.subr.mxu0 0.0
        %2346 = vmatpush1.msra.mxu0 0.0
        %2347 = vmatprep.subr.mxu0 0.0
        %2348 = vmatpush1.msra.mxu0 0.0
        %2349 = vmatprep.subr.mxu0 0.0
        %2350 = vmatpush1.msra.mxu0 0.0
        %2351 = vmatprep.subr.mxu0 0.0
        %2352 = vmatpush1.msra.mxu0 0.0
        %2353 = vmatprep.subr.mxu0 0.0
        %2354 = vmatpush1.msra.mxu0 0.0
        %2355 = vmatprep.subr.mxu0 0.0
        %2356 = vmatpush1.msra.mxu0 0.0
        %2357 = vmatprep.subr.mxu0 0.0
        %2358 = vmatpush1.msra.mxu0 0.0
        %2359 = vmatprep.subr.mxu0 0.0
        %2360 = vmatpush1.msra.mxu0 0.0
        %2361 = vmatprep.subr.mxu0 0.0
        %2362 = vmatpush1.msra.mxu0 0.0
        %2363 = vmatprep.subr.mxu0 0.0
        %2364 = vmatpush1.msra.mxu0 0.0
        %2365 = vmatprep.subr.mxu0 0.0
        %2366 = vmatpush1.msra.mxu0 0.0
        %2367 = vmatprep.subr.mxu0 0.0
        %2368 = vmatpush1.msra.mxu0 0.0
        %2369 = vmatprep.subr.mxu0 0.0
        %2370 = vmatpush1.msra.mxu0 0.0
        %2371 = vmatprep.subr.mxu0 0.0
        %2372 = vmatpush1.msra.mxu0 0.0
        %2373 = vmatprep.subr.mxu0 0.0
        %2374 = vmatpush1.msra.mxu0 0.0
        %2375 = vmatprep.subr.mxu0 0.0
        %2376 = vmatpush1.msra.mxu0 0.0
        %2377 = vmatprep.subr.mxu0 0.0
        %2378 = vmatpush1.msra.mxu0 0.0
        %2379 = vmatprep.subr.mxu0 0.0
        %2380 = vmatpush1.msra.mxu0 0.0
        %2381 = vmatprep.subr.mxu0 0.0
        %2382 = vmatpush1.msra.mxu0 0.0
        %2383 = vmatprep.subr.mxu0 0.0
        %2384 = vmatpush1.msra.mxu0 0.0
        %2385 = vmatprep.subr.mxu0 0.0
        %2386 = vmatpush1.msra.mxu0 0.0
        %2387 = vmatprep.subr.mxu0 0.0
        %2388 = vmatpush1.msra.mxu0 0.0
        %2389 = vmatprep.subr.mxu0 0.0
        %2390 = vmatpush1.msra.mxu0 0.0
        %2391 = vmatprep.subr.mxu0 0.0
        %2392 = vmatpush1.msra.mxu0 0.0
        %2393 = vmatprep.subr.mxu0 0.0
        %2394 = vmatpush1.msra.mxu0 0.0
        %2395 = vmatprep.subr.mxu0 0.0
        %2396 = vmatpush1.msra.mxu0 0.0
        %2397 = vmatprep.subr.mxu0 0.0
        %2398 = vmatpush1.msra.mxu0 0.0
        %2399 = vmatprep.subr.mxu0 0.0
        %2400 = vmatpush1.msra.mxu0 0.0
        %2401 = vmatprep.subr.mxu0 0.0
        %2402 = vmatpush1.msra.mxu0 0.0
        %2403 = vmatprep.mubr.f32.mxu0 0.0
        %2404 = vmatmul.mubr.f32.gmra.mrb[0].mxu0 %v2337
        %v2405 = vpop.f32.mrb[0].mxu0
        %v2406 = vadd.f32 0.0, %v2405
        %v2407 = vpop.f32.mrb[0].mxu0
        %2408 = vdwg.mxu0
        %v2409 = vadd.f32 %v2002, %v2406
        %v2410 = vld [vmem:[%s9] sm:$0x1]
        %v2412 = vlaneseq
        %v2413 = vshrl.u32 %v2412, 7
        %v2414 = vsub.s32 0, %v2413
        %v2415 = vrot.slane %v2410, %v2414
        %v2417 = vadd.f32 %v2409, %v2415
        %vm2418 = vcmask 261120
        %2419 = vst.msk [vmem:[%s625] sm:$0xff] %vm2418, %v2417
        %s2420 = sand.u32 %s338, 1
        %s2421 = scalar_lea.sflag [#allocation3], %s2420
        %s2422 = sand.u32 %s338, 1
        %s2423 = smul.addr %s2422, 8
        %s2424 = scalar_lea.vmem [#allocation2], %s2423
        %p2425 = scmp.lt.s32.totalorder %s30, 1
        %s2426 = scalar_select %p2425, %s30, 1
        %p2427 = scmp.lt.s32.totalorder %s31, 3
        %s2428 = scalar_select %p2427, %s31, 3
        %s2429 = smul.addr %s2428, 4
        %s2430 = smul.addr %s2426, 16
        %s2431 = sadd.s32 %s2429, %s2430
        %s2432 = smul.addr %s2431, 8
        %s2433 = scalar_lea.vmem %s11, %s2432
        // Predicated region
        $region61: #{time_mha_forward.3} parent=59 // pred_check
          %p2434 = pneg %p348
        $region62: #{time_mha_forward.3} parent=59 // pred_check_branch
          %2436 = sbr.rel (%p2434) target = $region64
        $region63: #{time_mha_forward.3} parent=59 // pred_region
          %s2438 = ssub.s32 128, 128
          %2439 = vsyncadd %s2421, %s2438
          %s2440 = smul.addr %s30, 4
          %s2441 = sadd.s32 %s31, %s2440
          %s2442 = smul.addr %s2441, 128
          %s2443 = scalar_lea.hbm %s10, %s2442
          %s2445 = sshll.u32 %s2424, 4
          %s2446 = int_to_ptr.vmem [resolvable:$true] %s2445
          %2448 = dma.vmem_to_hbm [thread:$0]  %s2446, 128, %s2443, %s2421
        $region64: #{time_mha_forward.3} parent=59 // pred_fallthru
          _
        // Predicated region
        $region65: #{time_mha_forward.3} parent=59 // pred_check
          %p2449 = pneg %p376
        $region66: #{time_mha_forward.3} parent=59 // pred_check_branch
          %2451 = sbr.rel (%p2449) target = $region68
        $region67: #{time_mha_forward.3} parent=59 // pred_region
          _
        $region68: #{time_mha_forward.3} parent=59 // pred_fallthru
          _
      $region60: #{time_mha_forward.3} parent=5 // pred_fallthru
        _
      %p2452 = scmp.le.s32.totalorder 2, %s21
      // Predicated region
      $region69: #{time_mha_forward.3} parent=5 // pred_check
        %p2453 = pneg %p2452
      $region70: #{time_mha_forward.3} parent=5 // pred_check_branch
        %2455 = sbr.rel (%p2453) target = $region72
      $region71: #{time_mha_forward.3} parent=5 // pred_region
        %s2456 = ssub.s32 %s21, 2
        // Predicated region
        $region73: #{time_mha_forward.3} parent=71 // pred_check
          %p2457 = pneg %p354
        $region74: #{time_mha_forward.3} parent=71 // pred_check_branch
          %2459 = sbr.rel (%p2457) target = $region76
        $region75: #{time_mha_forward.3} parent=71 // pred_region
          %s2460 = sand.u32 %s339, 1
          %s2461 = scalar_lea.sflag [#allocation3], %s2460
          %s2462 = sand.u32 %s339, 1
          %s2463 = smul.addr %s2462, 8
          %s2464 = scalar_lea.vmem [#allocation2], %s2463
          %2465 = dma.done %s2461, 128
        $region76: #{time_mha_forward.3} parent=71 // pred_fallthru
          _
        // Predicated region
        $region77: #{time_mha_forward.3} parent=71 // pred_check
          %p2466 = pneg %p382
        $region78: #{time_mha_forward.3} parent=71 // pred_check_branch
          %2468 = sbr.rel (%p2466) target = $region80
        $region79: #{time_mha_forward.3} parent=71 // pred_region
          %p2469 = scmp.lt.s32.totalorder %s32, 1
          %s2470 = scalar_select %p2469, %s32, 1
          %p2471 = scmp.lt.s32.totalorder %s33, 3
          %s2472 = scalar_select %p2471, %s33, 3
          %s2473 = smul.addr %s2472, 4
          %s2474 = smul.addr %s2470, 16
          %s2475 = sadd.s32 %s2473, %s2474
          %s2476 = smul.addr %s2475, 8
          %s2477 = scalar_lea.vmem %s11, %s2476
        $region80: #{time_mha_forward.3} parent=71 // pred_fallthru
          _
      $region72: #{time_mha_forward.3} parent=5 // pred_fallthru
        _
    $region6: #{time_mha_forward.3} parent=1 // loop_footer
      %s25 = sadd.s32 1, %s21
    $region7: #{time_mha_forward.3} parent=1 // loop_footer_branch
      %20 = sbr.rel target = $region3
    $region8: #{time_mha_forward.3} parent=1 // loop_exit
      _
    %2478 = vsyncpa [#allocation3], 1
    %s2479 = scalar_lea.sflag [#allocation3], 1
    %2480 = vsyncpa %s2479, 1

</llo_original>
